<compile_context>
chip_gen: v6e
topology: v6e:2x2x1
jax: 0.10.0
libtpu: 0.0.40
codegen_flags: <defaults>
</compile_context>

<pallas_src>
import jax
import jax.numpy as jnp
from jax.experimental import pallas as pl
from jax.experimental.pallas import tpu as pltpu


_VMEM = pl.BlockSpec(memory_space=pltpu.MemorySpace.VMEM)


def _align8(n):
    return ((n + 7) // 8) * 8


# ----------------------------------------------------------------------------
# Fused kernel: feature prep + encoder GRU stack + 1-step decoder + out proj
# ----------------------------------------------------------------------------
def _build_fused_kernel(T, BP, H, L, ih_offs, ih_dins, hh_offs):
    N = T * BP
    H2, H3 = 2 * H, 3 * H

    def kernel(flow_ref, loc_ref, hour_ref, wf_ref, bf_ref, we_ref, be_ref,
               wih_ref, whh_ref, bias_ref, wo_ref, bo_ref,
               out_ref, gi_ref, y_ref):
        f32 = jnp.float32

        def mm(a, b):
            return jnp.dot(a, b, preferred_element_type=f32)

        # ---- feature prep: tanh(cat([flow_lin, embed_lin, hour_embed])) ----
        # tanh distributes over the concat; nn.Dropout(0.1) is identity (eval).
        # Loc embeddings arrive as (BP, E): embed_linear runs once on BP rows
        # and the result is replicated across the T time blocks in-register
        # (no T-fold HBM tiling, no cat scratch / partial lane stores).
        flow_h = jnp.tanh(flow_ref[...] * wf_ref[...] + bf_ref[...])    # (N, FC)
        loc_h = jnp.tanh(mm(loc_ref[...], we_ref[...]) + be_ref[...])   # (BP, FC)
        loc_rep = jnp.concatenate([loc_h] * T, axis=0)                  # (N, FC)
        hour_h = jnp.tanh(hour_ref[...])                                # (N, 16)
        cat = jnp.concatenate([flow_h, loc_rep, hour_h], axis=1)        # (N, D)

        def layer_params(idx):
            # Static slices out of the packed weight/bias slabs.
            din = ih_dins[idx]
            wih = wih_ref[ih_offs[idx]:ih_offs[idx] + din, :]    # (Din, 3H)
            whh = whh_ref[hh_offs[idx]:hh_offs[idx] + H, :]      # (H, 3H)
            b = bias_ref[idx:idx + 1, :]                         # (1, 4H)
            return wih, whh, b[:, 0:H3], b[:, H3:]               # b_gi, b_hn

        def gru_step(gi, h, whh, b_hn):
            # PyTorch cell, gate order [r, z, n]; b_ir+b_hr / b_iz+b_hz / b_in
            # are pre-folded into gi, only b_hn stays inside the r-gated term.
            # Single stacked h @ W_hh push per step; gates split by lane slice.
            gh = mm(h, whh)                                      # (BP, 3H)
            rz = jax.nn.sigmoid(gi[:, 0:H2] + gh[:, 0:H2])
            r, z = rz[:, 0:H], rz[:, H:H2]
            n = jnp.tanh(gi[:, H2:] + r * (gh[:, H2:] + b_hn))
            return (1.0 - z) * n + z * h

        # ---- decoder layer-0 input projection, hoisted before the encoder --
        # (depends only on cat; issuing it early lets the scheduler fill MXU
        # bubbles during the latency-bound recurrence).
        wih_d0, _, bgi_d0, _ = layer_params(L)
        g_dec0 = mm(cat[(T - 1) * BP:, :], wih_d0) + bgi_d0             # (BP, 3H)

        # ---- encoder: L stacked GRU layers over T steps ---------------------
        x = cat
        enc_hT = []
        for li in range(L):
            wih, whh, bgi, bhn = layer_params(li)
            # hoisted input projection: ONE (N, 3H) matmul per layer
            gi_ref[...] = mm(x, wih) + bgi
            h = jnp.zeros((BP, H), f32)
            for t in range(T):           # fully unrolled (T static, small)
                row = t * BP             # tile-aligned window
                h = gru_step(gi_ref[row:row + BP, :], h, whh, bhn)
                if li + 1 < L:           # top-layer outputs are never re-read
                    y_ref[row:row + BP, :] = h
            enc_hT.append(h)
            if li + 1 < L:
                x = y_ref[...]
        # TODO(synk): switch the t-loop to lax.fori_loop(..., unroll=4) if T
        # grows large (long histories) to bound code size / live ranges.

        # ---- decoder: one step per layer, hidden seeded from encoder hT -----
        xd = None
        for li in range(L):
            wih, whh, bgi, bhn = layer_params(L + li)
            gi = g_dec0 if li == 0 else mm(xd, wih) + bgi
            xd = gru_step(gi, enc_hT[li], whh, bhn)

        # ---- output projection (H -> 1) as a lane reduction -----------------
        # (a 1-lane MXU matmul would be fully masked; keep it on VPU/XLU).
        out_ref[...] = (jnp.sum(xd * wo_ref[...], axis=1, keepdims=True)
                        + bo_ref[...])

    return kernel


# ----------------------------------------------------------------------------
# Full forward pass (single pallas_call; gathers/padding are JAX glue)
# ----------------------------------------------------------------------------
@jax.jit
def seq2seq_flow_predictor(params, recent_history, loc_index, recent_hour):
    """recent_history: (B, T) f32, loc_index: (B,) i32, recent_hour: (B, T) i32.
    Returns prediction of shape (B, 1) (single-step decoder, pre_len == 1)."""
    B, T = recent_history.shape
    H = params["enc"][0]["whh"].shape[0]
    L = len(params["enc"])
    BP = _align8(B)                    # pad batch to a full f32 sublane tile
    N = T * BP

    # JAX glue: embedding gathers, batch padding, time-major flattening.
    # Kernel row index = t*BP + b; padded rows compute garbage and are sliced
    # off (no in-kernel batch reductions, so no masking needed).
    loc_embed = params["loc_embed_layer"][loc_index]                    # (B, E)
    hour_embed = params["time_embed"][recent_hour]                      # (B, T, 16)

    flow_tb = jnp.pad(recent_history.T.astype(jnp.float32),
                      ((0, 0), (0, BP - B)))                            # (T, BP)
    flow_n = flow_tb.reshape(N, 1)
    hour_tb = jnp.pad(jnp.transpose(hour_embed, (1, 0, 2)),
                      ((0, 0), (0, BP - B), (0, 0)))                    # (T, BP, 16)
    hour_n = hour_tb.reshape(N, 16)
    loc_p = jnp.pad(loc_embed, ((0, BP - B), (0, 0)))                   # (BP, E)

    # Pack per-layer GRU weights into three slabs (enc layers, then dec):
    #   wih_slab : stacked (Din, 3H) blocks, each starting at an 8-aligned row
    #   whh_slab : stacked (H, 3H) blocks at 8-aligned rows
    #   bias_slab: (2L, 4H) rows of [b_ir+b_hr, b_iz+b_hz, b_in, b_hn]
    # -> 3 input refs instead of ~10 per layer (fewer DMAs, smaller prologue).
    all_layers = params["enc"] + params["dec"]
    ih_blocks, ih_offs, ih_dins, row = [], [], [], 0
    for layer in all_layers:
        w = layer["wih"]
        din = w.shape[0]
        dpad = _align8(din)
        ih_blocks.append(jnp.pad(w, ((0, dpad - din), (0, 0))))
        ih_offs.append(row)
        ih_dins.append(din)
        row += dpad
    wih_slab = jnp.concatenate(ih_blocks, axis=0)

    Hp = _align8(H)
    whh_slab = jnp.concatenate(
        [jnp.pad(l["whh"], ((0, Hp - H), (0, 0))) for l in all_layers], axis=0)
    hh_offs = [i * Hp for i in range(2 * L)]

    bias_slab = jnp.concatenate(
        [jnp.concatenate([l["bih"][:, :2 * H] + l["bhh"][:, :2 * H],
                          l["bih"][:, 2 * H:], l["bhh"][:, 2 * H:]], axis=1)
         for l in all_layers], axis=0)                                  # (2L, 4H)

    # TODO(synk): cast wih_slab/whh_slab (and the hoisted-projection LHS) to
    # bf16 with f32 accumulation to halve weight traffic at production H.
    args = [flow_n, loc_p, hour_n,
            params["flow_linear_w"], params["flow_linear_b"],
            params["embed_linear_w"], params["embed_linear_b"],
            wih_slab, whh_slab, bias_slab,
            params["out_linear_w"].T,           # (1, H)
            params["out_linear_b"]]             # (1, 1)

    kernel = _build_fused_kernel(T, BP, H, L,
                                 tuple(ih_offs), tuple(ih_dins), tuple(hh_offs))
    # TODO(synk): for large serving batches add a leading batch grid axis
    # (blocks of BP rows) with dimension_semantics=("parallel",) so both v7x
    # TensorCores are used and resident VMEM stays bounded on v5e/v7x.
    out_p = pl.pallas_call(
        kernel,
        out_shape=jax.ShapeDtypeStruct((BP, 1), jnp.float32),
        in_specs=[_VMEM] * len(args),
        out_specs=_VMEM,
        scratch_shapes=[
            pltpu.VMEM((N, 3 * H), jnp.float32),   # hoisted input projections
            pltpu.VMEM((N, H), jnp.float32),       # inter-layer activations
        ],
    )(*args)
    return out_p[:B]


# ----------------------------------------------------------------------------
# Parameter initialization (deterministic, synthetic, PyTorch-style layout)
# ----------------------------------------------------------------------------
def init_params(key, num_locs, loc_embed_size, fc_size, hidden_size, num_layers):
    keys = iter(jax.random.split(key, 64))

    def nrm(shape, scale=0.1):
        return scale * jax.random.normal(next(keys), shape, jnp.float32)

    D = fc_size * 2 + 16
    params = {
        "loc_embed_layer": nrm((num_locs, loc_embed_size), 1.0),
        "time_embed": nrm((24, 16), 1.0),
        "embed_linear_w": nrm((loc_embed_size, fc_size)),
        "embed_linear_b": nrm((1, fc_size)),
        "flow_linear_w": nrm((1, fc_size)),
        "flow_linear_b": nrm((1, fc_size)),
        "out_linear_w": nrm((hidden_size, 1)),
        "out_linear_b": nrm((1, 1)),
    }
    for name in ("enc", "dec"):
        layers = []
        din = D
        for _ in range(num_layers):
            layers.append(dict(
                wih=nrm((din, 3 * hidden_size)),
                whh=nrm((hidden_size, 3 * hidden_size)),
                bih=nrm((1, 3 * hidden_size)),
                bhh=nrm((1, 3 * hidden_size)),
            ))
            din = hidden_size
        params[name] = layers
    return params


# ----------------------------------------------------------------------------
# Pure-JAX reference for a correctness sanity check
# ----------------------------------------------------------------------------
def reference_forward(params, recent_history, loc_index, recent_hour):
    B, T = recent_history.shape
    H = params["enc"][0]["whh"].shape[0]
    loc_embed = params["loc_embed_layer"][loc_index]
    loc_h = loc_embed @ params["embed_linear_w"] + params["embed_linear_b"]
    flow_h = (recent_history[:, :, None] * params["flow_linear_w"][0]
              + params["flow_linear_b"][0])
    hour_embed = params["time_embed"][recent_hour]
    cat_h = jnp.concatenate(
        [flow_h,
         jnp.broadcast_to(loc_h[:, None, :], (B, T, loc_h.shape[-1])),
         hour_embed], -1)
    cat_h = jnp.tanh(cat_h)

    def gru_layer(x_btf, h0, layer):
        def cell(h, x_t):
            gi = x_t @ layer["wih"] + layer["bih"]
            gh = h @ layer["whh"] + layer["bhh"]
            r = jax.nn.sigmoid(gi[:, :H] + gh[:, :H])
            z = jax.nn.sigmoid(gi[:, H:2 * H] + gh[:, H:2 * H])
            n = jnp.tanh(gi[:, 2 * H:] + r * gh[:, 2 * H:])
            h_new = (1.0 - z) * n + z * h
            return h_new, h_new
        hT, ys = jax.lax.scan(cell, h0, jnp.transpose(x_btf, (1, 0, 2)))
        return jnp.transpose(ys, (1, 0, 2)), hT

    x = cat_h
    hs = []
    for layer in params["enc"]:
        x, hT = gru_layer(x, jnp.zeros((B, H), jnp.float32), layer)
        hs.append(hT)
    x = cat_h[:, -1:, :]
    for layer, h0 in zip(params["dec"], hs):
        x, _ = gru_layer(x, h0, layer)
    return x[:, 0, :] @ params["out_linear_w"] + params["out_linear_b"]


if __name__ == "__main__":
    # Small shapes consistent with the module's forward
    B, T = 2, 8                     # batch, his_len
    num_locs = 10
    loc_embed_size = 32
    fc_size = 16
    hidden_size = 32
    num_layers = 2

    key = jax.random.PRNGKey(0)
    kp, kf, kl, kh = jax.random.split(key, 4)

    params = init_params(kp, num_locs, loc_embed_size, fc_size,
                         hidden_size, num_layers)

    recent_history = jax.random.normal(kf, (B, T), jnp.float32)
    loc_index = jax.random.randint(kl, (B,), 0, num_locs, jnp.int32)
    recent_hour = jax.random.randint(kh, (B, T), 0, 24, jnp.int32)

    out = seq2seq_flow_predictor(params, recent_history, loc_index, recent_hour)
    out = jax.block_until_ready(out)

    ref = reference_forward(params, recent_history, loc_index, recent_hour)
    assert out.shape == (B, 1), out.shape
    assert jnp.allclose(out, ref, atol=1e-2, rtol=1e-2), (out, ref)

    print("KERNEL_OK")
</pallas_src>

<mosaic_0001>
module attributes {stable_mosaic.version = 11 : i64} {
  func.func @kernel(%arg0: memref<64x1xf32, #tpu.memory_space<vmem>>, %arg1: memref<8x32xf32, #tpu.memory_space<vmem>>, %arg2: memref<64x16xf32, #tpu.memory_space<vmem>>, %arg3: memref<1x16xf32, #tpu.memory_space<vmem>>, %arg4: memref<1x16xf32, #tpu.memory_space<vmem>>, %arg5: memref<32x16xf32, #tpu.memory_space<vmem>>, %arg6: memref<1x16xf32, #tpu.memory_space<vmem>>, %arg7: memref<160x96xf32, #tpu.memory_space<vmem>>, %arg8: memref<128x96xf32, #tpu.memory_space<vmem>>, %arg9: memref<4x128xf32, #tpu.memory_space<vmem>>, %arg10: memref<1x32xf32, #tpu.memory_space<vmem>>, %arg11: memref<1x1xf32, #tpu.memory_space<vmem>>, %arg12: memref<8x1xf32, #tpu.memory_space<vmem>>, %arg13: memref<64x96xf32, #tpu.memory_space<vmem>>, %arg14: memref<64x32xf32, #tpu.memory_space<vmem>>) attributes {dimension_semantics = [], scalar_prefetch = 0 : i64, scratch_operands = 2 : i64, tpu.core_type = #tpu.core_type<tc>} {
    %c0 = arith.constant 0 : index
    %c0_0 = arith.constant 0 : index
    %0 = vector.load %arg0[%c0, %c0_0] : memref<64x1xf32, #tpu.memory_space<vmem>>, vector<64x1xf32>
    %c0_1 = arith.constant 0 : index
    %c0_2 = arith.constant 0 : index
    %1 = vector.load %arg3[%c0_1, %c0_2] : memref<1x16xf32, #tpu.memory_space<vmem>>, vector<1x16xf32>
    %2 = vector.broadcast %0 : vector<64x1xf32> to vector<64x16xf32>
    %3 = vector.broadcast %1 : vector<1x16xf32> to vector<64x16xf32>
    %4 = arith.mulf %2, %3 : vector<64x16xf32>
    %c0_3 = arith.constant 0 : index
    %c0_4 = arith.constant 0 : index
    %5 = vector.load %arg4[%c0_3, %c0_4] : memref<1x16xf32, #tpu.memory_space<vmem>>, vector<1x16xf32>
    %6 = vector.broadcast %5 : vector<1x16xf32> to vector<64x16xf32>
    %7 = arith.addf %4, %6 : vector<64x16xf32>
    %8 = math.tanh %7 : vector<64x16xf32>
    %c0_5 = arith.constant 0 : index
    %c0_6 = arith.constant 0 : index
    %9 = vector.load %arg1[%c0_5, %c0_6] : memref<8x32xf32, #tpu.memory_space<vmem>>, vector<8x32xf32>
    %c0_7 = arith.constant 0 : index
    %c0_8 = arith.constant 0 : index
    %10 = vector.load %arg5[%c0_7, %c0_8] : memref<32x16xf32, #tpu.memory_space<vmem>>, vector<32x16xf32>
    %cst = arith.constant dense<0.000000e+00> : vector<8x16xf32>
    %11 = tpu.matmul %9, %10, %cst {dimension_numbers = #tpu.dot_dimension_numbers<[1], [0], [0], [1], [0, 0, 1, 1], [], []>} : vector<8x32xf32>, vector<32x16xf32>, vector<8x16xf32> -> vector<8x16xf32>
    %c0_9 = arith.constant 0 : index
    %c0_10 = arith.constant 0 : index
    %12 = vector.load %arg6[%c0_9, %c0_10] : memref<1x16xf32, #tpu.memory_space<vmem>>, vector<1x16xf32>
    %13 = vector.broadcast %12 : vector<1x16xf32> to vector<8x16xf32>
    %14 = arith.addf %11, %13 : vector<8x16xf32>
    %15 = math.tanh %14 : vector<8x16xf32>
    %16 = tpu.concatenate %15, %15, %15, %15, %15, %15, %15, %15 in 0 : vector<8x16xf32>, vector<8x16xf32>, vector<8x16xf32>, vector<8x16xf32>, vector<8x16xf32>, vector<8x16xf32>, vector<8x16xf32>, vector<8x16xf32> -> vector<64x16xf32>
    %c0_11 = arith.constant 0 : index
    %c0_12 = arith.constant 0 : index
    %17 = vector.load %arg2[%c0_11, %c0_12] : memref<64x16xf32, #tpu.memory_space<vmem>>, vector<64x16xf32>
    %18 = math.tanh %17 : vector<64x16xf32>
    %19 = tpu.concatenate %8, %16, %18 in 1 : vector<64x16xf32>, vector<64x16xf32>, vector<64x16xf32> -> vector<64x48xf32>
    %c80 = arith.constant 80 : index
    %c0_13 = arith.constant 0 : index
    %20 = vector.load %arg7[%c80, %c0_13] : memref<160x96xf32, #tpu.memory_space<vmem>>, vector<48x96xf32>
    %c2 = arith.constant 2 : index
    %c0_14 = arith.constant 0 : index
    %21 = vector.load %arg9[%c2, %c0_14] : memref<4x128xf32, #tpu.memory_space<vmem>>, vector<1x128xf32>
    %22 = vector.extract_strided_slice %21 {offsets = [0, 0], sizes = [1, 96], strides = [1, 1]} : vector<1x128xf32> to vector<1x96xf32>
    %23 = vector.extract_strided_slice %19 {offsets = [56, 0], sizes = [8, 48], strides = [1, 1]} : vector<64x48xf32> to vector<8x48xf32>
    %cst_15 = arith.constant dense<0.000000e+00> : vector<8x96xf32>
    %24 = tpu.matmul %23, %20, %cst_15 {dimension_numbers = #tpu.dot_dimension_numbers<[1], [0], [0], [1], [0, 0, 1, 1], [], []>} : vector<8x48xf32>, vector<48x96xf32>, vector<8x96xf32> -> vector<8x96xf32>
    %25 = vector.broadcast %22 : vector<1x96xf32> to vector<8x96xf32>
    %26 = arith.addf %24, %25 : vector<8x96xf32>
    %c0_16 = arith.constant 0 : index
    %c0_17 = arith.constant 0 : index
    %27 = vector.load %arg7[%c0_16, %c0_17] : memref<160x96xf32, #tpu.memory_space<vmem>>, vector<48x96xf32>
    %c0_18 = arith.constant 0 : index
    %c0_19 = arith.constant 0 : index
    %28 = vector.load %arg8[%c0_18, %c0_19] : memref<128x96xf32, #tpu.memory_space<vmem>>, vector<32x96xf32>
    %c0_20 = arith.constant 0 : index
    %c0_21 = arith.constant 0 : index
    %29 = vector.load %arg9[%c0_20, %c0_21] : memref<4x128xf32, #tpu.memory_space<vmem>>, vector<1x128xf32>
    %30 = vector.extract_strided_slice %29 {offsets = [0, 0], sizes = [1, 96], strides = [1, 1]} : vector<1x128xf32> to vector<1x96xf32>
    %31 = vector.extract_strided_slice %29 {offsets = [0, 96], sizes = [1, 32], strides = [1, 1]} : vector<1x128xf32> to vector<1x32xf32>
    %cst_22 = arith.constant dense<0.000000e+00> : vector<64x96xf32>
    %32 = tpu.matmul %19, %27, %cst_22 {dimension_numbers = #tpu.dot_dimension_numbers<[1], [0], [0], [1], [0, 0, 1, 1], [], []>} : vector<64x48xf32>, vector<48x96xf32>, vector<64x96xf32> -> vector<64x96xf32>
    %33 = vector.broadcast %30 : vector<1x96xf32> to vector<64x96xf32>
    %34 = arith.addf %32, %33 : vector<64x96xf32>
    %c0_23 = arith.constant 0 : index
    %c0_24 = arith.constant 0 : index
    %35 = vector.load %arg13[%c0_23, %c0_24] : memref<64x96xf32, #tpu.memory_space<vmem>>, vector<64x96xf32>
    tpu.vector_store %arg13[%c0_23, %c0_24], %34 {strides = array<i32>} : memref<64x96xf32, #tpu.memory_space<vmem>>, vector<64x96xf32>,
    %cst_25 = arith.constant 0.000000e+00 : f32
    %36 = vector.broadcast %cst_25 : f32 to vector<8x32xf32>
    %c0_26 = arith.constant 0 : index
    %c0_27 = arith.constant 0 : index
    %37 = vector.load %arg13[%c0_26, %c0_27] : memref<64x96xf32, #tpu.memory_space<vmem>>, vector<8x96xf32>
    %cst_28 = arith.constant dense<0.000000e+00> : vector<8x96xf32>
    %38 = tpu.matmul %36, %28, %cst_28 {dimension_numbers = #tpu.dot_dimension_numbers<[1], [0], [0], [1], [0, 0, 1, 1], [], []>} : vector<8x32xf32>, vector<32x96xf32>, vector<8x96xf32> -> vector<8x96xf32>
    %39 = vector.extract_strided_slice %37 {offsets = [0, 0], sizes = [8, 64], strides = [1, 1]} : vector<8x96xf32> to vector<8x64xf32>
    %40 = vector.extract_strided_slice %38 {offsets = [0, 0], sizes = [8, 64], strides = [1, 1]} : vector<8x96xf32> to vector<8x64xf32>
    %41 = arith.addf %39, %40 : vector<8x64xf32>
    %42 = arith.negf %41 : vector<8x64xf32>
    %43 = math.exp %42 : vector<8x64xf32>
    %cst_29 = arith.constant 1.000000e+00 : f32
    %44 = vector.broadcast %cst_29 : f32 to vector<8x64xf32>
    %45 = arith.addf %44, %43 : vector<8x64xf32>
    %46 = arith.divf %44, %45 : vector<8x64xf32>
    %47 = vector.extract_strided_slice %46 {offsets = [0, 0], sizes = [8, 32], strides = [1, 1]} : vector<8x64xf32> to vector<8x32xf32>
    %48 = vector.extract_strided_slice %46 {offsets = [0, 32], sizes = [8, 32], strides = [1, 1]} : vector<8x64xf32> to vector<8x32xf32>
    %49 = vector.extract_strided_slice %37 {offsets = [0, 64], sizes = [8, 32], strides = [1, 1]} : vector<8x96xf32> to vector<8x32xf32>
    %50 = vector.extract_strided_slice %38 {offsets = [0, 64], sizes = [8, 32], strides = [1, 1]} : vector<8x96xf32> to vector<8x32xf32>
    %51 = vector.broadcast %31 : vector<1x32xf32> to vector<8x32xf32>
    %52 = arith.addf %50, %51 : vector<8x32xf32>
    %53 = arith.mulf %47, %52 : vector<8x32xf32>
    %54 = arith.addf %49, %53 : vector<8x32xf32>
    %55 = math.tanh %54 : vector<8x32xf32>
    %cst_30 = arith.constant 1.000000e+00 : f32
    %56 = vector.broadcast %cst_30 : f32 to vector<8x32xf32>
    %57 = arith.subf %56, %48 : vector<8x32xf32>
    %58 = arith.mulf %57, %55 : vector<8x32xf32>
    %59 = arith.mulf %48, %36 : vector<8x32xf32>
    %60 = arith.addf %58, %59 : vector<8x32xf32>
    %c0_31 = arith.constant 0 : index
    %c0_32 = arith.constant 0 : index
    %61 = vector.load %arg14[%c0_31, %c0_32] : memref<64x32xf32, #tpu.memory_space<vmem>>, vector<8x32xf32>
    tpu.vector_store %arg14[%c0_31, %c0_32], %60 {strides = array<i32>} : memref<64x32xf32, #tpu.memory_space<vmem>>, vector<8x32xf32>,
    %c8 = arith.constant 8 : index
    %c0_33 = arith.constant 0 : index
    %62 = vector.load %arg13[%c8, %c0_33] : memref<64x96xf32, #tpu.memory_space<vmem>>, vector<8x96xf32>
    %cst_34 = arith.constant dense<0.000000e+00> : vector<8x96xf32>
    %63 = tpu.matmul %60, %28, %cst_34 {dimension_numbers = #tpu.dot_dimension_numbers<[1], [0], [0], [1], [0, 0, 1, 1], [], []>} : vector<8x32xf32>, vector<32x96xf32>, vector<8x96xf32> -> vector<8x96xf32>
    %64 = vector.extract_strided_slice %62 {offsets = [0, 0], sizes = [8, 64], strides = [1, 1]} : vector<8x96xf32> to vector<8x64xf32>
    %65 = vector.extract_strided_slice %63 {offsets = [0, 0], sizes = [8, 64], strides = [1, 1]} : vector<8x96xf32> to vector<8x64xf32>
    %66 = arith.addf %64, %65 : vector<8x64xf32>
    %67 = arith.negf %66 : vector<8x64xf32>
    %68 = math.exp %67 : vector<8x64xf32>
    %cst_35 = arith.constant 1.000000e+00 : f32
    %69 = vector.broadcast %cst_35 : f32 to vector<8x64xf32>
    %70 = arith.addf %69, %68 : vector<8x64xf32>
    %71 = arith.divf %69, %70 : vector<8x64xf32>
    %72 = vector.extract_strided_slice %71 {offsets = [0, 0], sizes = [8, 32], strides = [1, 1]} : vector<8x64xf32> to vector<8x32xf32>
    %73 = vector.extract_strided_slice %71 {offsets = [0, 32], sizes = [8, 32], strides = [1, 1]} : vector<8x64xf32> to vector<8x32xf32>
    %74 = vector.extract_strided_slice %62 {offsets = [0, 64], sizes = [8, 32], strides = [1, 1]} : vector<8x96xf32> to vector<8x32xf32>
    %75 = vector.extract_strided_slice %63 {offsets = [0, 64], sizes = [8, 32], strides = [1, 1]} : vector<8x96xf32> to vector<8x32xf32>
    %76 = vector.broadcast %31 : vector<1x32xf32> to vector<8x32xf32>
    %77 = arith.addf %75, %76 : vector<8x32xf32>
    %78 = arith.mulf %72, %77 : vector<8x32xf32>
    %79 = arith.addf %74, %78 : vector<8x32xf32>
    %80 = math.tanh %79 : vector<8x32xf32>
    %cst_36 = arith.constant 1.000000e+00 : f32
    %81 = vector.broadcast %cst_36 : f32 to vector<8x32xf32>
    %82 = arith.subf %81, %73 : vector<8x32xf32>
    %83 = arith.mulf %82, %80 : vector<8x32xf32>
    %84 = arith.mulf %73, %60 : vector<8x32xf32>
    %85 = arith.addf %83, %84 : vector<8x32xf32>
    %c8_37 = arith.constant 8 : index
    %c0_38 = arith.constant 0 : index
    %86 = vector.load %arg14[%c8_37, %c0_38] : memref<64x32xf32, #tpu.memory_space<vmem>>, vector<8x32xf32>
    tpu.vector_store %arg14[%c8_37, %c0_38], %85 {strides = array<i32>} : memref<64x32xf32, #tpu.memory_space<vmem>>, vector<8x32xf32>,
    %c16 = arith.constant 16 : index
    %c0_39 = arith.constant 0 : index
    %87 = vector.load %arg13[%c16, %c0_39] : memref<64x96xf32, #tpu.memory_space<vmem>>, vector<8x96xf32>
    %cst_40 = arith.constant dense<0.000000e+00> : vector<8x96xf32>
    %88 = tpu.matmul %85, %28, %cst_40 {dimension_numbers = #tpu.dot_dimension_numbers<[1], [0], [0], [1], [0, 0, 1, 1], [], []>} : vector<8x32xf32>, vector<32x96xf32>, vector<8x96xf32> -> vector<8x96xf32>
    %89 = vector.extract_strided_slice %87 {offsets = [0, 0], sizes = [8, 64], strides = [1, 1]} : vector<8x96xf32> to vector<8x64xf32>
    %90 = vector.extract_strided_slice %88 {offsets = [0, 0], sizes = [8, 64], strides = [1, 1]} : vector<8x96xf32> to vector<8x64xf32>
    %91 = arith.addf %89, %90 : vector<8x64xf32>
    %92 = arith.negf %91 : vector<8x64xf32>
    %93 = math.exp %92 : vector<8x64xf32>
    %cst_41 = arith.constant 1.000000e+00 : f32
    %94 = vector.broadcast %cst_41 : f32 to vector<8x64xf32>
    %95 = arith.addf %94, %93 : vector<8x64xf32>
    %96 = arith.divf %94, %95 : vector<8x64xf32>
    %97 = vector.extract_strided_slice %96 {offsets = [0, 0], sizes = [8, 32], strides = [1, 1]} : vector<8x64xf32> to vector<8x32xf32>
    %98 = vector.extract_strided_slice %96 {offsets = [0, 32], sizes = [8, 32], strides = [1, 1]} : vector<8x64xf32> to vector<8x32xf32>
    %99 = vector.extract_strided_slice %87 {offsets = [0, 64], sizes = [8, 32], strides = [1, 1]} : vector<8x96xf32> to vector<8x32xf32>
    %100 = vector.extract_strided_slice %88 {offsets = [0, 64], sizes = [8, 32], strides = [1, 1]} : vector<8x96xf32> to vector<8x32xf32>
    %101 = vector.broadcast %31 : vector<1x32xf32> to vector<8x32xf32>
    %102 = arith.addf %100, %101 : vector<8x32xf32>
    %103 = arith.mulf %97, %102 : vector<8x32xf32>
    %104 = arith.addf %99, %103 : vector<8x32xf32>
    %105 = math.tanh %104 : vector<8x32xf32>
    %cst_42 = arith.constant 1.000000e+00 : f32
    %106 = vector.broadcast %cst_42 : f32 to vector<8x32xf32>
    %107 = arith.subf %106, %98 : vector<8x32xf32>
    %108 = arith.mulf %107, %105 : vector<8x32xf32>
    %109 = arith.mulf %98, %85 : vector<8x32xf32>
    %110 = arith.addf %108, %109 : vector<8x32xf32>
    %c16_43 = arith.constant 16 : index
    %c0_44 = arith.constant 0 : index
    %111 = vector.load %arg14[%c16_43, %c0_44] : memref<64x32xf32, #tpu.memory_space<vmem>>, vector<8x32xf32>
    tpu.vector_store %arg14[%c16_43, %c0_44], %110 {strides = array<i32>} : memref<64x32xf32, #tpu.memory_space<vmem>>, vector<8x32xf32>,
    %c24 = arith.constant 24 : index
    %c0_45 = arith.constant 0 : index
    %112 = vector.load %arg13[%c24, %c0_45] : memref<64x96xf32, #tpu.memory_space<vmem>>, vector<8x96xf32>
    %cst_46 = arith.constant dense<0.000000e+00> : vector<8x96xf32>
    %113 = tpu.matmul %110, %28, %cst_46 {dimension_numbers = #tpu.dot_dimension_numbers<[1], [0], [0], [1], [0, 0, 1, 1], [], []>} : vector<8x32xf32>, vector<32x96xf32>, vector<8x96xf32> -> vector<8x96xf32>
    %114 = vector.extract_strided_slice %112 {offsets = [0, 0], sizes = [8, 64], strides = [1, 1]} : vector<8x96xf32> to vector<8x64xf32>
    %115 = vector.extract_strided_slice %113 {offsets = [0, 0], sizes = [8, 64], strides = [1, 1]} : vector<8x96xf32> to vector<8x64xf32>
    %116 = arith.addf %114, %115 : vector<8x64xf32>
    %117 = arith.negf %116 : vector<8x64xf32>
    %118 = math.exp %117 : vector<8x64xf32>
    %cst_47 = arith.constant 1.000000e+00 : f32
    %119 = vector.broadcast %cst_47 : f32 to vector<8x64xf32>
    %120 = arith.addf %119, %118 : vector<8x64xf32>
    %121 = arith.divf %119, %120 : vector<8x64xf32>
    %122 = vector.extract_strided_slice %121 {offsets = [0, 0], sizes = [8, 32], strides = [1, 1]} : vector<8x64xf32> to vector<8x32xf32>
    %123 = vector.extract_strided_slice %121 {offsets = [0, 32], sizes = [8, 32], strides = [1, 1]} : vector<8x64xf32> to vector<8x32xf32>
    %124 = vector.extract_strided_slice %112 {offsets = [0, 64], sizes = [8, 32], strides = [1, 1]} : vector<8x96xf32> to vector<8x32xf32>
    %125 = vector.extract_strided_slice %113 {offsets = [0, 64], sizes = [8, 32], strides = [1, 1]} : vector<8x96xf32> to vector<8x32xf32>
    %126 = vector.broadcast %31 : vector<1x32xf32> to vector<8x32xf32>
    %127 = arith.addf %125, %126 : vector<8x32xf32>
    %128 = arith.mulf %122, %127 : vector<8x32xf32>
    %129 = arith.addf %124, %128 : vector<8x32xf32>
    %130 = math.tanh %129 : vector<8x32xf32>
    %cst_48 = arith.constant 1.000000e+00 : f32
    %131 = vector.broadcast %cst_48 : f32 to vector<8x32xf32>
    %132 = arith.subf %131, %123 : vector<8x32xf32>
    %133 = arith.mulf %132, %130 : vector<8x32xf32>
    %134 = arith.mulf %123, %110 : vector<8x32xf32>
    %135 = arith.addf %133, %134 : vector<8x32xf32>
    %c24_49 = arith.constant 24 : index
    %c0_50 = arith.constant 0 : index
    %136 = vector.load %arg14[%c24_49, %c0_50] : memref<64x32xf32, #tpu.memory_space<vmem>>, vector<8x32xf32>
    tpu.vector_store %arg14[%c24_49, %c0_50], %135 {strides = array<i32>} : memref<64x32xf32, #tpu.memory_space<vmem>>, vector<8x32xf32>,
    %c32 = arith.constant 32 : index
    %c0_51 = arith.constant 0 : index
    %137 = vector.load %arg13[%c32, %c0_51] : memref<64x96xf32, #tpu.memory_space<vmem>>, vector<8x96xf32>
    %cst_52 = arith.constant dense<0.000000e+00> : vector<8x96xf32>
    %138 = tpu.matmul %135, %28, %cst_52 {dimension_numbers = #tpu.dot_dimension_numbers<[1], [0], [0], [1], [0, 0, 1, 1], [], []>} : vector<8x32xf32>, vector<32x96xf32>, vector<8x96xf32> -> vector<8x96xf32>
    %139 = vector.extract_strided_slice %137 {offsets = [0, 0], sizes = [8, 64], strides = [1, 1]} : vector<8x96xf32> to vector<8x64xf32>
    %140 = vector.extract_strided_slice %138 {offsets = [0, 0], sizes = [8, 64], strides = [1, 1]} : vector<8x96xf32> to vector<8x64xf32>
    %141 = arith.addf %139, %140 : vector<8x64xf32>
    %142 = arith.negf %141 : vector<8x64xf32>
    %143 = math.exp %142 : vector<8x64xf32>
    %cst_53 = arith.constant 1.000000e+00 : f32
    %144 = vector.broadcast %cst_53 : f32 to vector<8x64xf32>
    %145 = arith.addf %144, %143 : vector<8x64xf32>
    %146 = arith.divf %144, %145 : vector<8x64xf32>
    %147 = vector.extract_strided_slice %146 {offsets = [0, 0], sizes = [8, 32], strides = [1, 1]} : vector<8x64xf32> to vector<8x32xf32>
    %148 = vector.extract_strided_slice %146 {offsets = [0, 32], sizes = [8, 32], strides = [1, 1]} : vector<8x64xf32> to vector<8x32xf32>
    %149 = vector.extract_strided_slice %137 {offsets = [0, 64], sizes = [8, 32], strides = [1, 1]} : vector<8x96xf32> to vector<8x32xf32>
    %150 = vector.extract_strided_slice %138 {offsets = [0, 64], sizes = [8, 32], strides = [1, 1]} : vector<8x96xf32> to vector<8x32xf32>
    %151 = vector.broadcast %31 : vector<1x32xf32> to vector<8x32xf32>
    %152 = arith.addf %150, %151 : vector<8x32xf32>
    %153 = arith.mulf %147, %152 : vector<8x32xf32>
    %154 = arith.addf %149, %153 : vector<8x32xf32>
    %155 = math.tanh %154 : vector<8x32xf32>
    %cst_54 = arith.constant 1.000000e+00 : f32
    %156 = vector.broadcast %cst_54 : f32 to vector<8x32xf32>
    %157 = arith.subf %156, %148 : vector<8x32xf32>
    %158 = arith.mulf %157, %155 : vector<8x32xf32>
    %159 = arith.mulf %148, %135 : vector<8x32xf32>
    %160 = arith.addf %158, %159 : vector<8x32xf32>
    %c32_55 = arith.constant 32 : index
    %c0_56 = arith.constant 0 : index
    %161 = vector.load %arg14[%c32_55, %c0_56] : memref<64x32xf32, #tpu.memory_space<vmem>>, vector<8x32xf32>
    tpu.vector_store %arg14[%c32_55, %c0_56], %160 {strides = array<i32>} : memref<64x32xf32, #tpu.memory_space<vmem>>, vector<8x32xf32>,
    %c40 = arith.constant 40 : index
    %c0_57 = arith.constant 0 : index
    %162 = vector.load %arg13[%c40, %c0_57] : memref<64x96xf32, #tpu.memory_space<vmem>>, vector<8x96xf32>
    %cst_58 = arith.constant dense<0.000000e+00> : vector<8x96xf32>
    %163 = tpu.matmul %160, %28, %cst_58 {dimension_numbers = #tpu.dot_dimension_numbers<[1], [0], [0], [1], [0, 0, 1, 1], [], []>} : vector<8x32xf32>, vector<32x96xf32>, vector<8x96xf32> -> vector<8x96xf32>
    %164 = vector.extract_strided_slice %162 {offsets = [0, 0], sizes = [8, 64], strides = [1, 1]} : vector<8x96xf32> to vector<8x64xf32>
    %165 = vector.extract_strided_slice %163 {offsets = [0, 0], sizes = [8, 64], strides = [1, 1]} : vector<8x96xf32> to vector<8x64xf32>
    %166 = arith.addf %164, %165 : vector<8x64xf32>
    %167 = arith.negf %166 : vector<8x64xf32>
    %168 = math.exp %167 : vector<8x64xf32>
    %cst_59 = arith.constant 1.000000e+00 : f32
    %169 = vector.broadcast %cst_59 : f32 to vector<8x64xf32>
    %170 = arith.addf %169, %168 : vector<8x64xf32>
    %171 = arith.divf %169, %170 : vector<8x64xf32>
    %172 = vector.extract_strided_slice %171 {offsets = [0, 0], sizes = [8, 32], strides = [1, 1]} : vector<8x64xf32> to vector<8x32xf32>
    %173 = vector.extract_strided_slice %171 {offsets = [0, 32], sizes = [8, 32], strides = [1, 1]} : vector<8x64xf32> to vector<8x32xf32>
    %174 = vector.extract_strided_slice %162 {offsets = [0, 64], sizes = [8, 32], strides = [1, 1]} : vector<8x96xf32> to vector<8x32xf32>
    %175 = vector.extract_strided_slice %163 {offsets = [0, 64], sizes = [8, 32], strides = [1, 1]} : vector<8x96xf32> to vector<8x32xf32>
    %176 = vector.broadcast %31 : vector<1x32xf32> to vector<8x32xf32>
    %177 = arith.addf %175, %176 : vector<8x32xf32>
    %178 = arith.mulf %172, %177 : vector<8x32xf32>
    %179 = arith.addf %174, %178 : vector<8x32xf32>
    %180 = math.tanh %179 : vector<8x32xf32>
    %cst_60 = arith.constant 1.000000e+00 : f32
    %181 = vector.broadcast %cst_60 : f32 to vector<8x32xf32>
    %182 = arith.subf %181, %173 : vector<8x32xf32>
    %183 = arith.mulf %182, %180 : vector<8x32xf32>
    %184 = arith.mulf %173, %160 : vector<8x32xf32>
    %185 = arith.addf %183, %184 : vector<8x32xf32>
    %c40_61 = arith.constant 40 : index
    %c0_62 = arith.constant 0 : index
    %186 = vector.load %arg14[%c40_61, %c0_62] : memref<64x32xf32, #tpu.memory_space<vmem>>, vector<8x32xf32>
    tpu.vector_store %arg14[%c40_61, %c0_62], %185 {strides = array<i32>} : memref<64x32xf32, #tpu.memory_space<vmem>>, vector<8x32xf32>,
    %c48 = arith.constant 48 : index
    %c0_63 = arith.constant 0 : index
    %187 = vector.load %arg13[%c48, %c0_63] : memref<64x96xf32, #tpu.memory_space<vmem>>, vector<8x96xf32>
    %cst_64 = arith.constant dense<0.000000e+00> : vector<8x96xf32>
    %188 = tpu.matmul %185, %28, %cst_64 {dimension_numbers = #tpu.dot_dimension_numbers<[1], [0], [0], [1], [0, 0, 1, 1], [], []>} : vector<8x32xf32>, vector<32x96xf32>, vector<8x96xf32> -> vector<8x96xf32>
    %189 = vector.extract_strided_slice %187 {offsets = [0, 0], sizes = [8, 64], strides = [1, 1]} : vector<8x96xf32> to vector<8x64xf32>
    %190 = vector.extract_strided_slice %188 {offsets = [0, 0], sizes = [8, 64], strides = [1, 1]} : vector<8x96xf32> to vector<8x64xf32>
    %191 = arith.addf %189, %190 : vector<8x64xf32>
    %192 = arith.negf %191 : vector<8x64xf32>
    %193 = math.exp %192 : vector<8x64xf32>
    %cst_65 = arith.constant 1.000000e+00 : f32
    %194 = vector.broadcast %cst_65 : f32 to vector<8x64xf32>
    %195 = arith.addf %194, %193 : vector<8x64xf32>
    %196 = arith.divf %194, %195 : vector<8x64xf32>
    %197 = vector.extract_strided_slice %196 {offsets = [0, 0], sizes = [8, 32], strides = [1, 1]} : vector<8x64xf32> to vector<8x32xf32>
    %198 = vector.extract_strided_slice %196 {offsets = [0, 32], sizes = [8, 32], strides = [1, 1]} : vector<8x64xf32> to vector<8x32xf32>
    %199 = vector.extract_strided_slice %187 {offsets = [0, 64], sizes = [8, 32], strides = [1, 1]} : vector<8x96xf32> to vector<8x32xf32>
    %200 = vector.extract_strided_slice %188 {offsets = [0, 64], sizes = [8, 32], strides = [1, 1]} : vector<8x96xf32> to vector<8x32xf32>
    %201 = vector.broadcast %31 : vector<1x32xf32> to vector<8x32xf32>
    %202 = arith.addf %200, %201 : vector<8x32xf32>
    %203 = arith.mulf %197, %202 : vector<8x32xf32>
    %204 = arith.addf %199, %203 : vector<8x32xf32>
    %205 = math.tanh %204 : vector<8x32xf32>
    %cst_66 = arith.constant 1.000000e+00 : f32
    %206 = vector.broadcast %cst_66 : f32 to vector<8x32xf32>
    %207 = arith.subf %206, %198 : vector<8x32xf32>
    %208 = arith.mulf %207, %205 : vector<8x32xf32>
    %209 = arith.mulf %198, %185 : vector<8x32xf32>
    %210 = arith.addf %208, %209 : vector<8x32xf32>
    %c48_67 = arith.constant 48 : index
    %c0_68 = arith.constant 0 : index
    %211 = vector.load %arg14[%c48_67, %c0_68] : memref<64x32xf32, #tpu.memory_space<vmem>>, vector<8x32xf32>
    tpu.vector_store %arg14[%c48_67, %c0_68], %210 {strides = array<i32>} : memref<64x32xf32, #tpu.memory_space<vmem>>, vector<8x32xf32>,
    %c56 = arith.constant 56 : index
    %c0_69 = arith.constant 0 : index
    %212 = vector.load %arg13[%c56, %c0_69] : memref<64x96xf32, #tpu.memory_space<vmem>>, vector<8x96xf32>
    %cst_70 = arith.constant dense<0.000000e+00> : vector<8x96xf32>
    %213 = tpu.matmul %210, %28, %cst_70 {dimension_numbers = #tpu.dot_dimension_numbers<[1], [0], [0], [1], [0, 0, 1, 1], [], []>} : vector<8x32xf32>, vector<32x96xf32>, vector<8x96xf32> -> vector<8x96xf32>
    %214 = vector.extract_strided_slice %212 {offsets = [0, 0], sizes = [8, 64], strides = [1, 1]} : vector<8x96xf32> to vector<8x64xf32>
    %215 = vector.extract_strided_slice %213 {offsets = [0, 0], sizes = [8, 64], strides = [1, 1]} : vector<8x96xf32> to vector<8x64xf32>
    %216 = arith.addf %214, %215 : vector<8x64xf32>
    %217 = arith.negf %216 : vector<8x64xf32>
    %218 = math.exp %217 : vector<8x64xf32>
    %cst_71 = arith.constant 1.000000e+00 : f32
    %219 = vector.broadcast %cst_71 : f32 to vector<8x64xf32>
    %220 = arith.addf %219, %218 : vector<8x64xf32>
    %221 = arith.divf %219, %220 : vector<8x64xf32>
    %222 = vector.extract_strided_slice %221 {offsets = [0, 0], sizes = [8, 32], strides = [1, 1]} : vector<8x64xf32> to vector<8x32xf32>
    %223 = vector.extract_strided_slice %221 {offsets = [0, 32], sizes = [8, 32], strides = [1, 1]} : vector<8x64xf32> to vector<8x32xf32>
    %224 = vector.extract_strided_slice %212 {offsets = [0, 64], sizes = [8, 32], strides = [1, 1]} : vector<8x96xf32> to vector<8x32xf32>
    %225 = vector.extract_strided_slice %213 {offsets = [0, 64], sizes = [8, 32], strides = [1, 1]} : vector<8x96xf32> to vector<8x32xf32>
    %226 = vector.broadcast %31 : vector<1x32xf32> to vector<8x32xf32>
    %227 = arith.addf %225, %226 : vector<8x32xf32>
    %228 = arith.mulf %222, %227 : vector<8x32xf32>
    %229 = arith.addf %224, %228 : vector<8x32xf32>
    %230 = math.tanh %229 : vector<8x32xf32>
    %cst_72 = arith.constant 1.000000e+00 : f32
    %231 = vector.broadcast %cst_72 : f32 to vector<8x32xf32>
    %232 = arith.subf %231, %223 : vector<8x32xf32>
    %233 = arith.mulf %232, %230 : vector<8x32xf32>
    %234 = arith.mulf %223, %210 : vector<8x32xf32>
    %235 = arith.addf %233, %234 : vector<8x32xf32>
    %c56_73 = arith.constant 56 : index
    %c0_74 = arith.constant 0 : index
    %236 = vector.load %arg14[%c56_73, %c0_74] : memref<64x32xf32, #tpu.memory_space<vmem>>, vector<8x32xf32>
    tpu.vector_store %arg14[%c56_73, %c0_74], %235 {strides = array<i32>} : memref<64x32xf32, #tpu.memory_space<vmem>>, vector<8x32xf32>,
    %c0_75 = arith.constant 0 : index
    %c0_76 = arith.constant 0 : index
    %237 = vector.load %arg14[%c0_75, %c0_76] : memref<64x32xf32, #tpu.memory_space<vmem>>, vector<64x32xf32>
    %c48_77 = arith.constant 48 : index
    %c0_78 = arith.constant 0 : index
    %238 = vector.load %arg7[%c48_77, %c0_78] : memref<160x96xf32, #tpu.memory_space<vmem>>, vector<32x96xf32>
    %c32_79 = arith.constant 32 : index
    %c0_80 = arith.constant 0 : index
    %239 = vector.load %arg8[%c32_79, %c0_80] : memref<128x96xf32, #tpu.memory_space<vmem>>, vector<32x96xf32>
    %c1 = arith.constant 1 : index
    %c0_81 = arith.constant 0 : index
    %240 = vector.load %arg9[%c1, %c0_81] : memref<4x128xf32, #tpu.memory_space<vmem>>, vector<1x128xf32>
    %241 = vector.extract_strided_slice %240 {offsets = [0, 0], sizes = [1, 96], strides = [1, 1]} : vector<1x128xf32> to vector<1x96xf32>
    %242 = vector.extract_strided_slice %240 {offsets = [0, 96], sizes = [1, 32], strides = [1, 1]} : vector<1x128xf32> to vector<1x32xf32>
    %cst_82 = arith.constant dense<0.000000e+00> : vector<64x96xf32>
    %243 = tpu.matmul %237, %238, %cst_82 {dimension_numbers = #tpu.dot_dimension_numbers<[1], [0], [0], [1], [0, 0, 1, 1], [], []>} : vector<64x32xf32>, vector<32x96xf32>, vector<64x96xf32> -> vector<64x96xf32>
    %244 = vector.broadcast %241 : vector<1x96xf32> to vector<64x96xf32>
    %245 = arith.addf %243, %244 : vector<64x96xf32>
    %c0_83 = arith.constant 0 : index
    %c0_84 = arith.constant 0 : index
    %246 = vector.load %arg13[%c0_83, %c0_84] : memref<64x96xf32, #tpu.memory_space<vmem>>, vector<64x96xf32>
    tpu.vector_store %arg13[%c0_83, %c0_84], %245 {strides = array<i32>} : memref<64x96xf32, #tpu.memory_space<vmem>>, vector<64x96xf32>,
    %cst_85 = arith.constant 0.000000e+00 : f32
    %247 = vector.broadcast %cst_85 : f32 to vector<8x32xf32>
    %c0_86 = arith.constant 0 : index
    %c0_87 = arith.constant 0 : index
    %248 = vector.load %arg13[%c0_86, %c0_87] : memref<64x96xf32, #tpu.memory_space<vmem>>, vector<8x96xf32>
    %cst_88 = arith.constant dense<0.000000e+00> : vector<8x96xf32>
    %249 = tpu.matmul %247, %239, %cst_88 {dimension_numbers = #tpu.dot_dimension_numbers<[1], [0], [0], [1], [0, 0, 1, 1], [], []>} : vector<8x32xf32>, vector<32x96xf32>, vector<8x96xf32> -> vector<8x96xf32>
    %250 = vector.extract_strided_slice %248 {offsets = [0, 0], sizes = [8, 64], strides = [1, 1]} : vector<8x96xf32> to vector<8x64xf32>
    %251 = vector.extract_strided_slice %249 {offsets = [0, 0], sizes = [8, 64], strides = [1, 1]} : vector<8x96xf32> to vector<8x64xf32>
    %252 = arith.addf %250, %251 : vector<8x64xf32>
    %253 = arith.negf %252 : vector<8x64xf32>
    %254 = math.exp %253 : vector<8x64xf32>
    %cst_89 = arith.constant 1.000000e+00 : f32
    %255 = vector.broadcast %cst_89 : f32 to vector<8x64xf32>
    %256 = arith.addf %255, %254 : vector<8x64xf32>
    %257 = arith.divf %255, %256 : vector<8x64xf32>
    %258 = vector.extract_strided_slice %257 {offsets = [0, 0], sizes = [8, 32], strides = [1, 1]} : vector<8x64xf32> to vector<8x32xf32>
    %259 = vector.extract_strided_slice %257 {offsets = [0, 32], sizes = [8, 32], strides = [1, 1]} : vector<8x64xf32> to vector<8x32xf32>
    %260 = vector.extract_strided_slice %248 {offsets = [0, 64], sizes = [8, 32], strides = [1, 1]} : vector<8x96xf32> to vector<8x32xf32>
    %261 = vector.extract_strided_slice %249 {offsets = [0, 64], sizes = [8, 32], strides = [1, 1]} : vector<8x96xf32> to vector<8x32xf32>
    %262 = vector.broadcast %242 : vector<1x32xf32> to vector<8x32xf32>
    %263 = arith.addf %261, %262 : vector<8x32xf32>
    %264 = arith.mulf %258, %263 : vector<8x32xf32>
    %265 = arith.addf %260, %264 : vector<8x32xf32>
    %266 = math.tanh %265 : vector<8x32xf32>
    %cst_90 = arith.constant 1.000000e+00 : f32
    %267 = vector.broadcast %cst_90 : f32 to vector<8x32xf32>
    %268 = arith.subf %267, %259 : vector<8x32xf32>
    %269 = arith.mulf %268, %266 : vector<8x32xf32>
    %270 = arith.mulf %259, %247 : vector<8x32xf32>
    %271 = arith.addf %269, %270 : vector<8x32xf32>
    %c8_91 = arith.constant 8 : index
    %c0_92 = arith.constant 0 : index
    %272 = vector.load %arg13[%c8_91, %c0_92] : memref<64x96xf32, #tpu.memory_space<vmem>>, vector<8x96xf32>
    %cst_93 = arith.constant dense<0.000000e+00> : vector<8x96xf32>
    %273 = tpu.matmul %271, %239, %cst_93 {dimension_numbers = #tpu.dot_dimension_numbers<[1], [0], [0], [1], [0, 0, 1, 1], [], []>} : vector<8x32xf32>, vector<32x96xf32>, vector<8x96xf32> -> vector<8x96xf32>
    %274 = vector.extract_strided_slice %272 {offsets = [0, 0], sizes = [8, 64], strides = [1, 1]} : vector<8x96xf32> to vector<8x64xf32>
    %275 = vector.extract_strided_slice %273 {offsets = [0, 0], sizes = [8, 64], strides = [1, 1]} : vector<8x96xf32> to vector<8x64xf32>
    %276 = arith.addf %274, %275 : vector<8x64xf32>
    %277 = arith.negf %276 : vector<8x64xf32>
    %278 = math.exp %277 : vector<8x64xf32>
    %cst_94 = arith.constant 1.000000e+00 : f32
    %279 = vector.broadcast %cst_94 : f32 to vector<8x64xf32>
    %280 = arith.addf %279, %278 : vector<8x64xf32>
    %281 = arith.divf %279, %280 : vector<8x64xf32>
    %282 = vector.extract_strided_slice %281 {offsets = [0, 0], sizes = [8, 32], strides = [1, 1]} : vector<8x64xf32> to vector<8x32xf32>
    %283 = vector.extract_strided_slice %281 {offsets = [0, 32], sizes = [8, 32], strides = [1, 1]} : vector<8x64xf32> to vector<8x32xf32>
    %284 = vector.extract_strided_slice %272 {offsets = [0, 64], sizes = [8, 32], strides = [1, 1]} : vector<8x96xf32> to vector<8x32xf32>
    %285 = vector.extract_strided_slice %273 {offsets = [0, 64], sizes = [8, 32], strides = [1, 1]} : vector<8x96xf32> to vector<8x32xf32>
    %286 = vector.broadcast %242 : vector<1x32xf32> to vector<8x32xf32>
    %287 = arith.addf %285, %286 : vector<8x32xf32>
    %288 = arith.mulf %282, %287 : vector<8x32xf32>
    %289 = arith.addf %284, %288 : vector<8x32xf32>
    %290 = math.tanh %289 : vector<8x32xf32>
    %cst_95 = arith.constant 1.000000e+00 : f32
    %291 = vector.broadcast %cst_95 : f32 to vector<8x32xf32>
    %292 = arith.subf %291, %283 : vector<8x32xf32>
    %293 = arith.mulf %292, %290 : vector<8x32xf32>
    %294 = arith.mulf %283, %271 : vector<8x32xf32>
    %295 = arith.addf %293, %294 : vector<8x32xf32>
    %c16_96 = arith.constant 16 : index
    %c0_97 = arith.constant 0 : index
    %296 = vector.load %arg13[%c16_96, %c0_97] : memref<64x96xf32, #tpu.memory_space<vmem>>, vector<8x96xf32>
    %cst_98 = arith.constant dense<0.000000e+00> : vector<8x96xf32>
    %297 = tpu.matmul %295, %239, %cst_98 {dimension_numbers = #tpu.dot_dimension_numbers<[1], [0], [0], [1], [0, 0, 1, 1], [], []>} : vector<8x32xf32>, vector<32x96xf32>, vector<8x96xf32> -> vector<8x96xf32>
    %298 = vector.extract_strided_slice %296 {offsets = [0, 0], sizes = [8, 64], strides = [1, 1]} : vector<8x96xf32> to vector<8x64xf32>
    %299 = vector.extract_strided_slice %297 {offsets = [0, 0], sizes = [8, 64], strides = [1, 1]} : vector<8x96xf32> to vector<8x64xf32>
    %300 = arith.addf %298, %299 : vector<8x64xf32>
    %301 = arith.negf %300 : vector<8x64xf32>
    %302 = math.exp %301 : vector<8x64xf32>
    %cst_99 = arith.constant 1.000000e+00 : f32
    %303 = vector.broadcast %cst_99 : f32 to vector<8x64xf32>
    %304 = arith.addf %303, %302 : vector<8x64xf32>
    %305 = arith.divf %303, %304 : vector<8x64xf32>
    %306 = vector.extract_strided_slice %305 {offsets = [0, 0], sizes = [8, 32], strides = [1, 1]} : vector<8x64xf32> to vector<8x32xf32>
    %307 = vector.extract_strided_slice %305 {offsets = [0, 32], sizes = [8, 32], strides = [1, 1]} : vector<8x64xf32> to vector<8x32xf32>
    %308 = vector.extract_strided_slice %296 {offsets = [0, 64], sizes = [8, 32], strides = [1, 1]} : vector<8x96xf32> to vector<8x32xf32>
    %309 = vector.extract_strided_slice %297 {offsets = [0, 64], sizes = [8, 32], strides = [1, 1]} : vector<8x96xf32> to vector<8x32xf32>
    %310 = vector.broadcast %242 : vector<1x32xf32> to vector<8x32xf32>
    %311 = arith.addf %309, %310 : vector<8x32xf32>
    %312 = arith.mulf %306, %311 : vector<8x32xf32>
    %313 = arith.addf %308, %312 : vector<8x32xf32>
    %314 = math.tanh %313 : vector<8x32xf32>
    %cst_100 = arith.constant 1.000000e+00 : f32
    %315 = vector.broadcast %cst_100 : f32 to vector<8x32xf32>
    %316 = arith.subf %315, %307 : vector<8x32xf32>
    %317 = arith.mulf %316, %314 : vector<8x32xf32>
    %318 = arith.mulf %307, %295 : vector<8x32xf32>
    %319 = arith.addf %317, %318 : vector<8x32xf32>
    %c24_101 = arith.constant 24 : index
    %c0_102 = arith.constant 0 : index
    %320 = vector.load %arg13[%c24_101, %c0_102] : memref<64x96xf32, #tpu.memory_space<vmem>>, vector<8x96xf32>
    %cst_103 = arith.constant dense<0.000000e+00> : vector<8x96xf32>
    %321 = tpu.matmul %319, %239, %cst_103 {dimension_numbers = #tpu.dot_dimension_numbers<[1], [0], [0], [1], [0, 0, 1, 1], [], []>} : vector<8x32xf32>, vector<32x96xf32>, vector<8x96xf32> -> vector<8x96xf32>
    %322 = vector.extract_strided_slice %320 {offsets = [0, 0], sizes = [8, 64], strides = [1, 1]} : vector<8x96xf32> to vector<8x64xf32>
    %323 = vector.extract_strided_slice %321 {offsets = [0, 0], sizes = [8, 64], strides = [1, 1]} : vector<8x96xf32> to vector<8x64xf32>
    %324 = arith.addf %322, %323 : vector<8x64xf32>
    %325 = arith.negf %324 : vector<8x64xf32>
    %326 = math.exp %325 : vector<8x64xf32>
    %cst_104 = arith.constant 1.000000e+00 : f32
    %327 = vector.broadcast %cst_104 : f32 to vector<8x64xf32>
    %328 = arith.addf %327, %326 : vector<8x64xf32>
    %329 = arith.divf %327, %328 : vector<8x64xf32>
    %330 = vector.extract_strided_slice %329 {offsets = [0, 0], sizes = [8, 32], strides = [1, 1]} : vector<8x64xf32> to vector<8x32xf32>
    %331 = vector.extract_strided_slice %329 {offsets = [0, 32], sizes = [8, 32], strides = [1, 1]} : vector<8x64xf32> to vector<8x32xf32>
    %332 = vector.extract_strided_slice %320 {offsets = [0, 64], sizes = [8, 32], strides = [1, 1]} : vector<8x96xf32> to vector<8x32xf32>
    %333 = vector.extract_strided_slice %321 {offsets = [0, 64], sizes = [8, 32], strides = [1, 1]} : vector<8x96xf32> to vector<8x32xf32>
    %334 = vector.broadcast %242 : vector<1x32xf32> to vector<8x32xf32>
    %335 = arith.addf %333, %334 : vector<8x32xf32>
    %336 = arith.mulf %330, %335 : vector<8x32xf32>
    %337 = arith.addf %332, %336 : vector<8x32xf32>
    %338 = math.tanh %337 : vector<8x32xf32>
    %cst_105 = arith.constant 1.000000e+00 : f32
    %339 = vector.broadcast %cst_105 : f32 to vector<8x32xf32>
    %340 = arith.subf %339, %331 : vector<8x32xf32>
    %341 = arith.mulf %340, %338 : vector<8x32xf32>
    %342 = arith.mulf %331, %319 : vector<8x32xf32>
    %343 = arith.addf %341, %342 : vector<8x32xf32>
    %c32_106 = arith.constant 32 : index
    %c0_107 = arith.constant 0 : index
    %344 = vector.load %arg13[%c32_106, %c0_107] : memref<64x96xf32, #tpu.memory_space<vmem>>, vector<8x96xf32>
    %cst_108 = arith.constant dense<0.000000e+00> : vector<8x96xf32>
    %345 = tpu.matmul %343, %239, %cst_108 {dimension_numbers = #tpu.dot_dimension_numbers<[1], [0], [0], [1], [0, 0, 1, 1], [], []>} : vector<8x32xf32>, vector<32x96xf32>, vector<8x96xf32> -> vector<8x96xf32>
    %346 = vector.extract_strided_slice %344 {offsets = [0, 0], sizes = [8, 64], strides = [1, 1]} : vector<8x96xf32> to vector<8x64xf32>
    %347 = vector.extract_strided_slice %345 {offsets = [0, 0], sizes = [8, 64], strides = [1, 1]} : vector<8x96xf32> to vector<8x64xf32>
    %348 = arith.addf %346, %347 : vector<8x64xf32>
    %349 = arith.negf %348 : vector<8x64xf32>
    %350 = math.exp %349 : vector<8x64xf32>
    %cst_109 = arith.constant 1.000000e+00 : f32
    %351 = vector.broadcast %cst_109 : f32 to vector<8x64xf32>
    %352 = arith.addf %351, %350 : vector<8x64xf32>
    %353 = arith.divf %351, %352 : vector<8x64xf32>
    %354 = vector.extract_strided_slice %353 {offsets = [0, 0], sizes = [8, 32], strides = [1, 1]} : vector<8x64xf32> to vector<8x32xf32>
    %355 = vector.extract_strided_slice %353 {offsets = [0, 32], sizes = [8, 32], strides = [1, 1]} : vector<8x64xf32> to vector<8x32xf32>
    %356 = vector.extract_strided_slice %344 {offsets = [0, 64], sizes = [8, 32], strides = [1, 1]} : vector<8x96xf32> to vector<8x32xf32>
    %357 = vector.extract_strided_slice %345 {offsets = [0, 64], sizes = [8, 32], strides = [1, 1]} : vector<8x96xf32> to vector<8x32xf32>
    %358 = vector.broadcast %242 : vector<1x32xf32> to vector<8x32xf32>
    %359 = arith.addf %357, %358 : vector<8x32xf32>
    %360 = arith.mulf %354, %359 : vector<8x32xf32>
    %361 = arith.addf %356, %360 : vector<8x32xf32>
    %362 = math.tanh %361 : vector<8x32xf32>
    %cst_110 = arith.constant 1.000000e+00 : f32
    %363 = vector.broadcast %cst_110 : f32 to vector<8x32xf32>
    %364 = arith.subf %363, %355 : vector<8x32xf32>
    %365 = arith.mulf %364, %362 : vector<8x32xf32>
    %366 = arith.mulf %355, %343 : vector<8x32xf32>
    %367 = arith.addf %365, %366 : vector<8x32xf32>
    %c40_111 = arith.constant 40 : index
    %c0_112 = arith.constant 0 : index
    %368 = vector.load %arg13[%c40_111, %c0_112] : memref<64x96xf32, #tpu.memory_space<vmem>>, vector<8x96xf32>
    %cst_113 = arith.constant dense<0.000000e+00> : vector<8x96xf32>
    %369 = tpu.matmul %367, %239, %cst_113 {dimension_numbers = #tpu.dot_dimension_numbers<[1], [0], [0], [1], [0, 0, 1, 1], [], []>} : vector<8x32xf32>, vector<32x96xf32>, vector<8x96xf32> -> vector<8x96xf32>
    %370 = vector.extract_strided_slice %368 {offsets = [0, 0], sizes = [8, 64], strides = [1, 1]} : vector<8x96xf32> to vector<8x64xf32>
    %371 = vector.extract_strided_slice %369 {offsets = [0, 0], sizes = [8, 64], strides = [1, 1]} : vector<8x96xf32> to vector<8x64xf32>
    %372 = arith.addf %370, %371 : vector<8x64xf32>
    %373 = arith.negf %372 : vector<8x64xf32>
    %374 = math.exp %373 : vector<8x64xf32>
    %cst_114 = arith.constant 1.000000e+00 : f32
    %375 = vector.broadcast %cst_114 : f32 to vector<8x64xf32>
    %376 = arith.addf %375, %374 : vector<8x64xf32>
    %377 = arith.divf %375, %376 : vector<8x64xf32>
    %378 = vector.extract_strided_slice %377 {offsets = [0, 0], sizes = [8, 32], strides = [1, 1]} : vector<8x64xf32> to vector<8x32xf32>
    %379 = vector.extract_strided_slice %377 {offsets = [0, 32], sizes = [8, 32], strides = [1, 1]} : vector<8x64xf32> to vector<8x32xf32>
    %380 = vector.extract_strided_slice %368 {offsets = [0, 64], sizes = [8, 32], strides = [1, 1]} : vector<8x96xf32> to vector<8x32xf32>
    %381 = vector.extract_strided_slice %369 {offsets = [0, 64], sizes = [8, 32], strides = [1, 1]} : vector<8x96xf32> to vector<8x32xf32>
    %382 = vector.broadcast %242 : vector<1x32xf32> to vector<8x32xf32>
    %383 = arith.addf %381, %382 : vector<8x32xf32>
    %384 = arith.mulf %378, %383 : vector<8x32xf32>
    %385 = arith.addf %380, %384 : vector<8x32xf32>
    %386 = math.tanh %385 : vector<8x32xf32>
    %cst_115 = arith.constant 1.000000e+00 : f32
    %387 = vector.broadcast %cst_115 : f32 to vector<8x32xf32>
    %388 = arith.subf %387, %379 : vector<8x32xf32>
    %389 = arith.mulf %388, %386 : vector<8x32xf32>
    %390 = arith.mulf %379, %367 : vector<8x32xf32>
    %391 = arith.addf %389, %390 : vector<8x32xf32>
    %c48_116 = arith.constant 48 : index
    %c0_117 = arith.constant 0 : index
    %392 = vector.load %arg13[%c48_116, %c0_117] : memref<64x96xf32, #tpu.memory_space<vmem>>, vector<8x96xf32>
    %cst_118 = arith.constant dense<0.000000e+00> : vector<8x96xf32>
    %393 = tpu.matmul %391, %239, %cst_118 {dimension_numbers = #tpu.dot_dimension_numbers<[1], [0], [0], [1], [0, 0, 1, 1], [], []>} : vector<8x32xf32>, vector<32x96xf32>, vector<8x96xf32> -> vector<8x96xf32>
    %394 = vector.extract_strided_slice %392 {offsets = [0, 0], sizes = [8, 64], strides = [1, 1]} : vector<8x96xf32> to vector<8x64xf32>
    %395 = vector.extract_strided_slice %393 {offsets = [0, 0], sizes = [8, 64], strides = [1, 1]} : vector<8x96xf32> to vector<8x64xf32>
    %396 = arith.addf %394, %395 : vector<8x64xf32>
    %397 = arith.negf %396 : vector<8x64xf32>
    %398 = math.exp %397 : vector<8x64xf32>
    %cst_119 = arith.constant 1.000000e+00 : f32
    %399 = vector.broadcast %cst_119 : f32 to vector<8x64xf32>
    %400 = arith.addf %399, %398 : vector<8x64xf32>
    %401 = arith.divf %399, %400 : vector<8x64xf32>
    %402 = vector.extract_strided_slice %401 {offsets = [0, 0], sizes = [8, 32], strides = [1, 1]} : vector<8x64xf32> to vector<8x32xf32>
    %403 = vector.extract_strided_slice %401 {offsets = [0, 32], sizes = [8, 32], strides = [1, 1]} : vector<8x64xf32> to vector<8x32xf32>
    %404 = vector.extract_strided_slice %392 {offsets = [0, 64], sizes = [8, 32], strides = [1, 1]} : vector<8x96xf32> to vector<8x32xf32>
    %405 = vector.extract_strided_slice %393 {offsets = [0, 64], sizes = [8, 32], strides = [1, 1]} : vector<8x96xf32> to vector<8x32xf32>
    %406 = vector.broadcast %242 : vector<1x32xf32> to vector<8x32xf32>
    %407 = arith.addf %405, %406 : vector<8x32xf32>
    %408 = arith.mulf %402, %407 : vector<8x32xf32>
    %409 = arith.addf %404, %408 : vector<8x32xf32>
    %410 = math.tanh %409 : vector<8x32xf32>
    %cst_120 = arith.constant 1.000000e+00 : f32
    %411 = vector.broadcast %cst_120 : f32 to vector<8x32xf32>
    %412 = arith.subf %411, %403 : vector<8x32xf32>
    %413 = arith.mulf %412, %410 : vector<8x32xf32>
    %414 = arith.mulf %403, %391 : vector<8x32xf32>
    %415 = arith.addf %413, %414 : vector<8x32xf32>
    %c56_121 = arith.constant 56 : index
    %c0_122 = arith.constant 0 : index
    %416 = vector.load %arg13[%c56_121, %c0_122] : memref<64x96xf32, #tpu.memory_space<vmem>>, vector<8x96xf32>
    %cst_123 = arith.constant dense<0.000000e+00> : vector<8x96xf32>
    %417 = tpu.matmul %415, %239, %cst_123 {dimension_numbers = #tpu.dot_dimension_numbers<[1], [0], [0], [1], [0, 0, 1, 1], [], []>} : vector<8x32xf32>, vector<32x96xf32>, vector<8x96xf32> -> vector<8x96xf32>
    %418 = vector.extract_strided_slice %416 {offsets = [0, 0], sizes = [8, 64], strides = [1, 1]} : vector<8x96xf32> to vector<8x64xf32>
    %419 = vector.extract_strided_slice %417 {offsets = [0, 0], sizes = [8, 64], strides = [1, 1]} : vector<8x96xf32> to vector<8x64xf32>
    %420 = arith.addf %418, %419 : vector<8x64xf32>
    %421 = arith.negf %420 : vector<8x64xf32>
    %422 = math.exp %421 : vector<8x64xf32>
    %cst_124 = arith.constant 1.000000e+00 : f32
    %423 = vector.broadcast %cst_124 : f32 to vector<8x64xf32>
    %424 = arith.addf %423, %422 : vector<8x64xf32>
    %425 = arith.divf %423, %424 : vector<8x64xf32>
    %426 = vector.extract_strided_slice %425 {offsets = [0, 0], sizes = [8, 32], strides = [1, 1]} : vector<8x64xf32> to vector<8x32xf32>
    %427 = vector.extract_strided_slice %425 {offsets = [0, 32], sizes = [8, 32], strides = [1, 1]} : vector<8x64xf32> to vector<8x32xf32>
    %428 = vector.extract_strided_slice %416 {offsets = [0, 64], sizes = [8, 32], strides = [1, 1]} : vector<8x96xf32> to vector<8x32xf32>
    %429 = vector.extract_strided_slice %417 {offsets = [0, 64], sizes = [8, 32], strides = [1, 1]} : vector<8x96xf32> to vector<8x32xf32>
    %430 = vector.broadcast %242 : vector<1x32xf32> to vector<8x32xf32>
    %431 = arith.addf %429, %430 : vector<8x32xf32>
    %432 = arith.mulf %426, %431 : vector<8x32xf32>
    %433 = arith.addf %428, %432 : vector<8x32xf32>
    %434 = math.tanh %433 : vector<8x32xf32>
    %cst_125 = arith.constant 1.000000e+00 : f32
    %435 = vector.broadcast %cst_125 : f32 to vector<8x32xf32>
    %436 = arith.subf %435, %427 : vector<8x32xf32>
    %437 = arith.mulf %436, %434 : vector<8x32xf32>
    %438 = arith.mulf %427, %415 : vector<8x32xf32>
    %439 = arith.addf %437, %438 : vector<8x32xf32>
    %c64 = arith.constant 64 : index
    %c0_126 = arith.constant 0 : index
    %440 = vector.load %arg8[%c64, %c0_126] : memref<128x96xf32, #tpu.memory_space<vmem>>, vector<32x96xf32>
    %c2_127 = arith.constant 2 : index
    %c0_128 = arith.constant 0 : index
    %441 = vector.load %arg9[%c2_127, %c0_128] : memref<4x128xf32, #tpu.memory_space<vmem>>, vector<1x128xf32>
    %442 = vector.extract_strided_slice %441 {offsets = [0, 96], sizes = [1, 32], strides = [1, 1]} : vector<1x128xf32> to vector<1x32xf32>
    %cst_129 = arith.constant dense<0.000000e+00> : vector<8x96xf32>
    %443 = tpu.matmul %235, %440, %cst_129 {dimension_numbers = #tpu.dot_dimension_numbers<[1], [0], [0], [1], [0, 0, 1, 1], [], []>} : vector<8x32xf32>, vector<32x96xf32>, vector<8x96xf32> -> vector<8x96xf32>
    %444 = vector.extract_strided_slice %26 {offsets = [0, 0], sizes = [8, 64], strides = [1, 1]} : vector<8x96xf32> to vector<8x64xf32>
    %445 = vector.extract_strided_slice %443 {offsets = [0, 0], sizes = [8, 64], strides = [1, 1]} : vector<8x96xf32> to vector<8x64xf32>
    %446 = arith.addf %444, %445 : vector<8x64xf32>
    %447 = arith.negf %446 : vector<8x64xf32>
    %448 = math.exp %447 : vector<8x64xf32>
    %cst_130 = arith.constant 1.000000e+00 : f32
    %449 = vector.broadcast %cst_130 : f32 to vector<8x64xf32>
    %450 = arith.addf %449, %448 : vector<8x64xf32>
    %451 = arith.divf %449, %450 : vector<8x64xf32>
    %452 = vector.extract_strided_slice %451 {offsets = [0, 0], sizes = [8, 32], strides = [1, 1]} : vector<8x64xf32> to vector<8x32xf32>
    %453 = vector.extract_strided_slice %451 {offsets = [0, 32], sizes = [8, 32], strides = [1, 1]} : vector<8x64xf32> to vector<8x32xf32>
    %454 = vector.extract_strided_slice %26 {offsets = [0, 64], sizes = [8, 32], strides = [1, 1]} : vector<8x96xf32> to vector<8x32xf32>
    %455 = vector.extract_strided_slice %443 {offsets = [0, 64], sizes = [8, 32], strides = [1, 1]} : vector<8x96xf32> to vector<8x32xf32>
    %456 = vector.broadcast %442 : vector<1x32xf32> to vector<8x32xf32>
    %457 = arith.addf %455, %456 : vector<8x32xf32>
    %458 = arith.mulf %452, %457 : vector<8x32xf32>
    %459 = arith.addf %454, %458 : vector<8x32xf32>
    %460 = math.tanh %459 : vector<8x32xf32>
    %cst_131 = arith.constant 1.000000e+00 : f32
    %461 = vector.broadcast %cst_131 : f32 to vector<8x32xf32>
    %462 = arith.subf %461, %453 : vector<8x32xf32>
    %463 = arith.mulf %462, %460 : vector<8x32xf32>
    %464 = arith.mulf %453, %235 : vector<8x32xf32>
    %465 = arith.addf %463, %464 : vector<8x32xf32>
    %c128 = arith.constant 128 : index
    %c0_132 = arith.constant 0 : index
    %466 = vector.load %arg7[%c128, %c0_132] : memref<160x96xf32, #tpu.memory_space<vmem>>, vector<32x96xf32>
    %c96 = arith.constant 96 : index
    %c0_133 = arith.constant 0 : index
    %467 = vector.load %arg8[%c96, %c0_133] : memref<128x96xf32, #tpu.memory_space<vmem>>, vector<32x96xf32>
    %c3 = arith.constant 3 : index
    %c0_134 = arith.constant 0 : index
    %468 = vector.load %arg9[%c3, %c0_134] : memref<4x128xf32, #tpu.memory_space<vmem>>, vector<1x128xf32>
    %469 = vector.extract_strided_slice %468 {offsets = [0, 0], sizes = [1, 96], strides = [1, 1]} : vector<1x128xf32> to vector<1x96xf32>
    %470 = vector.extract_strided_slice %468 {offsets = [0, 96], sizes = [1, 32], strides = [1, 1]} : vector<1x128xf32> to vector<1x32xf32>
    %cst_135 = arith.constant dense<0.000000e+00> : vector<8x96xf32>
    %471 = tpu.matmul %465, %466, %cst_135 {dimension_numbers = #tpu.dot_dimension_numbers<[1], [0], [0], [1], [0, 0, 1, 1], [], []>} : vector<8x32xf32>, vector<32x96xf32>, vector<8x96xf32> -> vector<8x96xf32>
    %472 = vector.broadcast %469 : vector<1x96xf32> to vector<8x96xf32>
    %473 = arith.addf %471, %472 : vector<8x96xf32>
    %cst_136 = arith.constant dense<0.000000e+00> : vector<8x96xf32>
    %474 = tpu.matmul %439, %467, %cst_136 {dimension_numbers = #tpu.dot_dimension_numbers<[1], [0], [0], [1], [0, 0, 1, 1], [], []>} : vector<8x32xf32>, vector<32x96xf32>, vector<8x96xf32> -> vector<8x96xf32>
    %475 = vector.extract_strided_slice %473 {offsets = [0, 0], sizes = [8, 64], strides = [1, 1]} : vector<8x96xf32> to vector<8x64xf32>
    %476 = vector.extract_strided_slice %474 {offsets = [0, 0], sizes = [8, 64], strides = [1, 1]} : vector<8x96xf32> to vector<8x64xf32>
    %477 = arith.addf %475, %476 : vector<8x64xf32>
    %478 = arith.negf %477 : vector<8x64xf32>
    %479 = math.exp %478 : vector<8x64xf32>
    %cst_137 = arith.constant 1.000000e+00 : f32
    %480 = vector.broadcast %cst_137 : f32 to vector<8x64xf32>
    %481 = arith.addf %480, %479 : vector<8x64xf32>
    %482 = arith.divf %480, %481 : vector<8x64xf32>
    %483 = vector.extract_strided_slice %482 {offsets = [0, 0], sizes = [8, 32], strides = [1, 1]} : vector<8x64xf32> to vector<8x32xf32>
    %484 = vector.extract_strided_slice %482 {offsets = [0, 32], sizes = [8, 32], strides = [1, 1]} : vector<8x64xf32> to vector<8x32xf32>
    %485 = vector.extract_strided_slice %473 {offsets = [0, 64], sizes = [8, 32], strides = [1, 1]} : vector<8x96xf32> to vector<8x32xf32>
    %486 = vector.extract_strided_slice %474 {offsets = [0, 64], sizes = [8, 32], strides = [1, 1]} : vector<8x96xf32> to vector<8x32xf32>
    %487 = vector.broadcast %470 : vector<1x32xf32> to vector<8x32xf32>
    %488 = arith.addf %486, %487 : vector<8x32xf32>
    %489 = arith.mulf %483, %488 : vector<8x32xf32>
    %490 = arith.addf %485, %489 : vector<8x32xf32>
    %491 = math.tanh %490 : vector<8x32xf32>
    %cst_138 = arith.constant 1.000000e+00 : f32
    %492 = vector.broadcast %cst_138 : f32 to vector<8x32xf32>
    %493 = arith.subf %492, %484 : vector<8x32xf32>
    %494 = arith.mulf %493, %491 : vector<8x32xf32>
    %495 = arith.mulf %484, %439 : vector<8x32xf32>
    %496 = arith.addf %494, %495 : vector<8x32xf32>
    %c0_139 = arith.constant 0 : index
    %c0_140 = arith.constant 0 : index
    %497 = vector.load %arg10[%c0_139, %c0_140] : memref<1x32xf32, #tpu.memory_space<vmem>>, vector<1x32xf32>
    %498 = vector.broadcast %497 : vector<1x32xf32> to vector<8x32xf32>
    %499 = arith.mulf %496, %498 : vector<8x32xf32>
    %cst_141 = arith.constant dense<0.000000e+00> : vector<8xf32>
    %500 = vector.multi_reduction <add>, %499, %cst_141 [1] : vector<8x32xf32> to vector<8xf32>
    %501 = vector.shape_cast %500 : vector<8xf32> to vector<8x1xf32>
    %c0_142 = arith.constant 0 : index
    %c0_143 = arith.constant 0 : index
    %502 = vector.load %arg11[%c0_142, %c0_143] : memref<1x1xf32, #tpu.memory_space<vmem>>, vector<1x1xf32>
    %503 = vector.broadcast %502 : vector<1x1xf32> to vector<8x1xf32>
    %504 = arith.addf %501, %503 : vector<8x1xf32>
    %c0_144 = arith.constant 0 : index
    %c0_145 = arith.constant 0 : index
    %505 = vector.load %arg12[%c0_144, %c0_145] : memref<8x1xf32, #tpu.memory_space<vmem>>, vector<8x1xf32>
    tpu.vector_store %arg12[%c0_144, %c0_145], %504 {strides = array<i32>} : memref<8x1xf32, #tpu.memory_space<vmem>>, vector<8x1xf32>,
    return
  }
}

</mosaic_0001>

<llo_original>
// kernel: seq2seq_flow_predictor.1
$region0: #{seq2seq_flow_predictor.1}
  #allocation0 [shape = 'u32[]', space=smem, size = 0x4, offset = 0x4, fixed_abs, tag = 'smem constant byte address 0x4 - core index']
  #allocation1 [shape = 'u32[144,128]{1,0:T(1,128)}', space=vmem, size = 0x12000, scoped, tag = 'internal scratch']
  #allocation2 [shape = 'f32[64,96]{1,0:T(8,128)}', space=vmem, size = 0x8000, scoped, tag = 'scratch operand']
  #allocation3 [shape = 'f32[64,32]{1,0:T(8,128)}', space=vmem, size = 0x8000, scoped, tag = 'scratch operand']
  #allocation4 [shape = 'f32[1,1]{1,0:T(1,128)S(1)}', space=vmem, size = 0x200, scoped, tag = 'scoped memory for seq2seq_flow_predictor.1']
  %s0 = inlined_call_operand.vmem [shape: f32[64,1], index: 0, kind: input, shape index: {}]
  %s1 = inlined_call_operand.vmem [shape: f32[8,32], index: 1, kind: input, shape index: {}]
  %s2 = inlined_call_operand.vmem [shape: f32[64,16], index: 2, kind: input, shape index: {}]
  %s3 = inlined_call_operand.vmem [shape: f32[1,16], index: 3, kind: input, shape index: {}]
  %s4 = inlined_call_operand.vmem [shape: f32[1,16], index: 4, kind: input, shape index: {}]
  %s5 = inlined_call_operand.vmem [shape: f32[32,16], index: 5, kind: input, shape index: {}]
  %s6 = inlined_call_operand.vmem [shape: f32[1,16], index: 6, kind: input, shape index: {}]
  %s7 = inlined_call_operand.vmem [shape: f32[160,96], index: 7, kind: input, shape index: {}]
  %s8 = inlined_call_operand.vmem [shape: f32[128,96], index: 8, kind: input, shape index: {}]
  %s9 = inlined_call_operand.vmem [shape: f32[4,128], index: 9, kind: input, shape index: {}]
  %s10 = inlined_call_operand.vmem [shape: f32[1,32], index: 10, kind: input, shape index: {}]
  %s11 = inlined_call_operand.<no memory space> [shape: f32[1,1], index: 11, kind: input, shape index: {}]
  %s12 = inlined_call_operand.vmem [shape: f32[8,1], index: 12, kind: output, shape index: {}]
  %s13 = sld [smem:[#allocation0]]
  $region58: #{seq2seq_flow_predictor.1} parent=0
    _
  %s15 = ssub.s32 1, %s13
  %s16 = scalar_select 0, %s15, %s13
  %v17 = vstv %s11
  %18 = vst [vmem:[#allocation4] sm:$0x1] %v17
  // Predicated region
  $region2: #{seq2seq_flow_predictor.1} parent=0 // pred_check
    _
  $region3: #{seq2seq_flow_predictor.1} parent=0 // pred_check_branch
    %20 = sbr.rel (0) target = $region5
  $region4: #{seq2seq_flow_predictor.1} parent=0 // pred_region
    _
  $region5: #{seq2seq_flow_predictor.1} parent=0 // pred_fallthru
    _
  // Predicated region
  $region6: #{seq2seq_flow_predictor.1} parent=0 // pred_check
    _
  $region7: #{seq2seq_flow_predictor.1} parent=0 // pred_check_branch
    %22 = sbr.rel (0) target = $region9
  $region8: #{seq2seq_flow_predictor.1} parent=0 // pred_region
    _
  $region9: #{seq2seq_flow_predictor.1} parent=0 // pred_fallthru
    _
  // Predicated region
  $region10: #{seq2seq_flow_predictor.1} parent=0 // pred_check
    _
  $region11: #{seq2seq_flow_predictor.1} parent=0 // pred_check_branch
    %24 = sbr.rel (0) target = $region13
  $region12: #{seq2seq_flow_predictor.1} parent=0 // pred_region
    _
  $region13: #{seq2seq_flow_predictor.1} parent=0 // pred_fallthru
    _
  // Predicated region
  $region14: #{seq2seq_flow_predictor.1} parent=0 // pred_check
    _
  $region15: #{seq2seq_flow_predictor.1} parent=0 // pred_check_branch
    %26 = sbr.rel (0) target = $region17
  $region16: #{seq2seq_flow_predictor.1} parent=0 // pred_region
    _
  $region17: #{seq2seq_flow_predictor.1} parent=0 // pred_fallthru
    _
  // Predicated region
  $region18: #{seq2seq_flow_predictor.1} parent=0 // pred_check
    _
  $region19: #{seq2seq_flow_predictor.1} parent=0 // pred_check_branch
    %28 = sbr.rel (0) target = $region21
  $region20: #{seq2seq_flow_predictor.1} parent=0 // pred_region
    _
  $region21: #{seq2seq_flow_predictor.1} parent=0 // pred_fallthru
    _
  // Predicated region
  $region22: #{seq2seq_flow_predictor.1} parent=0 // pred_check
    _
  $region23: #{seq2seq_flow_predictor.1} parent=0 // pred_check_branch
    %30 = sbr.rel (0) target = $region25
  $region24: #{seq2seq_flow_predictor.1} parent=0 // pred_region
    _
  $region25: #{seq2seq_flow_predictor.1} parent=0 // pred_fallthru
    _
  // Predicated region
  $region26: #{seq2seq_flow_predictor.1} parent=0 // pred_check
    _
  $region27: #{seq2seq_flow_predictor.1} parent=0 // pred_check_branch
    %32 = sbr.rel (0) target = $region29
  $region28: #{seq2seq_flow_predictor.1} parent=0 // pred_region
    _
  $region29: #{seq2seq_flow_predictor.1} parent=0 // pred_fallthru
    _
  // Predicated region
  $region30: #{seq2seq_flow_predictor.1} parent=0 // pred_check
    _
  $region31: #{seq2seq_flow_predictor.1} parent=0 // pred_check_branch
    %34 = sbr.rel (0) target = $region33
  $region32: #{seq2seq_flow_predictor.1} parent=0 // pred_region
    _
  $region33: #{seq2seq_flow_predictor.1} parent=0 // pred_fallthru
    _
  // Predicated region
  $region34: #{seq2seq_flow_predictor.1} parent=0 // pred_check
    _
  $region35: #{seq2seq_flow_predictor.1} parent=0 // pred_check_branch
    %36 = sbr.rel (0) target = $region37
  $region36: #{seq2seq_flow_predictor.1} parent=0 // pred_region
    _
  $region37: #{seq2seq_flow_predictor.1} parent=0 // pred_fallthru
    _
  // Predicated region
  $region38: #{seq2seq_flow_predictor.1} parent=0 // pred_check
    _
  $region39: #{seq2seq_flow_predictor.1} parent=0 // pred_check_branch
    %38 = sbr.rel (0) target = $region41
  $region40: #{seq2seq_flow_predictor.1} parent=0 // pred_region
    _
  $region41: #{seq2seq_flow_predictor.1} parent=0 // pred_fallthru
    _
  // Predicated region
  $region42: #{seq2seq_flow_predictor.1} parent=0 // pred_check
    _
  $region43: #{seq2seq_flow_predictor.1} parent=0 // pred_check_branch
    %40 = sbr.rel (0) target = $region45
  $region44: #{seq2seq_flow_predictor.1} parent=0 // pred_region
    _
  $region45: #{seq2seq_flow_predictor.1} parent=0 // pred_fallthru
    _
  // Predicated region
  $region46: #{seq2seq_flow_predictor.1} parent=0 // pred_check
    _
  $region47: #{seq2seq_flow_predictor.1} parent=0 // pred_check_branch
    %42 = sbr.rel (0) target = $region49
  $region48: #{seq2seq_flow_predictor.1} parent=0 // pred_region
    _
  $region49: #{seq2seq_flow_predictor.1} parent=0 // pred_fallthru
    _
  %v43 = vld [vmem:[%s0] sm:$0xff]
  %v44 = vld [vmem:[%s0 + $0x8] sm:$0xff]
  %v45 = vld [vmem:[%s0 + $0x10] sm:$0xff]
  %v46 = vld [vmem:[%s0 + $0x18] sm:$0xff]
  %v47 = vld [vmem:[%s0 + $0x20] sm:$0xff]
  %v48 = vld [vmem:[%s0 + $0x28] sm:$0xff]
  %v49 = vld [vmem:[%s0 + $0x30] sm:$0xff]
  %v50 = vld [vmem:[%s0 + $0x38] sm:$0xff]
  %v51 = vld [vmem:[%s3] sm:$0x1]
  %53 = vset.pattern.permute.xlu0 0
  %54 = vperm.xlu0 %53, %v43
  %v55 = vpop.permute.xlu0 %54
  %58 = vset.pattern.permute.xlu0 0
  %59 = vperm.xlu0 %58, %v44
  %v60 = vpop.permute.xlu0 %59
  %63 = vset.pattern.permute.xlu0 0
  %64 = vperm.xlu0 %63, %v45
  %v65 = vpop.permute.xlu0 %64
  %68 = vset.pattern.permute.xlu0 0
  %69 = vperm.xlu0 %68, %v46
  %v70 = vpop.permute.xlu0 %69
  %73 = vset.pattern.permute.xlu0 0
  %74 = vperm.xlu0 %73, %v47
  %v75 = vpop.permute.xlu0 %74
  %78 = vset.pattern.permute.xlu0 0
  %79 = vperm.xlu0 %78, %v48
  %v80 = vpop.permute.xlu0 %79
  %83 = vset.pattern.permute.xlu0 0
  %84 = vperm.xlu0 %83, %v49
  %v85 = vpop.permute.xlu0 %84
  %88 = vset.pattern.permute.xlu0 0
  %89 = vperm.xlu0 %88, %v50
  %v90 = vpop.permute.xlu0 %89
  %v93 = vlaneseq
  %v94 = vshrl.u32 %v93, 7
  %v95 = vsub.s32 0, %v94
  %v96 = vrot.slane %v51, %v95
  %v98 = vmul.f32 %v55, %v96
  %v99 = vmul.f32 %v60, %v96
  %v100 = vmul.f32 %v65, %v96
  %v101 = vmul.f32 %v70, %v96
  %v102 = vmul.f32 %v75, %v96
  %v103 = vmul.f32 %v80, %v96
  %v104 = vmul.f32 %v85, %v96
  %v105 = vmul.f32 %v90, %v96
  %v106 = vld [vmem:[%s4] sm:$0x1]
  %v108 = vlaneseq
  %v109 = vshrl.u32 %v108, 7
  %v110 = vsub.s32 0, %v109
  %v111 = vrot.slane %v106, %v110
  %v113 = vadd.f32 %v98, %v111
  %v114 = vadd.f32 %v99, %v111
  %v115 = vadd.f32 %v100, %v111
  %v116 = vadd.f32 %v101, %v111
  %v117 = vadd.f32 %v102, %v111
  %v118 = vadd.f32 %v103, %v111
  %v119 = vadd.f32 %v104, %v111
  %v120 = vadd.f32 %v105, %v111
  %v121 = vtanh.pop %v113
  %v122 = vtanh.pop %v114
  %v123 = vtanh.pop %v115
  %v124 = vtanh.pop %v116
  %v125 = vtanh.pop %v117
  %v126 = vtanh.pop %v118
  %v127 = vtanh.pop %v119
  %v128 = vtanh.pop %v120
  %v129 = vld [vmem:[%s1] sm:$0xff]
  %v130 = vld [vmem:[%s5] sm:$0xff]
  %v131 = vld [vmem:[%s5 + $0x8] sm:$0xff]
  %v132 = vld [vmem:[%s5 + $0x10] sm:$0xff]
  %v133 = vld [vmem:[%s5 + $0x18] sm:$0xff]
  %v134 = vld [vmem:[%s6] sm:$0x1]
  %v136 = vlaneseq
  %v137 = vshrl.u32 %v136, 7
  %v138 = vsub.s32 0, %v137
  %v139 = vrot.slane %v134, %v138
  %vm141 = vcmask 261120
  %v143 = vsel %vm141, %v129, 0
  %145 = vmatprep.subr.mxu0 0.0
  %146 = vmatpush1.msra.mxu0 0.0
  %147 = vmatprep.subr.mxu0 0.0
  %148 = vmatpush1.msra.mxu0 0.0
  %149 = vmatprep.subr.mxu0 0.0
  %150 = vmatpush1.msra.mxu0 0.0
  %151 = vmatprep.subr.mxu0 0.0
  %152 = vmatpush1.msra.mxu0 0.0
  %153 = vmatprep.subr.mxu0 0.0
  %154 = vmatpush1.msra.mxu0 0.0
  %155 = vmatprep.subr.mxu0 0.0
  %156 = vmatpush1.msra.mxu0 0.0
  %157 = vmatprep.subr.mxu0 0.0
  %158 = vmatpush1.msra.mxu0 0.0
  %159 = vmatprep.subr.mxu0 0.0
  %160 = vmatpush1.msra.mxu0 0.0
  %161 = vmatprep.subr.mxu0 0.0
  %162 = vmatpush1.msra.mxu0 0.0
  %163 = vmatprep.subr.mxu0 0.0
  %164 = vmatpush1.msra.mxu0 0.0
  %165 = vmatprep.subr.mxu0 0.0
  %166 = vmatpush1.msra.mxu0 0.0
  %167 = vmatprep.subr.mxu0 0.0
  %168 = vmatpush1.msra.mxu0 0.0
  %169 = vmatprep.subr.mxu0 0.0
  %170 = vmatpush1.msra.mxu0 %v133
  %171 = vmatprep.subr.mxu0 0.0
  %172 = vmatpush1.msra.mxu0 %v132
  %173 = vmatprep.subr.mxu0 0.0
  %174 = vmatpush1.msra.mxu0 %v131
  %175 = vmatprep.subr.mxu0 0.0
  %176 = vmatpush1.msra.mxu0 %v130
  %177 = vmatprep.subr.mxu0 0.0
  %178 = vmatpush2.msra.mxu0 0.0
  %179 = vmatprep.subr.mxu0 0.0
  %180 = vmatpush2.msra.mxu0 0.0
  %181 = vmatprep.subr.mxu0 0.0
  %182 = vmatpush2.msra.mxu0 0.0
  %183 = vmatprep.subr.mxu0 0.0
  %184 = vmatpush2.msra.mxu0 0.0
  %185 = vmatprep.subr.mxu0 0.0
  %186 = vmatpush2.msra.mxu0 0.0
  %187 = vmatprep.subr.mxu0 0.0
  %188 = vmatpush2.msra.mxu0 0.0
  %189 = vmatprep.subr.mxu0 0.0
  %190 = vmatpush2.msra.mxu0 0.0
  %191 = vmatprep.subr.mxu0 0.0
  %192 = vmatpush2.msra.mxu0 0.0
  %193 = vmatprep.subr.mxu0 0.0
  %194 = vmatpush2.msra.mxu0 0.0
  %195 = vmatprep.subr.mxu0 0.0
  %196 = vmatpush2.msra.mxu0 0.0
  %197 = vmatprep.subr.mxu0 0.0
  %198 = vmatpush2.msra.mxu0 0.0
  %199 = vmatprep.subr.mxu0 0.0
  %200 = vmatpush2.msra.mxu0 0.0
  %201 = vmatprep.subr.mxu0 0.0
  %202 = vmatpush2.msra.mxu0 0.0
  %203 = vmatprep.subr.mxu0 0.0
  %204 = vmatpush2.msra.mxu0 0.0
  %205 = vmatprep.subr.mxu0 0.0
  %206 = vmatpush2.msra.mxu0 0.0
  %207 = vmatprep.subr.mxu0 0.0
  %208 = vmatpush2.msra.mxu0 0.0
  %209 = vmatprep.mubr.f32.mxu0 0.0
  %210 = vmatmul.mubr.f32.gmra.mxu0 %v143
  %v211 = vpop.f32.mrf.mxu0
  %v212 = vadd.f32 %v139, %v211
  %v213 = vpop.f32.mrf.mxu0
  %214 = vdwg.mxu0
  %v215 = vtanh.pop %v212
  %v216 = vld [vmem:[%s2] sm:$0xff]
  %v217 = vld [vmem:[%s2 + $0x8] sm:$0xff]
  %v218 = vld [vmem:[%s2 + $0x10] sm:$0xff]
  %v219 = vld [vmem:[%s2 + $0x18] sm:$0xff]
  %v220 = vld [vmem:[%s2 + $0x20] sm:$0xff]
  %v221 = vld [vmem:[%s2 + $0x28] sm:$0xff]
  %v222 = vld [vmem:[%s2 + $0x30] sm:$0xff]
  %v223 = vld [vmem:[%s2 + $0x38] sm:$0xff]
  %v224 = vtanh.pop %v216
  %v225 = vtanh.pop %v217
  %v226 = vtanh.pop %v218
  %v227 = vtanh.pop %v219
  %v228 = vtanh.pop %v220
  %v229 = vtanh.pop %v221
  %v230 = vtanh.pop %v222
  %v231 = vtanh.pop %v223
  %233 = vrot.lane.b32.xlu0 %v215, 16
  %v234 = vpop.permute.xlu0 %233
  %244 = vrot.lane.b32.xlu0 %v224, 32
  %v245 = vpop.permute.xlu0 %244
  %246 = vrot.lane.b32.xlu0 %v225, 32
  %v247 = vpop.permute.xlu0 %246
  %248 = vrot.lane.b32.xlu0 %v226, 32
  %v249 = vpop.permute.xlu0 %248
  %250 = vrot.lane.b32.xlu0 %v227, 32
  %v251 = vpop.permute.xlu0 %250
  %252 = vrot.lane.b32.xlu0 %v228, 32
  %v253 = vpop.permute.xlu0 %252
  %254 = vrot.lane.b32.xlu0 %v229, 32
  %v255 = vpop.permute.xlu0 %254
  %256 = vrot.lane.b32.xlu0 %v230, 32
  %v257 = vpop.permute.xlu0 %256
  %258 = vrot.lane.b32.xlu0 %v231, 32
  %v259 = vpop.permute.xlu0 %258
  %vm268 = vcmask 130048
  %v269 = vsel %vm268, %v121, %v234
  %v270 = vsel %vm268, %v122, %v234
  %v271 = vsel %vm268, %v123, %v234
  %v272 = vsel %vm268, %v124, %v234
  %v273 = vsel %vm268, %v125, %v234
  %v274 = vsel %vm268, %v126, %v234
  %v275 = vsel %vm268, %v127, %v234
  %v276 = vsel %vm268, %v128, %v234
  %v277 = vsel %vm141, %v269, %v245
  %v278 = vsel %vm141, %v270, %v247
  %v279 = vsel %vm141, %v271, %v249
  %v280 = vsel %vm141, %v272, %v251
  %v281 = vsel %vm141, %v273, %v253
  %v282 = vsel %vm141, %v274, %v255
  %v283 = vsel %vm141, %v275, %v257
  %v284 = vsel %vm141, %v276, %v259
  %v285 = vld [vmem:[%s7 + $0x50] sm:$0xff]
  %v286 = vld [vmem:[%s7 + $0x58] sm:$0xff]
  %v287 = vld [vmem:[%s7 + $0x60] sm:$0xff]
  %v288 = vld [vmem:[%s7 + $0x68] sm:$0xff]
  %v289 = vld [vmem:[%s7 + $0x70] sm:$0xff]
  %v290 = vld [vmem:[%s7 + $0x78] sm:$0xff]
  %v291 = vld [vmem:[%s9 + $0x2] sm:$0x1]
  %v292 = vlaneseq
  %v293 = vshrl.u32 %v292, 7
  %v294 = vsub.s32 0, %v293
  %v295 = vrot.slane %v291, %v294
  %vm296 = vcmask 392192
  %v298 = vsel %vm296, %v284, 0
  %300 = vmatprep.subr.mxu0 0.0
  %301 = vmatpush1.msra.mxu0 0.0
  %302 = vmatprep.subr.mxu0 0.0
  %303 = vmatpush1.msra.mxu0 0.0
  %304 = vmatprep.subr.mxu0 0.0
  %305 = vmatpush1.msra.mxu0 0.0
  %306 = vmatprep.subr.mxu0 0.0
  %307 = vmatpush1.msra.mxu0 0.0
  %308 = vmatprep.subr.mxu0 0.0
  %309 = vmatpush1.msra.mxu0 0.0
  %310 = vmatprep.subr.mxu0 0.0
  %311 = vmatpush1.msra.mxu0 0.0
  %312 = vmatprep.subr.mxu0 0.0
  %313 = vmatpush1.msra.mxu0 0.0
  %314 = vmatprep.subr.mxu0 0.0
  %315 = vmatpush1.msra.mxu0 0.0
  %316 = vmatprep.subr.mxu0 0.0
  %317 = vmatpush1.msra.mxu0 0.0
  %318 = vmatprep.subr.mxu0 0.0
  %319 = vmatpush1.msra.mxu0 0.0
  %320 = vmatprep.subr.mxu0 0.0
  %321 = vmatpush1.msra.mxu0 %v290
  %322 = vmatprep.subr.mxu0 0.0
  %323 = vmatpush1.msra.mxu0 %v289
  %324 = vmatprep.subr.mxu0 0.0
  %325 = vmatpush1.msra.mxu0 %v288
  %326 = vmatprep.subr.mxu0 0.0
  %327 = vmatpush1.msra.mxu0 %v287
  %328 = vmatprep.subr.mxu0 0.0
  %329 = vmatpush1.msra.mxu0 %v286
  %330 = vmatprep.subr.mxu0 0.0
  %331 = vmatpush1.msra.mxu0 %v285
  %332 = vmatprep.subr.mxu0 0.0
  %333 = vmatpush2.msra.mxu0 0.0
  %334 = vmatprep.subr.mxu0 0.0
  %335 = vmatpush2.msra.mxu0 0.0
  %336 = vmatprep.subr.mxu0 0.0
  %337 = vmatpush2.msra.mxu0 0.0
  %338 = vmatprep.subr.mxu0 0.0
  %339 = vmatpush2.msra.mxu0 0.0
  %340 = vmatprep.subr.mxu0 0.0
  %341 = vmatpush2.msra.mxu0 0.0
  %342 = vmatprep.subr.mxu0 0.0
  %343 = vmatpush2.msra.mxu0 0.0
  %344 = vmatprep.subr.mxu0 0.0
  %345 = vmatpush2.msra.mxu0 0.0
  %346 = vmatprep.subr.mxu0 0.0
  %347 = vmatpush2.msra.mxu0 0.0
  %348 = vmatprep.subr.mxu0 0.0
  %349 = vmatpush2.msra.mxu0 0.0
  %350 = vmatprep.subr.mxu0 0.0
  %351 = vmatpush2.msra.mxu0 0.0
  %352 = vmatprep.subr.mxu0 0.0
  %353 = vmatpush2.msra.mxu0 0.0
  %354 = vmatprep.subr.mxu0 0.0
  %355 = vmatpush2.msra.mxu0 0.0
  %356 = vmatprep.subr.mxu0 0.0
  %357 = vmatpush2.msra.mxu0 0.0
  %358 = vmatprep.subr.mxu0 0.0
  %359 = vmatpush2.msra.mxu0 0.0
  %360 = vmatprep.subr.mxu0 0.0
  %361 = vmatpush2.msra.mxu0 0.0
  %362 = vmatprep.subr.mxu0 0.0
  %363 = vmatpush2.msra.mxu0 0.0
  %364 = vmatprep.mubr.f32.mxu0 0.0
  %365 = vmatmul.mubr.f32.gmra.mxu0 %v298
  %v366 = vpop.f32.mrf.mxu0
  %v367 = vadd.f32 %v295, %v366
  %v368 = vpop.f32.mrf.mxu0
  %369 = vdwg.mxu0
  %v370 = vld [vmem:[%s7] sm:$0xff]
  %v371 = vld [vmem:[%s7 + $0x8] sm:$0xff]
  %v372 = vld [vmem:[%s7 + $0x10] sm:$0xff]
  %v373 = vld [vmem:[%s7 + $0x18] sm:$0xff]
  %v374 = vld [vmem:[%s7 + $0x20] sm:$0xff]
  %v375 = vld [vmem:[%s7 + $0x28] sm:$0xff]
  %v376 = vld [vmem:[%s8] sm:$0xff]
  %v377 = vld [vmem:[%s8 + $0x8] sm:$0xff]
  %v378 = vld [vmem:[%s8 + $0x10] sm:$0xff]
  %v379 = vld [vmem:[%s8 + $0x18] sm:$0xff]
  %v380 = vld [vmem:[%s9] sm:$0x1]
  %v381 = vlaneseq
  %v382 = vshrl.u32 %v381, 7
  %v383 = vsub.s32 0, %v382
  %v384 = vrot.slane %v380, %v383
  %v386 = vsel %vm296, %v277, 0
  %v389 = vsel %vm296, %v278, 0
  %v392 = vsel %vm296, %v279, 0
  %v395 = vsel %vm296, %v280, 0
  %v398 = vsel %vm296, %v281, 0
  %v401 = vsel %vm296, %v282, 0
  %v404 = vsel %vm296, %v283, 0
  %406 = vmatprep.subr.mxu0 0.0
  %407 = vmatpush1.msra.mxu0 0.0
  %408 = vmatprep.subr.mxu0 0.0
  %409 = vmatpush1.msra.mxu0 0.0
  %410 = vmatprep.subr.mxu0 0.0
  %411 = vmatpush1.msra.mxu0 0.0
  %412 = vmatprep.subr.mxu0 0.0
  %413 = vmatpush1.msra.mxu0 0.0
  %414 = vmatprep.subr.mxu0 0.0
  %415 = vmatpush1.msra.mxu0 0.0
  %416 = vmatprep.subr.mxu0 0.0
  %417 = vmatpush1.msra.mxu0 0.0
  %418 = vmatprep.subr.mxu0 0.0
  %419 = vmatpush1.msra.mxu0 0.0
  %420 = vmatprep.subr.mxu0 0.0
  %421 = vmatpush1.msra.mxu0 0.0
  %422 = vmatprep.subr.mxu0 0.0
  %423 = vmatpush1.msra.mxu0 0.0
  %424 = vmatprep.subr.mxu0 0.0
  %425 = vmatpush1.msra.mxu0 0.0
  %426 = vmatprep.subr.mxu0 0.0
  %427 = vmatpush1.msra.mxu0 %v375
  %428 = vmatprep.subr.mxu0 0.0
  %429 = vmatpush1.msra.mxu0 %v374
  %430 = vmatprep.subr.mxu0 0.0
  %431 = vmatpush1.msra.mxu0 %v373
  %432 = vmatprep.subr.mxu0 0.0
  %433 = vmatpush1.msra.mxu0 %v372
  %434 = vmatprep.subr.mxu0 0.0
  %435 = vmatpush1.msra.mxu0 %v371
  %436 = vmatprep.subr.mxu0 0.0
  %437 = vmatpush1.msra.mxu0 %v370
  %438 = vmatprep.subr.mxu0 0.0
  %439 = vmatpush2.msra.mxu0 0.0
  %440 = vmatprep.subr.mxu0 0.0
  %441 = vmatpush2.msra.mxu0 0.0
  %442 = vmatprep.subr.mxu0 0.0
  %443 = vmatpush2.msra.mxu0 0.0
  %444 = vmatprep.subr.mxu0 0.0
  %445 = vmatpush2.msra.mxu0 0.0
  %446 = vmatprep.subr.mxu0 0.0
  %447 = vmatpush2.msra.mxu0 0.0
  %448 = vmatprep.subr.mxu0 0.0
  %449 = vmatpush2.msra.mxu0 0.0
  %450 = vmatprep.subr.mxu0 0.0
  %451 = vmatpush2.msra.mxu0 0.0
  %452 = vmatprep.subr.mxu0 0.0
  %453 = vmatpush2.msra.mxu0 0.0
  %454 = vmatprep.subr.mxu0 0.0
  %455 = vmatpush2.msra.mxu0 0.0
  %456 = vmatprep.subr.mxu0 0.0
  %457 = vmatpush2.msra.mxu0 0.0
  %458 = vmatprep.subr.mxu0 0.0
  %459 = vmatpush2.msra.mxu0 0.0
  %460 = vmatprep.subr.mxu0 0.0
  %461 = vmatpush2.msra.mxu0 0.0
  %462 = vmatprep.subr.mxu0 0.0
  %463 = vmatpush2.msra.mxu0 0.0
  %464 = vmatprep.subr.mxu0 0.0
  %465 = vmatpush2.msra.mxu0 0.0
  %466 = vmatprep.subr.mxu0 0.0
  %467 = vmatpush2.msra.mxu0 0.0
  %468 = vmatprep.subr.mxu0 0.0
  %469 = vmatpush2.msra.mxu0 0.0
  %470 = vmatprep.mubr.f32.mxu0 0.0
  %471 = vmatmul.mubr.f32.gmra.mxu0 %v386
  %v472 = vpop.f32.mrf.mxu0
  %v473 = vadd.f32 %v384, %v472
  %v474 = vpop.f32.mrf.mxu0
  %475 = vmatprep.mubr.f32.mxu0 0.0
  %476 = vmatmul.mubr.f32.gmra.mxu0 %v389
  %v477 = vpop.f32.mrf.mxu0
  %v478 = vadd.f32 %v384, %v477
  %v479 = vpop.f32.mrf.mxu0
  %480 = vmatprep.mubr.f32.mxu0 0.0
  %481 = vmatmul.mubr.f32.gmra.mxu0 %v392
  %v482 = vpop.f32.mrf.mxu0
  %v483 = vadd.f32 %v384, %v482
  %v484 = vpop.f32.mrf.mxu0
  %485 = vmatprep.mubr.f32.mxu0 0.0
  %486 = vmatmul.mubr.f32.gmra.mxu0 %v395
  %v487 = vpop.f32.mrf.mxu0
  %v488 = vadd.f32 %v384, %v487
  %v489 = vpop.f32.mrf.mxu0
  %490 = vmatprep.mubr.f32.mxu0 0.0
  %491 = vmatmul.mubr.f32.gmra.mxu0 %v398
  %v492 = vpop.f32.mrf.mxu0
  %v493 = vadd.f32 %v384, %v492
  %v494 = vpop.f32.mrf.mxu0
  %495 = vmatprep.mubr.f32.mxu0 0.0
  %496 = vmatmul.mubr.f32.gmra.mxu0 %v401
  %v497 = vpop.f32.mrf.mxu0
  %v498 = vadd.f32 %v384, %v497
  %v499 = vpop.f32.mrf.mxu0
  %500 = vmatprep.mubr.f32.mxu0 0.0
  %501 = vmatmul.mubr.f32.gmra.mxu0 %v404
  %v502 = vpop.f32.mrf.mxu0
  %v503 = vadd.f32 %v384, %v502
  %v504 = vpop.f32.mrf.mxu0
  %505 = vmatprep.mubr.f32.mxu0 0.0
  %506 = vmatmul.mubr.f32.gmra.mxu0 %v298
  %v507 = vpop.f32.mrf.mxu0
  %v508 = vadd.f32 %v384, %v507
  %v509 = vpop.f32.mrf.mxu0
  %510 = vdwg.mxu0
  %vm511 = vcmask 785408
  %512 = vst.msk [vmem:[#allocation2] sm:$0xff] %vm511, %v473
  %513 = vst.msk [vmem:[#allocation2 + $0x8] sm:$0xff] %vm511, %v478
  %514 = vst.msk [vmem:[#allocation2 + $0x10] sm:$0xff] %vm511, %v483
  %515 = vst.msk [vmem:[#allocation2 + $0x18] sm:$0xff] %vm511, %v488
  %516 = vst.msk [vmem:[#allocation2 + $0x20] sm:$0xff] %vm511, %v493
  %517 = vst.msk [vmem:[#allocation2 + $0x28] sm:$0xff] %vm511, %v498
  %518 = vst.msk [vmem:[#allocation2 + $0x30] sm:$0xff] %vm511, %v503
  %519 = vst.msk [vmem:[#allocation2 + $0x38] sm:$0xff] %vm511, %v508
  %v520 = vld [vmem:[#allocation2] sm:$0xff]
  %v522 = vsel %vm141, 0.0, 0
  %524 = vmatprep.subr.mxu0 0.0
  %525 = vmatpush1.msra.mxu0 0.0
  %526 = vmatprep.subr.mxu0 0.0
  %527 = vmatpush1.msra.mxu0 0.0
  %528 = vmatprep.subr.mxu0 0.0
  %529 = vmatpush1.msra.mxu0 0.0
  %530 = vmatprep.subr.mxu0 0.0
  %531 = vmatpush1.msra.mxu0 0.0
  %532 = vmatprep.subr.mxu0 0.0
  %533 = vmatpush1.msra.mxu0 0.0
  %534 = vmatprep.subr.mxu0 0.0
  %535 = vmatpush1.msra.mxu0 0.0
  %536 = vmatprep.subr.mxu0 0.0
  %537 = vmatpush1.msra.mxu0 0.0
  %538 = vmatprep.subr.mxu0 0.0
  %539 = vmatpush1.msra.mxu0 0.0
  %540 = vmatprep.subr.mxu0 0.0
  %541 = vmatpush1.msra.mxu0 0.0
  %542 = vmatprep.subr.mxu0 0.0
  %543 = vmatpush1.msra.mxu0 0.0
  %544 = vmatprep.subr.mxu0 0.0
  %545 = vmatpush1.msra.mxu0 0.0
  %546 = vmatprep.subr.mxu0 0.0
  %547 = vmatpush1.msra.mxu0 0.0
  %548 = vmatprep.subr.mxu0 0.0
  %549 = vmatpush1.msra.mxu0 %v379
  %550 = vmatprep.subr.mxu0 0.0
  %551 = vmatpush1.msra.mxu0 %v378
  %552 = vmatprep.subr.mxu0 0.0
  %553 = vmatpush1.msra.mxu0 %v377
  %554 = vmatprep.subr.mxu0 0.0
  %555 = vmatpush1.msra.mxu0 %v376
  %556 = vmatprep.subr.mxu0 0.0
  %557 = vmatpush2.msra.mxu0 0.0
  %558 = vmatprep.subr.mxu0 0.0
  %559 = vmatpush2.msra.mxu0 0.0
  %560 = vmatprep.subr.mxu0 0.0
  %561 = vmatpush2.msra.mxu0 0.0
  %562 = vmatprep.subr.mxu0 0.0
  %563 = vmatpush2.msra.mxu0 0.0
  %564 = vmatprep.subr.mxu0 0.0
  %565 = vmatpush2.msra.mxu0 0.0
  %566 = vmatprep.subr.mxu0 0.0
  %567 = vmatpush2.msra.mxu0 0.0
  %568 = vmatprep.subr.mxu0 0.0
  %569 = vmatpush2.msra.mxu0 0.0
  %570 = vmatprep.subr.mxu0 0.0
  %571 = vmatpush2.msra.mxu0 0.0
  %572 = vmatprep.subr.mxu0 0.0
  %573 = vmatpush2.msra.mxu0 0.0
  %574 = vmatprep.subr.mxu0 0.0
  %575 = vmatpush2.msra.mxu0 0.0
  %576 = vmatprep.subr.mxu0 0.0
  %577 = vmatpush2.msra.mxu0 0.0
  %578 = vmatprep.subr.mxu0 0.0
  %579 = vmatpush2.msra.mxu0 0.0
  %580 = vmatprep.subr.mxu0 0.0
  %581 = vmatpush2.msra.mxu0 0.0
  %582 = vmatprep.subr.mxu0 0.0
  %583 = vmatpush2.msra.mxu0 0.0
  %584 = vmatprep.subr.mxu0 0.0
  %585 = vmatpush2.msra.mxu0 0.0
  %586 = vmatprep.subr.mxu0 0.0
  %587 = vmatpush2.msra.mxu0 0.0
  %588 = vmatprep.mubr.f32.mxu0 0.0
  %589 = vmatmul.mubr.f32.gmra.mxu0 %v522
  %v590 = vpop.f32.mrf.mxu0
  %v591 = vadd.f32 0.0, %v590
  %v592 = vpop.f32.mrf.mxu0
  %593 = vdwg.mxu0
  %v594 = vadd.f32 %v520, %v591
  %v595 = vxor.u32 %v594, 2147483648
  %v596 = vmul.f32 %v595, 1.442695
  %v597 = vpow.pop %v596
  %v598 = vadd.f32 %v597, 1.0
  %v599 = vrcp.pop %v598
  %v600 = vmul.f32 1.0, %v599
  %602 = vrot.lane.b32.xlu0 %v384, 96
  %v603 = vpop.permute.xlu0 %602
  %v605 = vadd.f32 %v591, %v603
  %607 = vrot.lane.b32.xlu0 %v605, 64
  %v608 = vpop.permute.xlu0 %607
  %v610 = vmul.f32 %v600, %v608
  %612 = vrot.lane.b32.xlu0 %v610, 64
  %v613 = vpop.permute.xlu0 %612
  %v615 = vadd.f32 %v520, %v613
  %v616 = vtanh.pop %v615
  %v617 = vsub.f32 1.0, %v600
  %619 = vrot.lane.b32.xlu0 %v616, 96
  %v620 = vpop.permute.xlu0 %619
  %v622 = vmul.f32 %v617, %v620
  %v623 = vmul.f32 %v600, 0.0
  %v624 = vadd.f32 %v622, %v623
  %626 = vrot.lane.b32.xlu0 %v624, 96
  %v627 = vpop.permute.xlu0 %626
  %629 = vst.msk [vmem:[#allocation3] sm:$0xff] %vm141, %v627
  %v630 = vld [vmem:[#allocation2 + $0x8] sm:$0xff]
  %v631 = vsel %vm141, %v627, 0
  %633 = vmatprep.subr.mxu0 0.0
  %634 = vmatpush1.msra.mxu0 0.0
  %635 = vmatprep.subr.mxu0 0.0
  %636 = vmatpush1.msra.mxu0 0.0
  %637 = vmatprep.subr.mxu0 0.0
  %638 = vmatpush1.msra.mxu0 0.0
  %639 = vmatprep.subr.mxu0 0.0
  %640 = vmatpush1.msra.mxu0 0.0
  %641 = vmatprep.subr.mxu0 0.0
  %642 = vmatpush1.msra.mxu0 0.0
  %643 = vmatprep.subr.mxu0 0.0
  %644 = vmatpush1.msra.mxu0 0.0
  %645 = vmatprep.subr.mxu0 0.0
  %646 = vmatpush1.msra.mxu0 0.0
  %647 = vmatprep.subr.mxu0 0.0
  %648 = vmatpush1.msra.mxu0 0.0
  %649 = vmatprep.subr.mxu0 0.0
  %650 = vmatpush1.msra.mxu0 0.0
  %651 = vmatprep.subr.mxu0 0.0
  %652 = vmatpush1.msra.mxu0 0.0
  %653 = vmatprep.subr.mxu0 0.0
  %654 = vmatpush1.msra.mxu0 0.0
  %655 = vmatprep.subr.mxu0 0.0
  %656 = vmatpush1.msra.mxu0 0.0
  %657 = vmatprep.subr.mxu0 0.0
  %658 = vmatpush1.msra.mxu0 %v379
  %659 = vmatprep.subr.mxu0 0.0
  %660 = vmatpush1.msra.mxu0 %v378
  %661 = vmatprep.subr.mxu0 0.0
  %662 = vmatpush1.msra.mxu0 %v377
  %663 = vmatprep.subr.mxu0 0.0
  %664 = vmatpush1.msra.mxu0 %v376
  %665 = vmatprep.subr.mxu0 0.0
  %666 = vmatpush2.msra.mxu0 0.0
  %667 = vmatprep.subr.mxu0 0.0
  %668 = vmatpush2.msra.mxu0 0.0
  %669 = vmatprep.subr.mxu0 0.0
  %670 = vmatpush2.msra.mxu0 0.0
  %671 = vmatprep.subr.mxu0 0.0
  %672 = vmatpush2.msra.mxu0 0.0
  %673 = vmatprep.subr.mxu0 0.0
  %674 = vmatpush2.msra.mxu0 0.0
  %675 = vmatprep.subr.mxu0 0.0
  %676 = vmatpush2.msra.mxu0 0.0
  %677 = vmatprep.subr.mxu0 0.0
  %678 = vmatpush2.msra.mxu0 0.0
  %679 = vmatprep.subr.mxu0 0.0
  %680 = vmatpush2.msra.mxu0 0.0
  %681 = vmatprep.subr.mxu0 0.0
  %682 = vmatpush2.msra.mxu0 0.0
  %683 = vmatprep.subr.mxu0 0.0
  %684 = vmatpush2.msra.mxu0 0.0
  %685 = vmatprep.subr.mxu0 0.0
  %686 = vmatpush2.msra.mxu0 0.0
  %687 = vmatprep.subr.mxu0 0.0
  %688 = vmatpush2.msra.mxu0 0.0
  %689 = vmatprep.subr.mxu0 0.0
  %690 = vmatpush2.msra.mxu0 0.0
  %691 = vmatprep.subr.mxu0 0.0
  %692 = vmatpush2.msra.mxu0 0.0
  %693 = vmatprep.subr.mxu0 0.0
  %694 = vmatpush2.msra.mxu0 0.0
  %695 = vmatprep.subr.mxu0 0.0
  %696 = vmatpush2.msra.mxu0 0.0
  %697 = vmatprep.mubr.f32.mxu0 0.0
  %698 = vmatmul.mubr.f32.gmra.mxu0 %v631
  %v699 = vpop.f32.mrf.mxu0
  %v700 = vadd.f32 0.0, %v699
  %v701 = vpop.f32.mrf.mxu0
  %702 = vdwg.mxu0
  %v703 = vadd.f32 %v630, %v700
  %v704 = vxor.u32 %v703, 2147483648
  %v705 = vmul.f32 %v704, 1.442695
  %v706 = vpow.pop %v705
  %v707 = vadd.f32 %v706, 1.0
  %v708 = vrcp.pop %v707
  %v709 = vmul.f32 1.0, %v708
  %v710 = vadd.f32 %v700, %v603
  %712 = vrot.lane.b32.xlu0 %v710, 64
  %v713 = vpop.permute.xlu0 %712
  %v715 = vmul.f32 %v709, %v713
  %717 = vrot.lane.b32.xlu0 %v715, 64
  %v718 = vpop.permute.xlu0 %717
  %v720 = vadd.f32 %v630, %v718
  %v721 = vtanh.pop %v720
  %v722 = vsub.f32 1.0, %v709
  %724 = vrot.lane.b32.xlu0 %v721, 96
  %v725 = vpop.permute.xlu0 %724
  %v727 = vmul.f32 %v722, %v725
  %v728 = vmul.f32 %v709, %v624
  %v729 = vadd.f32 %v727, %v728
  %731 = vrot.lane.b32.xlu0 %v729, 96
  %v732 = vpop.permute.xlu0 %731
  %734 = vst.msk [vmem:[#allocation3 + $0x8] sm:$0xff] %vm141, %v732
  %v735 = vld [vmem:[#allocation2 + $0x10] sm:$0xff]
  %v736 = vsel %vm141, %v732, 0
  %738 = vmatprep.subr.mxu0 0.0
  %739 = vmatpush1.msra.mxu0 0.0
  %740 = vmatprep.subr.mxu0 0.0
  %741 = vmatpush1.msra.mxu0 0.0
  %742 = vmatprep.subr.mxu0 0.0
  %743 = vmatpush1.msra.mxu0 0.0
  %744 = vmatprep.subr.mxu0 0.0
  %745 = vmatpush1.msra.mxu0 0.0
  %746 = vmatprep.subr.mxu0 0.0
  %747 = vmatpush1.msra.mxu0 0.0
  %748 = vmatprep.subr.mxu0 0.0
  %749 = vmatpush1.msra.mxu0 0.0
  %750 = vmatprep.subr.mxu0 0.0
  %751 = vmatpush1.msra.mxu0 0.0
  %752 = vmatprep.subr.mxu0 0.0
  %753 = vmatpush1.msra.mxu0 0.0
  %754 = vmatprep.subr.mxu0 0.0
  %755 = vmatpush1.msra.mxu0 0.0
  %756 = vmatprep.subr.mxu0 0.0
  %757 = vmatpush1.msra.mxu0 0.0
  %758 = vmatprep.subr.mxu0 0.0
  %759 = vmatpush1.msra.mxu0 0.0
  %760 = vmatprep.subr.mxu0 0.0
  %761 = vmatpush1.msra.mxu0 0.0
  %762 = vmatprep.subr.mxu0 0.0
  %763 = vmatpush1.msra.mxu0 %v379
  %764 = vmatprep.subr.mxu0 0.0
  %765 = vmatpush1.msra.mxu0 %v378
  %766 = vmatprep.subr.mxu0 0.0
  %767 = vmatpush1.msra.mxu0 %v377
  %768 = vmatprep.subr.mxu0 0.0
  %769 = vmatpush1.msra.mxu0 %v376
  %770 = vmatprep.subr.mxu0 0.0
  %771 = vmatpush2.msra.mxu0 0.0
  %772 = vmatprep.subr.mxu0 0.0
  %773 = vmatpush2.msra.mxu0 0.0
  %774 = vmatprep.subr.mxu0 0.0
  %775 = vmatpush2.msra.mxu0 0.0
  %776 = vmatprep.subr.mxu0 0.0
  %777 = vmatpush2.msra.mxu0 0.0
  %778 = vmatprep.subr.mxu0 0.0
  %779 = vmatpush2.msra.mxu0 0.0
  %780 = vmatprep.subr.mxu0 0.0
  %781 = vmatpush2.msra.mxu0 0.0
  %782 = vmatprep.subr.mxu0 0.0
  %783 = vmatpush2.msra.mxu0 0.0
  %784 = vmatprep.subr.mxu0 0.0
  %785 = vmatpush2.msra.mxu0 0.0
  %786 = vmatprep.subr.mxu0 0.0
  %787 = vmatpush2.msra.mxu0 0.0
  %788 = vmatprep.subr.mxu0 0.0
  %789 = vmatpush2.msra.mxu0 0.0
  %790 = vmatprep.subr.mxu0 0.0
  %791 = vmatpush2.msra.mxu0 0.0
  %792 = vmatprep.subr.mxu0 0.0
  %793 = vmatpush2.msra.mxu0 0.0
  %794 = vmatprep.subr.mxu0 0.0
  %795 = vmatpush2.msra.mxu0 0.0
  %796 = vmatprep.subr.mxu0 0.0
  %797 = vmatpush2.msra.mxu0 0.0
  %798 = vmatprep.subr.mxu0 0.0
  %799 = vmatpush2.msra.mxu0 0.0
  %800 = vmatprep.subr.mxu0 0.0
  %801 = vmatpush2.msra.mxu0 0.0
  %802 = vmatprep.mubr.f32.mxu0 0.0
  %803 = vmatmul.mubr.f32.gmra.mxu0 %v736
  %v804 = vpop.f32.mrf.mxu0
  %v805 = vadd.f32 0.0, %v804
  %v806 = vpop.f32.mrf.mxu0
  %807 = vdwg.mxu0
  %v808 = vadd.f32 %v735, %v805
  %v809 = vxor.u32 %v808, 2147483648
  %v810 = vmul.f32 %v809, 1.442695
  %v811 = vpow.pop %v810
  %v812 = vadd.f32 %v811, 1.0
  %v813 = vrcp.pop %v812
  %v814 = vmul.f32 1.0, %v813
  %v815 = vadd.f32 %v805, %v603
  %817 = vrot.lane.b32.xlu0 %v815, 64
  %v818 = vpop.permute.xlu0 %817
  %v820 = vmul.f32 %v814, %v818
  %822 = vrot.lane.b32.xlu0 %v820, 64
  %v823 = vpop.permute.xlu0 %822
  %v825 = vadd.f32 %v735, %v823
  %v826 = vtanh.pop %v825
  %v827 = vsub.f32 1.0, %v814
  %829 = vrot.lane.b32.xlu0 %v826, 96
  %v830 = vpop.permute.xlu0 %829
  %v832 = vmul.f32 %v827, %v830
  %v833 = vmul.f32 %v814, %v729
  %v834 = vadd.f32 %v832, %v833
  %836 = vrot.lane.b32.xlu0 %v834, 96
  %v837 = vpop.permute.xlu0 %836
  %839 = vst.msk [vmem:[#allocation3 + $0x10] sm:$0xff] %vm141, %v837
  %v840 = vld [vmem:[#allocation2 + $0x18] sm:$0xff]
  %v841 = vsel %vm141, %v837, 0
  %843 = vmatprep.subr.mxu0 0.0
  %844 = vmatpush1.msra.mxu0 0.0
  %845 = vmatprep.subr.mxu0 0.0
  %846 = vmatpush1.msra.mxu0 0.0
  %847 = vmatprep.subr.mxu0 0.0
  %848 = vmatpush1.msra.mxu0 0.0
  %849 = vmatprep.subr.mxu0 0.0
  %850 = vmatpush1.msra.mxu0 0.0
  %851 = vmatprep.subr.mxu0 0.0
  %852 = vmatpush1.msra.mxu0 0.0
  %853 = vmatprep.subr.mxu0 0.0
  %854 = vmatpush1.msra.mxu0 0.0
  %855 = vmatprep.subr.mxu0 0.0
  %856 = vmatpush1.msra.mxu0 0.0
  %857 = vmatprep.subr.mxu0 0.0
  %858 = vmatpush1.msra.mxu0 0.0
  %859 = vmatprep.subr.mxu0 0.0
  %860 = vmatpush1.msra.mxu0 0.0
  %861 = vmatprep.subr.mxu0 0.0
  %862 = vmatpush1.msra.mxu0 0.0
  %863 = vmatprep.subr.mxu0 0.0
  %864 = vmatpush1.msra.mxu0 0.0
  %865 = vmatprep.subr.mxu0 0.0
  %866 = vmatpush1.msra.mxu0 0.0
  %867 = vmatprep.subr.mxu0 0.0
  %868 = vmatpush1.msra.mxu0 %v379
  %869 = vmatprep.subr.mxu0 0.0
  %870 = vmatpush1.msra.mxu0 %v378
  %871 = vmatprep.subr.mxu0 0.0
  %872 = vmatpush1.msra.mxu0 %v377
  %873 = vmatprep.subr.mxu0 0.0
  %874 = vmatpush1.msra.mxu0 %v376
  %875 = vmatprep.subr.mxu0 0.0
  %876 = vmatpush2.msra.mxu0 0.0
  %877 = vmatprep.subr.mxu0 0.0
  %878 = vmatpush2.msra.mxu0 0.0
  %879 = vmatprep.subr.mxu0 0.0
  %880 = vmatpush2.msra.mxu0 0.0
  %881 = vmatprep.subr.mxu0 0.0
  %882 = vmatpush2.msra.mxu0 0.0
  %883 = vmatprep.subr.mxu0 0.0
  %884 = vmatpush2.msra.mxu0 0.0
  %885 = vmatprep.subr.mxu0 0.0
  %886 = vmatpush2.msra.mxu0 0.0
  %887 = vmatprep.subr.mxu0 0.0
  %888 = vmatpush2.msra.mxu0 0.0
  %889 = vmatprep.subr.mxu0 0.0
  %890 = vmatpush2.msra.mxu0 0.0
  %891 = vmatprep.subr.mxu0 0.0
  %892 = vmatpush2.msra.mxu0 0.0
  %893 = vmatprep.subr.mxu0 0.0
  %894 = vmatpush2.msra.mxu0 0.0
  %895 = vmatprep.subr.mxu0 0.0
  %896 = vmatpush2.msra.mxu0 0.0
  %897 = vmatprep.subr.mxu0 0.0
  %898 = vmatpush2.msra.mxu0 0.0
  %899 = vmatprep.subr.mxu0 0.0
  %900 = vmatpush2.msra.mxu0 0.0
  %901 = vmatprep.subr.mxu0 0.0
  %902 = vmatpush2.msra.mxu0 0.0
  %903 = vmatprep.subr.mxu0 0.0
  %904 = vmatpush2.msra.mxu0 0.0
  %905 = vmatprep.subr.mxu0 0.0
  %906 = vmatpush2.msra.mxu0 0.0
  %907 = vmatprep.mubr.f32.mxu0 0.0
  %908 = vmatmul.mubr.f32.gmra.mxu0 %v841
  %v909 = vpop.f32.mrf.mxu0
  %v910 = vadd.f32 0.0, %v909
  %v911 = vpop.f32.mrf.mxu0
  %912 = vdwg.mxu0
  %v913 = vadd.f32 %v840, %v910
  %v914 = vxor.u32 %v913, 2147483648
  %v915 = vmul.f32 %v914, 1.442695
  %v916 = vpow.pop %v915
  %v917 = vadd.f32 %v916, 1.0
  %v918 = vrcp.pop %v917
  %v919 = vmul.f32 1.0, %v918
  %v920 = vadd.f32 %v910, %v603
  %922 = vrot.lane.b32.xlu0 %v920, 64
  %v923 = vpop.permute.xlu0 %922
  %v925 = vmul.f32 %v919, %v923
  %927 = vrot.lane.b32.xlu0 %v925, 64
  %v928 = vpop.permute.xlu0 %927
  %v930 = vadd.f32 %v840, %v928
  %v931 = vtanh.pop %v930
  %v932 = vsub.f32 1.0, %v919
  %934 = vrot.lane.b32.xlu0 %v931, 96
  %v935 = vpop.permute.xlu0 %934
  %v937 = vmul.f32 %v932, %v935
  %v938 = vmul.f32 %v919, %v834
  %v939 = vadd.f32 %v937, %v938
  %941 = vrot.lane.b32.xlu0 %v939, 96
  %v942 = vpop.permute.xlu0 %941
  %944 = vst.msk [vmem:[#allocation3 + $0x18] sm:$0xff] %vm141, %v942
  %v945 = vld [vmem:[#allocation2 + $0x20] sm:$0xff]
  %v946 = vsel %vm141, %v942, 0
  %948 = vmatprep.subr.mxu0 0.0
  %949 = vmatpush1.msra.mxu0 0.0
  %950 = vmatprep.subr.mxu0 0.0
  %951 = vmatpush1.msra.mxu0 0.0
  %952 = vmatprep.subr.mxu0 0.0
  %953 = vmatpush1.msra.mxu0 0.0
  %954 = vmatprep.subr.mxu0 0.0
  %955 = vmatpush1.msra.mxu0 0.0
  %956 = vmatprep.subr.mxu0 0.0
  %957 = vmatpush1.msra.mxu0 0.0
  %958 = vmatprep.subr.mxu0 0.0
  %959 = vmatpush1.msra.mxu0 0.0
  %960 = vmatprep.subr.mxu0 0.0
  %961 = vmatpush1.msra.mxu0 0.0
  %962 = vmatprep.subr.mxu0 0.0
  %963 = vmatpush1.msra.mxu0 0.0
  %964 = vmatprep.subr.mxu0 0.0
  %965 = vmatpush1.msra.mxu0 0.0
  %966 = vmatprep.subr.mxu0 0.0
  %967 = vmatpush1.msra.mxu0 0.0
  %968 = vmatprep.subr.mxu0 0.0
  %969 = vmatpush1.msra.mxu0 0.0
  %970 = vmatprep.subr.mxu0 0.0
  %971 = vmatpush1.msra.mxu0 0.0
  %972 = vmatprep.subr.mxu0 0.0
  %973 = vmatpush1.msra.mxu0 %v379
  %974 = vmatprep.subr.mxu0 0.0
  %975 = vmatpush1.msra.mxu0 %v378
  %976 = vmatprep.subr.mxu0 0.0
  %977 = vmatpush1.msra.mxu0 %v377
  %978 = vmatprep.subr.mxu0 0.0
  %979 = vmatpush1.msra.mxu0 %v376
  %980 = vmatprep.subr.mxu0 0.0
  %981 = vmatpush2.msra.mxu0 0.0
  %982 = vmatprep.subr.mxu0 0.0
  %983 = vmatpush2.msra.mxu0 0.0
  %984 = vmatprep.subr.mxu0 0.0
  %985 = vmatpush2.msra.mxu0 0.0
  %986 = vmatprep.subr.mxu0 0.0
  %987 = vmatpush2.msra.mxu0 0.0
  %988 = vmatprep.subr.mxu0 0.0
  %989 = vmatpush2.msra.mxu0 0.0
  %990 = vmatprep.subr.mxu0 0.0
  %991 = vmatpush2.msra.mxu0 0.0
  %992 = vmatprep.subr.mxu0 0.0
  %993 = vmatpush2.msra.mxu0 0.0
  %994 = vmatprep.subr.mxu0 0.0
  %995 = vmatpush2.msra.mxu0 0.0
  %996 = vmatprep.subr.mxu0 0.0
  %997 = vmatpush2.msra.mxu0 0.0
  %998 = vmatprep.subr.mxu0 0.0
  %999 = vmatpush2.msra.mxu0 0.0
  %1000 = vmatprep.subr.mxu0 0.0
  %1001 = vmatpush2.msra.mxu0 0.0
  %1002 = vmatprep.subr.mxu0 0.0
  %1003 = vmatpush2.msra.mxu0 0.0
  %1004 = vmatprep.subr.mxu0 0.0
  %1005 = vmatpush2.msra.mxu0 0.0
  %1006 = vmatprep.subr.mxu0 0.0
  %1007 = vmatpush2.msra.mxu0 0.0
  %1008 = vmatprep.subr.mxu0 0.0
  %1009 = vmatpush2.msra.mxu0 0.0
  %1010 = vmatprep.subr.mxu0 0.0
  %1011 = vmatpush2.msra.mxu0 0.0
  %1012 = vmatprep.mubr.f32.mxu0 0.0
  %1013 = vmatmul.mubr.f32.gmra.mxu0 %v946
  %v1014 = vpop.f32.mrf.mxu0
  %v1015 = vadd.f32 0.0, %v1014
  %v1016 = vpop.f32.mrf.mxu0
  %1017 = vdwg.mxu0
  %v1018 = vadd.f32 %v945, %v1015
  %v1019 = vxor.u32 %v1018, 2147483648
  %v1020 = vmul.f32 %v1019, 1.442695
  %v1021 = vpow.pop %v1020
  %v1022 = vadd.f32 %v1021, 1.0
  %v1023 = vrcp.pop %v1022
  %v1024 = vmul.f32 1.0, %v1023
  %v1025 = vadd.f32 %v1015, %v603
  %1027 = vrot.lane.b32.xlu0 %v1025, 64
  %v1028 = vpop.permute.xlu0 %1027
  %v1030 = vmul.f32 %v1024, %v1028
  %1032 = vrot.lane.b32.xlu0 %v1030, 64
  %v1033 = vpop.permute.xlu0 %1032
  %v1035 = vadd.f32 %v945, %v1033
  %v1036 = vtanh.pop %v1035
  %v1037 = vsub.f32 1.0, %v1024
  %1039 = vrot.lane.b32.xlu0 %v1036, 96
  %v1040 = vpop.permute.xlu0 %1039
  %v1042 = vmul.f32 %v1037, %v1040
  %v1043 = vmul.f32 %v1024, %v939
  %v1044 = vadd.f32 %v1042, %v1043
  %1046 = vrot.lane.b32.xlu0 %v1044, 96
  %v1047 = vpop.permute.xlu0 %1046
  %1049 = vst.msk [vmem:[#allocation3 + $0x20] sm:$0xff] %vm141, %v1047
  %v1050 = vld [vmem:[#allocation2 + $0x28] sm:$0xff]
  %v1051 = vsel %vm141, %v1047, 0
  %1053 = vmatprep.subr.mxu0 0.0
  %1054 = vmatpush1.msra.mxu0 0.0
  %1055 = vmatprep.subr.mxu0 0.0
  %1056 = vmatpush1.msra.mxu0 0.0
  %1057 = vmatprep.subr.mxu0 0.0
  %1058 = vmatpush1.msra.mxu0 0.0
  %1059 = vmatprep.subr.mxu0 0.0
  %1060 = vmatpush1.msra.mxu0 0.0
  %1061 = vmatprep.subr.mxu0 0.0
  %1062 = vmatpush1.msra.mxu0 0.0
  %1063 = vmatprep.subr.mxu0 0.0
  %1064 = vmatpush1.msra.mxu0 0.0
  %1065 = vmatprep.subr.mxu0 0.0
  %1066 = vmatpush1.msra.mxu0 0.0
  %1067 = vmatprep.subr.mxu0 0.0
  %1068 = vmatpush1.msra.mxu0 0.0
  %1069 = vmatprep.subr.mxu0 0.0
  %1070 = vmatpush1.msra.mxu0 0.0
  %1071 = vmatprep.subr.mxu0 0.0
  %1072 = vmatpush1.msra.mxu0 0.0
  %1073 = vmatprep.subr.mxu0 0.0
  %1074 = vmatpush1.msra.mxu0 0.0
  %1075 = vmatprep.subr.mxu0 0.0
  %1076 = vmatpush1.msra.mxu0 0.0
  %1077 = vmatprep.subr.mxu0 0.0
  %1078 = vmatpush1.msra.mxu0 %v379
  %1079 = vmatprep.subr.mxu0 0.0
  %1080 = vmatpush1.msra.mxu0 %v378
  %1081 = vmatprep.subr.mxu0 0.0
  %1082 = vmatpush1.msra.mxu0 %v377
  %1083 = vmatprep.subr.mxu0 0.0
  %1084 = vmatpush1.msra.mxu0 %v376
  %1085 = vmatprep.subr.mxu0 0.0
  %1086 = vmatpush2.msra.mxu0 0.0
  %1087 = vmatprep.subr.mxu0 0.0
  %1088 = vmatpush2.msra.mxu0 0.0
  %1089 = vmatprep.subr.mxu0 0.0
  %1090 = vmatpush2.msra.mxu0 0.0
  %1091 = vmatprep.subr.mxu0 0.0
  %1092 = vmatpush2.msra.mxu0 0.0
  %1093 = vmatprep.subr.mxu0 0.0
  %1094 = vmatpush2.msra.mxu0 0.0
  %1095 = vmatprep.subr.mxu0 0.0
  %1096 = vmatpush2.msra.mxu0 0.0
  %1097 = vmatprep.subr.mxu0 0.0
  %1098 = vmatpush2.msra.mxu0 0.0
  %1099 = vmatprep.subr.mxu0 0.0
  %1100 = vmatpush2.msra.mxu0 0.0
  %1101 = vmatprep.subr.mxu0 0.0
  %1102 = vmatpush2.msra.mxu0 0.0
  %1103 = vmatprep.subr.mxu0 0.0
  %1104 = vmatpush2.msra.mxu0 0.0
  %1105 = vmatprep.subr.mxu0 0.0
  %1106 = vmatpush2.msra.mxu0 0.0
  %1107 = vmatprep.subr.mxu0 0.0
  %1108 = vmatpush2.msra.mxu0 0.0
  %1109 = vmatprep.subr.mxu0 0.0
  %1110 = vmatpush2.msra.mxu0 0.0
  %1111 = vmatprep.subr.mxu0 0.0
  %1112 = vmatpush2.msra.mxu0 0.0
  %1113 = vmatprep.subr.mxu0 0.0
  %1114 = vmatpush2.msra.mxu0 0.0
  %1115 = vmatprep.subr.mxu0 0.0
  %1116 = vmatpush2.msra.mxu0 0.0
  %1117 = vmatprep.mubr.f32.mxu0 0.0
  %1118 = vmatmul.mubr.f32.gmra.mxu0 %v1051
  %v1119 = vpop.f32.mrf.mxu0
  %v1120 = vadd.f32 0.0, %v1119
  %v1121 = vpop.f32.mrf.mxu0
  %1122 = vdwg.mxu0
  %v1123 = vadd.f32 %v1050, %v1120
  %v1124 = vxor.u32 %v1123, 2147483648
  %v1125 = vmul.f32 %v1124, 1.442695
  %v1126 = vpow.pop %v1125
  %v1127 = vadd.f32 %v1126, 1.0
  %v1128 = vrcp.pop %v1127
  %v1129 = vmul.f32 1.0, %v1128
  %v1130 = vadd.f32 %v1120, %v603
  %1132 = vrot.lane.b32.xlu0 %v1130, 64
  %v1133 = vpop.permute.xlu0 %1132
  %v1135 = vmul.f32 %v1129, %v1133
  %1137 = vrot.lane.b32.xlu0 %v1135, 64
  %v1138 = vpop.permute.xlu0 %1137
  %v1140 = vadd.f32 %v1050, %v1138
  %v1141 = vtanh.pop %v1140
  %v1142 = vsub.f32 1.0, %v1129
  %1144 = vrot.lane.b32.xlu0 %v1141, 96
  %v1145 = vpop.permute.xlu0 %1144
  %v1147 = vmul.f32 %v1142, %v1145
  %v1148 = vmul.f32 %v1129, %v1044
  %v1149 = vadd.f32 %v1147, %v1148
  %1151 = vrot.lane.b32.xlu0 %v1149, 96
  %v1152 = vpop.permute.xlu0 %1151
  %1154 = vst.msk [vmem:[#allocation3 + $0x28] sm:$0xff] %vm141, %v1152
  %v1155 = vld [vmem:[#allocation2 + $0x30] sm:$0xff]
  %v1156 = vsel %vm141, %v1152, 0
  %1158 = vmatprep.subr.mxu0 0.0
  %1159 = vmatpush1.msra.mxu0 0.0
  %1160 = vmatprep.subr.mxu0 0.0
  %1161 = vmatpush1.msra.mxu0 0.0
  %1162 = vmatprep.subr.mxu0 0.0
  %1163 = vmatpush1.msra.mxu0 0.0
  %1164 = vmatprep.subr.mxu0 0.0
  %1165 = vmatpush1.msra.mxu0 0.0
  %1166 = vmatprep.subr.mxu0 0.0
  %1167 = vmatpush1.msra.mxu0 0.0
  %1168 = vmatprep.subr.mxu0 0.0
  %1169 = vmatpush1.msra.mxu0 0.0
  %1170 = vmatprep.subr.mxu0 0.0
  %1171 = vmatpush1.msra.mxu0 0.0
  %1172 = vmatprep.subr.mxu0 0.0
  %1173 = vmatpush1.msra.mxu0 0.0
  %1174 = vmatprep.subr.mxu0 0.0
  %1175 = vmatpush1.msra.mxu0 0.0
  %1176 = vmatprep.subr.mxu0 0.0
  %1177 = vmatpush1.msra.mxu0 0.0
  %1178 = vmatprep.subr.mxu0 0.0
  %1179 = vmatpush1.msra.mxu0 0.0
  %1180 = vmatprep.subr.mxu0 0.0
  %1181 = vmatpush1.msra.mxu0 0.0
  %1182 = vmatprep.subr.mxu0 0.0
  %1183 = vmatpush1.msra.mxu0 %v379
  %1184 = vmatprep.subr.mxu0 0.0
  %1185 = vmatpush1.msra.mxu0 %v378
  %1186 = vmatprep.subr.mxu0 0.0
  %1187 = vmatpush1.msra.mxu0 %v377
  %1188 = vmatprep.subr.mxu0 0.0
  %1189 = vmatpush1.msra.mxu0 %v376
  %1190 = vmatprep.subr.mxu0 0.0
  %1191 = vmatpush2.msra.mxu0 0.0
  %1192 = vmatprep.subr.mxu0 0.0
  %1193 = vmatpush2.msra.mxu0 0.0
  %1194 = vmatprep.subr.mxu0 0.0
  %1195 = vmatpush2.msra.mxu0 0.0
  %1196 = vmatprep.subr.mxu0 0.0
  %1197 = vmatpush2.msra.mxu0 0.0
  %1198 = vmatprep.subr.mxu0 0.0
  %1199 = vmatpush2.msra.mxu0 0.0
  %1200 = vmatprep.subr.mxu0 0.0
  %1201 = vmatpush2.msra.mxu0 0.0
  %1202 = vmatprep.subr.mxu0 0.0
  %1203 = vmatpush2.msra.mxu0 0.0
  %1204 = vmatprep.subr.mxu0 0.0
  %1205 = vmatpush2.msra.mxu0 0.0
  %1206 = vmatprep.subr.mxu0 0.0
  %1207 = vmatpush2.msra.mxu0 0.0
  %1208 = vmatprep.subr.mxu0 0.0
  %1209 = vmatpush2.msra.mxu0 0.0
  %1210 = vmatprep.subr.mxu0 0.0
  %1211 = vmatpush2.msra.mxu0 0.0
  %1212 = vmatprep.subr.mxu0 0.0
  %1213 = vmatpush2.msra.mxu0 0.0
  %1214 = vmatprep.subr.mxu0 0.0
  %1215 = vmatpush2.msra.mxu0 0.0
  %1216 = vmatprep.subr.mxu0 0.0
  %1217 = vmatpush2.msra.mxu0 0.0
  %1218 = vmatprep.subr.mxu0 0.0
  %1219 = vmatpush2.msra.mxu0 0.0
  %1220 = vmatprep.subr.mxu0 0.0
  %1221 = vmatpush2.msra.mxu0 0.0
  %1222 = vmatprep.mubr.f32.mxu0 0.0
  %1223 = vmatmul.mubr.f32.gmra.mxu0 %v1156
  %v1224 = vpop.f32.mrf.mxu0
  %v1225 = vadd.f32 0.0, %v1224
  %v1226 = vpop.f32.mrf.mxu0
  %1227 = vdwg.mxu0
  %v1228 = vadd.f32 %v1155, %v1225
  %v1229 = vxor.u32 %v1228, 2147483648
  %v1230 = vmul.f32 %v1229, 1.442695
  %v1231 = vpow.pop %v1230
  %v1232 = vadd.f32 %v1231, 1.0
  %v1233 = vrcp.pop %v1232
  %v1234 = vmul.f32 1.0, %v1233
  %v1235 = vadd.f32 %v1225, %v603
  %1237 = vrot.lane.b32.xlu0 %v1235, 64
  %v1238 = vpop.permute.xlu0 %1237
  %v1240 = vmul.f32 %v1234, %v1238
  %1242 = vrot.lane.b32.xlu0 %v1240, 64
  %v1243 = vpop.permute.xlu0 %1242
  %v1245 = vadd.f32 %v1155, %v1243
  %v1246 = vtanh.pop %v1245
  %v1247 = vsub.f32 1.0, %v1234
  %1249 = vrot.lane.b32.xlu0 %v1246, 96
  %v1250 = vpop.permute.xlu0 %1249
  %v1252 = vmul.f32 %v1247, %v1250
  %v1253 = vmul.f32 %v1234, %v1149
  %v1254 = vadd.f32 %v1252, %v1253
  %1256 = vrot.lane.b32.xlu0 %v1254, 96
  %v1257 = vpop.permute.xlu0 %1256
  %1259 = vst.msk [vmem:[#allocation3 + $0x30] sm:$0xff] %vm141, %v1257
  %v1260 = vld [vmem:[#allocation2 + $0x38] sm:$0xff]
  %v1261 = vsel %vm141, %v1257, 0
  %1263 = vmatprep.subr.mxu0 0.0
  %1264 = vmatpush1.msra.mxu0 0.0
  %1265 = vmatprep.subr.mxu0 0.0
  %1266 = vmatpush1.msra.mxu0 0.0
  %1267 = vmatprep.subr.mxu0 0.0
  %1268 = vmatpush1.msra.mxu0 0.0
  %1269 = vmatprep.subr.mxu0 0.0
  %1270 = vmatpush1.msra.mxu0 0.0
  %1271 = vmatprep.subr.mxu0 0.0
  %1272 = vmatpush1.msra.mxu0 0.0
  %1273 = vmatprep.subr.mxu0 0.0
  %1274 = vmatpush1.msra.mxu0 0.0
  %1275 = vmatprep.subr.mxu0 0.0
  %1276 = vmatpush1.msra.mxu0 0.0
  %1277 = vmatprep.subr.mxu0 0.0
  %1278 = vmatpush1.msra.mxu0 0.0
  %1279 = vmatprep.subr.mxu0 0.0
  %1280 = vmatpush1.msra.mxu0 0.0
  %1281 = vmatprep.subr.mxu0 0.0
  %1282 = vmatpush1.msra.mxu0 0.0
  %1283 = vmatprep.subr.mxu0 0.0
  %1284 = vmatpush1.msra.mxu0 0.0
  %1285 = vmatprep.subr.mxu0 0.0
  %1286 = vmatpush1.msra.mxu0 0.0
  %1287 = vmatprep.subr.mxu0 0.0
  %1288 = vmatpush1.msra.mxu0 %v379
  %1289 = vmatprep.subr.mxu0 0.0
  %1290 = vmatpush1.msra.mxu0 %v378
  %1291 = vmatprep.subr.mxu0 0.0
  %1292 = vmatpush1.msra.mxu0 %v377
  %1293 = vmatprep.subr.mxu0 0.0
  %1294 = vmatpush1.msra.mxu0 %v376
  %1295 = vmatprep.subr.mxu0 0.0
  %1296 = vmatpush2.msra.mxu0 0.0
  %1297 = vmatprep.subr.mxu0 0.0
  %1298 = vmatpush2.msra.mxu0 0.0
  %1299 = vmatprep.subr.mxu0 0.0
  %1300 = vmatpush2.msra.mxu0 0.0
  %1301 = vmatprep.subr.mxu0 0.0
  %1302 = vmatpush2.msra.mxu0 0.0
  %1303 = vmatprep.subr.mxu0 0.0
  %1304 = vmatpush2.msra.mxu0 0.0
  %1305 = vmatprep.subr.mxu0 0.0
  %1306 = vmatpush2.msra.mxu0 0.0
  %1307 = vmatprep.subr.mxu0 0.0
  %1308 = vmatpush2.msra.mxu0 0.0
  %1309 = vmatprep.subr.mxu0 0.0
  %1310 = vmatpush2.msra.mxu0 0.0
  %1311 = vmatprep.subr.mxu0 0.0
  %1312 = vmatpush2.msra.mxu0 0.0
  %1313 = vmatprep.subr.mxu0 0.0
  %1314 = vmatpush2.msra.mxu0 0.0
  %1315 = vmatprep.subr.mxu0 0.0
  %1316 = vmatpush2.msra.mxu0 0.0
  %1317 = vmatprep.subr.mxu0 0.0
  %1318 = vmatpush2.msra.mxu0 0.0
  %1319 = vmatprep.subr.mxu0 0.0
  %1320 = vmatpush2.msra.mxu0 0.0
  %1321 = vmatprep.subr.mxu0 0.0
  %1322 = vmatpush2.msra.mxu0 0.0
  %1323 = vmatprep.subr.mxu0 0.0
  %1324 = vmatpush2.msra.mxu0 0.0
  %1325 = vmatprep.subr.mxu0 0.0
  %1326 = vmatpush2.msra.mxu0 0.0
  %1327 = vmatprep.mubr.f32.mxu0 0.0
  %1328 = vmatmul.mubr.f32.gmra.mxu0 %v1261
  %v1329 = vpop.f32.mrf.mxu0
  %v1330 = vadd.f32 0.0, %v1329
  %v1331 = vpop.f32.mrf.mxu0
  %1332 = vdwg.mxu0
  %v1333 = vadd.f32 %v1260, %v1330
  %v1334 = vxor.u32 %v1333, 2147483648
  %v1335 = vmul.f32 %v1334, 1.442695
  %v1336 = vpow.pop %v1335
  %v1337 = vadd.f32 %v1336, 1.0
  %v1338 = vrcp.pop %v1337
  %v1339 = vmul.f32 1.0, %v1338
  %v1340 = vadd.f32 %v1330, %v603
  %1342 = vrot.lane.b32.xlu0 %v1340, 64
  %v1343 = vpop.permute.xlu0 %1342
  %v1345 = vmul.f32 %v1339, %v1343
  %1347 = vrot.lane.b32.xlu0 %v1345, 64
  %v1348 = vpop.permute.xlu0 %1347
  %v1350 = vadd.f32 %v1260, %v1348
  %v1351 = vtanh.pop %v1350
  %v1352 = vsub.f32 1.0, %v1339
  %1354 = vrot.lane.b32.xlu0 %v1351, 96
  %v1355 = vpop.permute.xlu0 %1354
  %v1357 = vmul.f32 %v1352, %v1355
  %v1358 = vmul.f32 %v1339, %v1254
  %v1359 = vadd.f32 %v1357, %v1358
  %1361 = vrot.lane.b32.xlu0 %v1359, 96
  %v1362 = vpop.permute.xlu0 %1361
  %1364 = vst.msk [vmem:[#allocation3 + $0x38] sm:$0xff] %vm141, %v1362
  %v1365 = vld [vmem:[#allocation3] sm:$0xff]
  %v1366 = vld [vmem:[#allocation3 + $0x8] sm:$0xff]
  %v1367 = vld [vmem:[#allocation3 + $0x10] sm:$0xff]
  %v1368 = vld [vmem:[#allocation3 + $0x18] sm:$0xff]
  %v1369 = vld [vmem:[#allocation3 + $0x20] sm:$0xff]
  %v1370 = vld [vmem:[#allocation3 + $0x28] sm:$0xff]
  %v1371 = vld [vmem:[#allocation3 + $0x30] sm:$0xff]
  %v1372 = vld [vmem:[#allocation3 + $0x38] sm:$0xff]
  %v1373 = vld [vmem:[%s7 + $0x30] sm:$0xff]
  %v1374 = vld [vmem:[%s7 + $0x38] sm:$0xff]
  %v1375 = vld [vmem:[%s7 + $0x40] sm:$0xff]
  %v1376 = vld [vmem:[%s7 + $0x48] sm:$0xff]
  %v1377 = vld [vmem:[%s8 + $0x20] sm:$0xff]
  %v1378 = vld [vmem:[%s8 + $0x28] sm:$0xff]
  %v1379 = vld [vmem:[%s8 + $0x30] sm:$0xff]
  %v1380 = vld [vmem:[%s8 + $0x38] sm:$0xff]
  %v1381 = vld [vmem:[%s9 + $0x1] sm:$0x1]
  %v1382 = vlaneseq
  %v1383 = vshrl.u32 %v1382, 7
  %v1384 = vsub.s32 0, %v1383
  %v1385 = vrot.slane %v1381, %v1384
  %v1387 = vsel %vm141, %v1365, 0
  %v1390 = vsel %vm141, %v1366, 0
  %v1393 = vsel %vm141, %v1367, 0
  %v1396 = vsel %vm141, %v1368, 0
  %v1399 = vsel %vm141, %v1369, 0
  %v1402 = vsel %vm141, %v1370, 0
  %v1405 = vsel %vm141, %v1371, 0
  %v1408 = vsel %vm141, %v1372, 0
  %1410 = vmatprep.subr.mxu0 0.0
  %1411 = vmatpush1.msra.mxu0 0.0
  %1412 = vmatprep.subr.mxu0 0.0
  %1413 = vmatpush1.msra.mxu0 0.0
  %1414 = vmatprep.subr.mxu0 0.0
  %1415 = vmatpush1.msra.mxu0 0.0
  %1416 = vmatprep.subr.mxu0 0.0
  %1417 = vmatpush1.msra.mxu0 0.0
  %1418 = vmatprep.subr.mxu0 0.0
  %1419 = vmatpush1.msra.mxu0 0.0
  %1420 = vmatprep.subr.mxu0 0.0
  %1421 = vmatpush1.msra.mxu0 0.0
  %1422 = vmatprep.subr.mxu0 0.0
  %1423 = vmatpush1.msra.mxu0 0.0
  %1424 = vmatprep.subr.mxu0 0.0
  %1425 = vmatpush1.msra.mxu0 0.0
  %1426 = vmatprep.subr.mxu0 0.0
  %1427 = vmatpush1.msra.mxu0 0.0
  %1428 = vmatprep.subr.mxu0 0.0
  %1429 = vmatpush1.msra.mxu0 0.0
  %1430 = vmatprep.subr.mxu0 0.0
  %1431 = vmatpush1.msra.mxu0 0.0
  %1432 = vmatprep.subr.mxu0 0.0
  %1433 = vmatpush1.msra.mxu0 0.0
  %1434 = vmatprep.subr.mxu0 0.0
  %1435 = vmatpush1.msra.mxu0 %v1376
  %1436 = vmatprep.subr.mxu0 0.0
  %1437 = vmatpush1.msra.mxu0 %v1375
  %1438 = vmatprep.subr.mxu0 0.0
  %1439 = vmatpush1.msra.mxu0 %v1374
  %1440 = vmatprep.subr.mxu0 0.0
  %1441 = vmatpush1.msra.mxu0 %v1373
  %1442 = vmatprep.subr.mxu0 0.0
  %1443 = vmatpush2.msra.mxu0 0.0
  %1444 = vmatprep.subr.mxu0 0.0
  %1445 = vmatpush2.msra.mxu0 0.0
  %1446 = vmatprep.subr.mxu0 0.0
  %1447 = vmatpush2.msra.mxu0 0.0
  %1448 = vmatprep.subr.mxu0 0.0
  %1449 = vmatpush2.msra.mxu0 0.0
  %1450 = vmatprep.subr.mxu0 0.0
  %1451 = vmatpush2.msra.mxu0 0.0
  %1452 = vmatprep.subr.mxu0 0.0
  %1453 = vmatpush2.msra.mxu0 0.0
  %1454 = vmatprep.subr.mxu0 0.0
  %1455 = vmatpush2.msra.mxu0 0.0
  %1456 = vmatprep.subr.mxu0 0.0
  %1457 = vmatpush2.msra.mxu0 0.0
  %1458 = vmatprep.subr.mxu0 0.0
  %1459 = vmatpush2.msra.mxu0 0.0
  %1460 = vmatprep.subr.mxu0 0.0
  %1461 = vmatpush2.msra.mxu0 0.0
  %1462 = vmatprep.subr.mxu0 0.0
  %1463 = vmatpush2.msra.mxu0 0.0
  %1464 = vmatprep.subr.mxu0 0.0
  %1465 = vmatpush2.msra.mxu0 0.0
  %1466 = vmatprep.subr.mxu0 0.0
  %1467 = vmatpush2.msra.mxu0 0.0
  %1468 = vmatprep.subr.mxu0 0.0
  %1469 = vmatpush2.msra.mxu0 0.0
  %1470 = vmatprep.subr.mxu0 0.0
  %1471 = vmatpush2.msra.mxu0 0.0
  %1472 = vmatprep.subr.mxu0 0.0
  %1473 = vmatpush2.msra.mxu0 0.0
  %1474 = vmatprep.mubr.f32.mxu0 0.0
  %1475 = vmatmul.mubr.f32.gmra.mxu0 %v1387
  %v1476 = vpop.f32.mrf.mxu0
  %v1477 = vadd.f32 %v1385, %v1476
  %v1478 = vpop.f32.mrf.mxu0
  %1479 = vmatprep.mubr.f32.mxu0 0.0
  %1480 = vmatmul.mubr.f32.gmra.mxu0 %v1390
  %v1481 = vpop.f32.mrf.mxu0
  %v1482 = vadd.f32 %v1385, %v1481
  %v1483 = vpop.f32.mrf.mxu0
  %1484 = vmatprep.mubr.f32.mxu0 0.0
  %1485 = vmatmul.mubr.f32.gmra.mxu0 %v1393
  %v1486 = vpop.f32.mrf.mxu0
  %v1487 = vadd.f32 %v1385, %v1486
  %v1488 = vpop.f32.mrf.mxu0
  %1489 = vmatprep.mubr.f32.mxu0 0.0
  %1490 = vmatmul.mubr.f32.gmra.mxu0 %v1396
  %v1491 = vpop.f32.mrf.mxu0
  %v1492 = vadd.f32 %v1385, %v1491
  %v1493 = vpop.f32.mrf.mxu0
  %1494 = vmatprep.mubr.f32.mxu0 0.0
  %1495 = vmatmul.mubr.f32.gmra.mxu0 %v1399
  %v1496 = vpop.f32.mrf.mxu0
  %v1497 = vadd.f32 %v1385, %v1496
  %v1498 = vpop.f32.mrf.mxu0
  %1499 = vmatprep.mubr.f32.mxu0 0.0
  %1500 = vmatmul.mubr.f32.gmra.mxu0 %v1402
  %v1501 = vpop.f32.mrf.mxu0
  %v1502 = vadd.f32 %v1385, %v1501
  %v1503 = vpop.f32.mrf.mxu0
  %1504 = vmatprep.mubr.f32.mxu0 0.0
  %1505 = vmatmul.mubr.f32.gmra.mxu0 %v1405
  %v1506 = vpop.f32.mrf.mxu0
  %v1507 = vadd.f32 %v1385, %v1506
  %v1508 = vpop.f32.mrf.mxu0
  %1509 = vmatprep.mubr.f32.mxu0 0.0
  %1510 = vmatmul.mubr.f32.gmra.mxu0 %v1408
  %v1511 = vpop.f32.mrf.mxu0
  %v1512 = vadd.f32 %v1385, %v1511
  %v1513 = vpop.f32.mrf.mxu0
  %1514 = vdwg.mxu0
  %1515 = vst.msk [vmem:[#allocation2] sm:$0xff] %vm511, %v1477
  %1516 = vst.msk [vmem:[#allocation2 + $0x8] sm:$0xff] %vm511, %v1482
  %1517 = vst.msk [vmem:[#allocation2 + $0x10] sm:$0xff] %vm511, %v1487
  %1518 = vst.msk [vmem:[#allocation2 + $0x18] sm:$0xff] %vm511, %v1492
  %1519 = vst.msk [vmem:[#allocation2 + $0x20] sm:$0xff] %vm511, %v1497
  %1520 = vst.msk [vmem:[#allocation2 + $0x28] sm:$0xff] %vm511, %v1502
  %1521 = vst.msk [vmem:[#allocation2 + $0x30] sm:$0xff] %vm511, %v1507
  %1522 = vst.msk [vmem:[#allocation2 + $0x38] sm:$0xff] %vm511, %v1512
  %v1523 = vld [vmem:[#allocation2] sm:$0xff]
  %1524 = vmatprep.subr.mxu0 0.0
  %1525 = vmatpush1.msra.mxu0 0.0
  %1526 = vmatprep.subr.mxu0 0.0
  %1527 = vmatpush1.msra.mxu0 0.0
  %1528 = vmatprep.subr.mxu0 0.0
  %1529 = vmatpush1.msra.mxu0 0.0
  %1530 = vmatprep.subr.mxu0 0.0
  %1531 = vmatpush1.msra.mxu0 0.0
  %1532 = vmatprep.subr.mxu0 0.0
  %1533 = vmatpush1.msra.mxu0 0.0
  %1534 = vmatprep.subr.mxu0 0.0
  %1535 = vmatpush1.msra.mxu0 0.0
  %1536 = vmatprep.subr.mxu0 0.0
  %1537 = vmatpush1.msra.mxu0 0.0
  %1538 = vmatprep.subr.mxu0 0.0
  %1539 = vmatpush1.msra.mxu0 0.0
  %1540 = vmatprep.subr.mxu0 0.0
  %1541 = vmatpush1.msra.mxu0 0.0
  %1542 = vmatprep.subr.mxu0 0.0
  %1543 = vmatpush1.msra.mxu0 0.0
  %1544 = vmatprep.subr.mxu0 0.0
  %1545 = vmatpush1.msra.mxu0 0.0
  %1546 = vmatprep.subr.mxu0 0.0
  %1547 = vmatpush1.msra.mxu0 0.0
  %1548 = vmatprep.subr.mxu0 0.0
  %1549 = vmatpush1.msra.mxu0 %v1380
  %1550 = vmatprep.subr.mxu0 0.0
  %1551 = vmatpush1.msra.mxu0 %v1379
  %1552 = vmatprep.subr.mxu0 0.0
  %1553 = vmatpush1.msra.mxu0 %v1378
  %1554 = vmatprep.subr.mxu0 0.0
  %1555 = vmatpush1.msra.mxu0 %v1377
  %1556 = vmatprep.subr.mxu0 0.0
  %1557 = vmatpush2.msra.mxu0 0.0
  %1558 = vmatprep.subr.mxu0 0.0
  %1559 = vmatpush2.msra.mxu0 0.0
  %1560 = vmatprep.subr.mxu0 0.0
  %1561 = vmatpush2.msra.mxu0 0.0
  %1562 = vmatprep.subr.mxu0 0.0
  %1563 = vmatpush2.msra.mxu0 0.0
  %1564 = vmatprep.subr.mxu0 0.0
  %1565 = vmatpush2.msra.mxu0 0.0
  %1566 = vmatprep.subr.mxu0 0.0
  %1567 = vmatpush2.msra.mxu0 0.0
  %1568 = vmatprep.subr.mxu0 0.0
  %1569 = vmatpush2.msra.mxu0 0.0
  %1570 = vmatprep.subr.mxu0 0.0
  %1571 = vmatpush2.msra.mxu0 0.0
  %1572 = vmatprep.subr.mxu0 0.0
  %1573 = vmatpush2.msra.mxu0 0.0
  %1574 = vmatprep.subr.mxu0 0.0
  %1575 = vmatpush2.msra.mxu0 0.0
  %1576 = vmatprep.subr.mxu0 0.0
  %1577 = vmatpush2.msra.mxu0 0.0
  %1578 = vmatprep.subr.mxu0 0.0
  %1579 = vmatpush2.msra.mxu0 0.0
  %1580 = vmatprep.subr.mxu0 0.0
  %1581 = vmatpush2.msra.mxu0 0.0
  %1582 = vmatprep.subr.mxu0 0.0
  %1583 = vmatpush2.msra.mxu0 0.0
  %1584 = vmatprep.subr.mxu0 0.0
  %1585 = vmatpush2.msra.mxu0 0.0
  %1586 = vmatprep.subr.mxu0 0.0
  %1587 = vmatpush2.msra.mxu0 0.0
  %1588 = vmatprep.mubr.f32.mxu0 0.0
  %1589 = vmatmul.mubr.f32.gmra.mxu0 %v522
  %v1590 = vpop.f32.mrf.mxu0
  %v1591 = vadd.f32 0.0, %v1590
  %v1592 = vpop.f32.mrf.mxu0
  %1593 = vdwg.mxu0
  %v1594 = vadd.f32 %v1523, %v1591
  %v1595 = vxor.u32 %v1594, 2147483648
  %v1596 = vmul.f32 %v1595, 1.442695
  %v1597 = vpow.pop %v1596
  %v1598 = vadd.f32 %v1597, 1.0
  %v1599 = vrcp.pop %v1598
  %v1600 = vmul.f32 1.0, %v1599
  %1602 = vrot.lane.b32.xlu0 %v1385, 96
  %v1603 = vpop.permute.xlu0 %1602
  %v1605 = vadd.f32 %v1591, %v1603
  %1607 = vrot.lane.b32.xlu0 %v1605, 64
  %v1608 = vpop.permute.xlu0 %1607
  %v1610 = vmul.f32 %v1600, %v1608
  %1612 = vrot.lane.b32.xlu0 %v1610, 64
  %v1613 = vpop.permute.xlu0 %1612
  %v1615 = vadd.f32 %v1523, %v1613
  %v1616 = vtanh.pop %v1615
  %v1617 = vsub.f32 1.0, %v1600
  %1619 = vrot.lane.b32.xlu0 %v1616, 96
  %v1620 = vpop.permute.xlu0 %1619
  %v1622 = vmul.f32 %v1617, %v1620
  %v1623 = vmul.f32 %v1600, 0.0
  %v1624 = vadd.f32 %v1622, %v1623
  %v1625 = vld [vmem:[#allocation2 + $0x8] sm:$0xff]
  %1627 = vrot.lane.b32.xlu0 %v1624, 96
  %v1628 = vpop.permute.xlu0 %1627
  %v1629 = vsel %vm141, %v1628, 0
  %1631 = vmatprep.subr.mxu0 0.0
  %1632 = vmatpush1.msra.mxu0 0.0
  %1633 = vmatprep.subr.mxu0 0.0
  %1634 = vmatpush1.msra.mxu0 0.0
  %1635 = vmatprep.subr.mxu0 0.0
  %1636 = vmatpush1.msra.mxu0 0.0
  %1637 = vmatprep.subr.mxu0 0.0
  %1638 = vmatpush1.msra.mxu0 0.0
  %1639 = vmatprep.subr.mxu0 0.0
  %1640 = vmatpush1.msra.mxu0 0.0
  %1641 = vmatprep.subr.mxu0 0.0
  %1642 = vmatpush1.msra.mxu0 0.0
  %1643 = vmatprep.subr.mxu0 0.0
  %1644 = vmatpush1.msra.mxu0 0.0
  %1645 = vmatprep.subr.mxu0 0.0
  %1646 = vmatpush1.msra.mxu0 0.0
  %1647 = vmatprep.subr.mxu0 0.0
  %1648 = vmatpush1.msra.mxu0 0.0
  %1649 = vmatprep.subr.mxu0 0.0
  %1650 = vmatpush1.msra.mxu0 0.0
  %1651 = vmatprep.subr.mxu0 0.0
  %1652 = vmatpush1.msra.mxu0 0.0
  %1653 = vmatprep.subr.mxu0 0.0
  %1654 = vmatpush1.msra.mxu0 0.0
  %1655 = vmatprep.subr.mxu0 0.0
  %1656 = vmatpush1.msra.mxu0 %v1380
  %1657 = vmatprep.subr.mxu0 0.0
  %1658 = vmatpush1.msra.mxu0 %v1379
  %1659 = vmatprep.subr.mxu0 0.0
  %1660 = vmatpush1.msra.mxu0 %v1378
  %1661 = vmatprep.subr.mxu0 0.0
  %1662 = vmatpush1.msra.mxu0 %v1377
  %1663 = vmatprep.subr.mxu0 0.0
  %1664 = vmatpush2.msra.mxu0 0.0
  %1665 = vmatprep.subr.mxu0 0.0
  %1666 = vmatpush2.msra.mxu0 0.0
  %1667 = vmatprep.subr.mxu0 0.0
  %1668 = vmatpush2.msra.mxu0 0.0
  %1669 = vmatprep.subr.mxu0 0.0
  %1670 = vmatpush2.msra.mxu0 0.0
  %1671 = vmatprep.subr.mxu0 0.0
  %1672 = vmatpush2.msra.mxu0 0.0
  %1673 = vmatprep.subr.mxu0 0.0
  %1674 = vmatpush2.msra.mxu0 0.0
  %1675 = vmatprep.subr.mxu0 0.0
  %1676 = vmatpush2.msra.mxu0 0.0
  %1677 = vmatprep.subr.mxu0 0.0
  %1678 = vmatpush2.msra.mxu0 0.0
  %1679 = vmatprep.subr.mxu0 0.0
  %1680 = vmatpush2.msra.mxu0 0.0
  %1681 = vmatprep.subr.mxu0 0.0
  %1682 = vmatpush2.msra.mxu0 0.0
  %1683 = vmatprep.subr.mxu0 0.0
  %1684 = vmatpush2.msra.mxu0 0.0
  %1685 = vmatprep.subr.mxu0 0.0
  %1686 = vmatpush2.msra.mxu0 0.0
  %1687 = vmatprep.subr.mxu0 0.0
  %1688 = vmatpush2.msra.mxu0 0.0
  %1689 = vmatprep.subr.mxu0 0.0
  %1690 = vmatpush2.msra.mxu0 0.0
  %1691 = vmatprep.subr.mxu0 0.0
  %1692 = vmatpush2.msra.mxu0 0.0
  %1693 = vmatprep.subr.mxu0 0.0
  %1694 = vmatpush2.msra.mxu0 0.0
  %1695 = vmatprep.mubr.f32.mxu0 0.0
  %1696 = vmatmul.mubr.f32.gmra.mxu0 %v1629
  %v1697 = vpop.f32.mrf.mxu0
  %v1698 = vadd.f32 0.0, %v1697
  %v1699 = vpop.f32.mrf.mxu0
  %1700 = vdwg.mxu0
  %v1701 = vadd.f32 %v1625, %v1698
  %v1702 = vxor.u32 %v1701, 2147483648
  %v1703 = vmul.f32 %v1702, 1.442695
  %v1704 = vpow.pop %v1703
  %v1705 = vadd.f32 %v1704, 1.0
  %v1706 = vrcp.pop %v1705
  %v1707 = vmul.f32 1.0, %v1706
  %v1708 = vadd.f32 %v1698, %v1603
  %1710 = vrot.lane.b32.xlu0 %v1708, 64
  %v1711 = vpop.permute.xlu0 %1710
  %v1713 = vmul.f32 %v1707, %v1711
  %1715 = vrot.lane.b32.xlu0 %v1713, 64
  %v1716 = vpop.permute.xlu0 %1715
  %v1718 = vadd.f32 %v1625, %v1716
  %v1719 = vtanh.pop %v1718
  %v1720 = vsub.f32 1.0, %v1707
  %1722 = vrot.lane.b32.xlu0 %v1719, 96
  %v1723 = vpop.permute.xlu0 %1722
  %v1725 = vmul.f32 %v1720, %v1723
  %v1726 = vmul.f32 %v1707, %v1624
  %v1727 = vadd.f32 %v1725, %v1726
  %v1728 = vld [vmem:[#allocation2 + $0x10] sm:$0xff]
  %1730 = vrot.lane.b32.xlu0 %v1727, 96
  %v1731 = vpop.permute.xlu0 %1730
  %v1732 = vsel %vm141, %v1731, 0
  %1734 = vmatprep.subr.mxu0 0.0
  %1735 = vmatpush1.msra.mxu0 0.0
  %1736 = vmatprep.subr.mxu0 0.0
  %1737 = vmatpush1.msra.mxu0 0.0
  %1738 = vmatprep.subr.mxu0 0.0
  %1739 = vmatpush1.msra.mxu0 0.0
  %1740 = vmatprep.subr.mxu0 0.0
  %1741 = vmatpush1.msra.mxu0 0.0
  %1742 = vmatprep.subr.mxu0 0.0
  %1743 = vmatpush1.msra.mxu0 0.0
  %1744 = vmatprep.subr.mxu0 0.0
  %1745 = vmatpush1.msra.mxu0 0.0
  %1746 = vmatprep.subr.mxu0 0.0
  %1747 = vmatpush1.msra.mxu0 0.0
  %1748 = vmatprep.subr.mxu0 0.0
  %1749 = vmatpush1.msra.mxu0 0.0
  %1750 = vmatprep.subr.mxu0 0.0
  %1751 = vmatpush1.msra.mxu0 0.0
  %1752 = vmatprep.subr.mxu0 0.0
  %1753 = vmatpush1.msra.mxu0 0.0
  %1754 = vmatprep.subr.mxu0 0.0
  %1755 = vmatpush1.msra.mxu0 0.0
  %1756 = vmatprep.subr.mxu0 0.0
  %1757 = vmatpush1.msra.mxu0 0.0
  %1758 = vmatprep.subr.mxu0 0.0
  %1759 = vmatpush1.msra.mxu0 %v1380
  %1760 = vmatprep.subr.mxu0 0.0
  %1761 = vmatpush1.msra.mxu0 %v1379
  %1762 = vmatprep.subr.mxu0 0.0
  %1763 = vmatpush1.msra.mxu0 %v1378
  %1764 = vmatprep.subr.mxu0 0.0
  %1765 = vmatpush1.msra.mxu0 %v1377
  %1766 = vmatprep.subr.mxu0 0.0
  %1767 = vmatpush2.msra.mxu0 0.0
  %1768 = vmatprep.subr.mxu0 0.0
  %1769 = vmatpush2.msra.mxu0 0.0
  %1770 = vmatprep.subr.mxu0 0.0
  %1771 = vmatpush2.msra.mxu0 0.0
  %1772 = vmatprep.subr.mxu0 0.0
  %1773 = vmatpush2.msra.mxu0 0.0
  %1774 = vmatprep.subr.mxu0 0.0
  %1775 = vmatpush2.msra.mxu0 0.0
  %1776 = vmatprep.subr.mxu0 0.0
  %1777 = vmatpush2.msra.mxu0 0.0
  %1778 = vmatprep.subr.mxu0 0.0
  %1779 = vmatpush2.msra.mxu0 0.0
  %1780 = vmatprep.subr.mxu0 0.0
  %1781 = vmatpush2.msra.mxu0 0.0
  %1782 = vmatprep.subr.mxu0 0.0
  %1783 = vmatpush2.msra.mxu0 0.0
  %1784 = vmatprep.subr.mxu0 0.0
  %1785 = vmatpush2.msra.mxu0 0.0
  %1786 = vmatprep.subr.mxu0 0.0
  %1787 = vmatpush2.msra.mxu0 0.0
  %1788 = vmatprep.subr.mxu0 0.0
  %1789 = vmatpush2.msra.mxu0 0.0
  %1790 = vmatprep.subr.mxu0 0.0
  %1791 = vmatpush2.msra.mxu0 0.0
  %1792 = vmatprep.subr.mxu0 0.0
  %1793 = vmatpush2.msra.mxu0 0.0
  %1794 = vmatprep.subr.mxu0 0.0
  %1795 = vmatpush2.msra.mxu0 0.0
  %1796 = vmatprep.subr.mxu0 0.0
  %1797 = vmatpush2.msra.mxu0 0.0
  %1798 = vmatprep.mubr.f32.mxu0 0.0
  %1799 = vmatmul.mubr.f32.gmra.mxu0 %v1732
  %v1800 = vpop.f32.mrf.mxu0
  %v1801 = vadd.f32 0.0, %v1800
  %v1802 = vpop.f32.mrf.mxu0
  %1803 = vdwg.mxu0
  %v1804 = vadd.f32 %v1728, %v1801
  %v1805 = vxor.u32 %v1804, 2147483648
  %v1806 = vmul.f32 %v1805, 1.442695
  %v1807 = vpow.pop %v1806
  %v1808 = vadd.f32 %v1807, 1.0
  %v1809 = vrcp.pop %v1808
  %v1810 = vmul.f32 1.0, %v1809
  %v1811 = vadd.f32 %v1801, %v1603
  %1813 = vrot.lane.b32.xlu0 %v1811, 64
  %v1814 = vpop.permute.xlu0 %1813
  %v1816 = vmul.f32 %v1810, %v1814
  %1818 = vrot.lane.b32.xlu0 %v1816, 64
  %v1819 = vpop.permute.xlu0 %1818
  %v1821 = vadd.f32 %v1728, %v1819
  %v1822 = vtanh.pop %v1821
  %v1823 = vsub.f32 1.0, %v1810
  %1825 = vrot.lane.b32.xlu0 %v1822, 96
  %v1826 = vpop.permute.xlu0 %1825
  %v1828 = vmul.f32 %v1823, %v1826
  %v1829 = vmul.f32 %v1810, %v1727
  %v1830 = vadd.f32 %v1828, %v1829
  %v1831 = vld [vmem:[#allocation2 + $0x18] sm:$0xff]
  %1833 = vrot.lane.b32.xlu0 %v1830, 96
  %v1834 = vpop.permute.xlu0 %1833
  %v1835 = vsel %vm141, %v1834, 0
  %1837 = vmatprep.subr.mxu0 0.0
  %1838 = vmatpush1.msra.mxu0 0.0
  %1839 = vmatprep.subr.mxu0 0.0
  %1840 = vmatpush1.msra.mxu0 0.0
  %1841 = vmatprep.subr.mxu0 0.0
  %1842 = vmatpush1.msra.mxu0 0.0
  %1843 = vmatprep.subr.mxu0 0.0
  %1844 = vmatpush1.msra.mxu0 0.0
  %1845 = vmatprep.subr.mxu0 0.0
  %1846 = vmatpush1.msra.mxu0 0.0
  %1847 = vmatprep.subr.mxu0 0.0
  %1848 = vmatpush1.msra.mxu0 0.0
  %1849 = vmatprep.subr.mxu0 0.0
  %1850 = vmatpush1.msra.mxu0 0.0
  %1851 = vmatprep.subr.mxu0 0.0
  %1852 = vmatpush1.msra.mxu0 0.0
  %1853 = vmatprep.subr.mxu0 0.0
  %1854 = vmatpush1.msra.mxu0 0.0
  %1855 = vmatprep.subr.mxu0 0.0
  %1856 = vmatpush1.msra.mxu0 0.0
  %1857 = vmatprep.subr.mxu0 0.0
  %1858 = vmatpush1.msra.mxu0 0.0
  %1859 = vmatprep.subr.mxu0 0.0
  %1860 = vmatpush1.msra.mxu0 0.0
  %1861 = vmatprep.subr.mxu0 0.0
  %1862 = vmatpush1.msra.mxu0 %v1380
  %1863 = vmatprep.subr.mxu0 0.0
  %1864 = vmatpush1.msra.mxu0 %v1379
  %1865 = vmatprep.subr.mxu0 0.0
  %1866 = vmatpush1.msra.mxu0 %v1378
  %1867 = vmatprep.subr.mxu0 0.0
  %1868 = vmatpush1.msra.mxu0 %v1377
  %1869 = vmatprep.subr.mxu0 0.0
  %1870 = vmatpush2.msra.mxu0 0.0
  %1871 = vmatprep.subr.mxu0 0.0
  %1872 = vmatpush2.msra.mxu0 0.0
  %1873 = vmatprep.subr.mxu0 0.0
  %1874 = vmatpush2.msra.mxu0 0.0
  %1875 = vmatprep.subr.mxu0 0.0
  %1876 = vmatpush2.msra.mxu0 0.0
  %1877 = vmatprep.subr.mxu0 0.0
  %1878 = vmatpush2.msra.mxu0 0.0
  %1879 = vmatprep.subr.mxu0 0.0
  %1880 = vmatpush2.msra.mxu0 0.0
  %1881 = vmatprep.subr.mxu0 0.0
  %1882 = vmatpush2.msra.mxu0 0.0
  %1883 = vmatprep.subr.mxu0 0.0
  %1884 = vmatpush2.msra.mxu0 0.0
  %1885 = vmatprep.subr.mxu0 0.0
  %1886 = vmatpush2.msra.mxu0 0.0
  %1887 = vmatprep.subr.mxu0 0.0
  %1888 = vmatpush2.msra.mxu0 0.0
  %1889 = vmatprep.subr.mxu0 0.0
  %1890 = vmatpush2.msra.mxu0 0.0
  %1891 = vmatprep.subr.mxu0 0.0
  %1892 = vmatpush2.msra.mxu0 0.0
  %1893 = vmatprep.subr.mxu0 0.0
  %1894 = vmatpush2.msra.mxu0 0.0
  %1895 = vmatprep.subr.mxu0 0.0
  %1896 = vmatpush2.msra.mxu0 0.0
  %1897 = vmatprep.subr.mxu0 0.0
  %1898 = vmatpush2.msra.mxu0 0.0
  %1899 = vmatprep.subr.mxu0 0.0
  %1900 = vmatpush2.msra.mxu0 0.0
  %1901 = vmatprep.mubr.f32.mxu0 0.0
  %1902 = vmatmul.mubr.f32.gmra.mxu0 %v1835
  %v1903 = vpop.f32.mrf.mxu0
  %v1904 = vadd.f32 0.0, %v1903
  %v1905 = vpop.f32.mrf.mxu0
  %1906 = vdwg.mxu0
  %v1907 = vadd.f32 %v1831, %v1904
  %v1908 = vxor.u32 %v1907, 2147483648
  %v1909 = vmul.f32 %v1908, 1.442695
  %v1910 = vpow.pop %v1909
  %v1911 = vadd.f32 %v1910, 1.0
  %v1912 = vrcp.pop %v1911
  %v1913 = vmul.f32 1.0, %v1912
  %v1914 = vadd.f32 %v1904, %v1603
  %1916 = vrot.lane.b32.xlu0 %v1914, 64
  %v1917 = vpop.permute.xlu0 %1916
  %v1919 = vmul.f32 %v1913, %v1917
  %1921 = vrot.lane.b32.xlu0 %v1919, 64
  %v1922 = vpop.permute.xlu0 %1921
  %v1924 = vadd.f32 %v1831, %v1922
  %v1925 = vtanh.pop %v1924
  %v1926 = vsub.f32 1.0, %v1913
  %1928 = vrot.lane.b32.xlu0 %v1925, 96
  %v1929 = vpop.permute.xlu0 %1928
  %v1931 = vmul.f32 %v1926, %v1929
  %v1932 = vmul.f32 %v1913, %v1830
  %v1933 = vadd.f32 %v1931, %v1932
  %v1934 = vld [vmem:[#allocation2 + $0x20] sm:$0xff]
  %1936 = vrot.lane.b32.xlu0 %v1933, 96
  %v1937 = vpop.permute.xlu0 %1936
  %v1938 = vsel %vm141, %v1937, 0
  %1940 = vmatprep.subr.mxu0 0.0
  %1941 = vmatpush1.msra.mxu0 0.0
  %1942 = vmatprep.subr.mxu0 0.0
  %1943 = vmatpush1.msra.mxu0 0.0
  %1944 = vmatprep.subr.mxu0 0.0
  %1945 = vmatpush1.msra.mxu0 0.0
  %1946 = vmatprep.subr.mxu0 0.0
  %1947 = vmatpush1.msra.mxu0 0.0
  %1948 = vmatprep.subr.mxu0 0.0
  %1949 = vmatpush1.msra.mxu0 0.0
  %1950 = vmatprep.subr.mxu0 0.0
  %1951 = vmatpush1.msra.mxu0 0.0
  %1952 = vmatprep.subr.mxu0 0.0
  %1953 = vmatpush1.msra.mxu0 0.0
  %1954 = vmatprep.subr.mxu0 0.0
  %1955 = vmatpush1.msra.mxu0 0.0
  %1956 = vmatprep.subr.mxu0 0.0
  %1957 = vmatpush1.msra.mxu0 0.0
  %1958 = vmatprep.subr.mxu0 0.0
  %1959 = vmatpush1.msra.mxu0 0.0
  %1960 = vmatprep.subr.mxu0 0.0
  %1961 = vmatpush1.msra.mxu0 0.0
  %1962 = vmatprep.subr.mxu0 0.0
  %1963 = vmatpush1.msra.mxu0 0.0
  %1964 = vmatprep.subr.mxu0 0.0
  %1965 = vmatpush1.msra.mxu0 %v1380
  %1966 = vmatprep.subr.mxu0 0.0
  %1967 = vmatpush1.msra.mxu0 %v1379
  %1968 = vmatprep.subr.mxu0 0.0
  %1969 = vmatpush1.msra.mxu0 %v1378
  %1970 = vmatprep.subr.mxu0 0.0
  %1971 = vmatpush1.msra.mxu0 %v1377
  %1972 = vmatprep.subr.mxu0 0.0
  %1973 = vmatpush2.msra.mxu0 0.0
  %1974 = vmatprep.subr.mxu0 0.0
  %1975 = vmatpush2.msra.mxu0 0.0
  %1976 = vmatprep.subr.mxu0 0.0
  %1977 = vmatpush2.msra.mxu0 0.0
  %1978 = vmatprep.subr.mxu0 0.0
  %1979 = vmatpush2.msra.mxu0 0.0
  %1980 = vmatprep.subr.mxu0 0.0
  %1981 = vmatpush2.msra.mxu0 0.0
  %1982 = vmatprep.subr.mxu0 0.0
  %1983 = vmatpush2.msra.mxu0 0.0
  %1984 = vmatprep.subr.mxu0 0.0
  %1985 = vmatpush2.msra.mxu0 0.0
  %1986 = vmatprep.subr.mxu0 0.0
  %1987 = vmatpush2.msra.mxu0 0.0
  %1988 = vmatprep.subr.mxu0 0.0
  %1989 = vmatpush2.msra.mxu0 0.0
  %1990 = vmatprep.subr.mxu0 0.0
  %1991 = vmatpush2.msra.mxu0 0.0
  %1992 = vmatprep.subr.mxu0 0.0
  %1993 = vmatpush2.msra.mxu0 0.0
  %1994 = vmatprep.subr.mxu0 0.0
  %1995 = vmatpush2.msra.mxu0 0.0
  %1996 = vmatprep.subr.mxu0 0.0
  %1997 = vmatpush2.msra.mxu0 0.0
  %1998 = vmatprep.subr.mxu0 0.0
  %1999 = vmatpush2.msra.mxu0 0.0
  %2000 = vmatprep.subr.mxu0 0.0
  %2001 = vmatpush2.msra.mxu0 0.0
  %2002 = vmatprep.subr.mxu0 0.0
  %2003 = vmatpush2.msra.mxu0 0.0
  %2004 = vmatprep.mubr.f32.mxu0 0.0
  %2005 = vmatmul.mubr.f32.gmra.mxu0 %v1938
  %v2006 = vpop.f32.mrf.mxu0
  %v2007 = vadd.f32 0.0, %v2006
  %v2008 = vpop.f32.mrf.mxu0
  %2009 = vdwg.mxu0
  %v2010 = vadd.f32 %v1934, %v2007
  %v2011 = vxor.u32 %v2010, 2147483648
  %v2012 = vmul.f32 %v2011, 1.442695
  %v2013 = vpow.pop %v2012
  %v2014 = vadd.f32 %v2013, 1.0
  %v2015 = vrcp.pop %v2014
  %v2016 = vmul.f32 1.0, %v2015
  %v2017 = vadd.f32 %v2007, %v1603
  %2019 = vrot.lane.b32.xlu0 %v2017, 64
  %v2020 = vpop.permute.xlu0 %2019
  %v2022 = vmul.f32 %v2016, %v2020
  %2024 = vrot.lane.b32.xlu0 %v2022, 64
  %v2025 = vpop.permute.xlu0 %2024
  %v2027 = vadd.f32 %v1934, %v2025
  %v2028 = vtanh.pop %v2027
  %v2029 = vsub.f32 1.0, %v2016
  %2031 = vrot.lane.b32.xlu0 %v2028, 96
  %v2032 = vpop.permute.xlu0 %2031
  %v2034 = vmul.f32 %v2029, %v2032
  %v2035 = vmul.f32 %v2016, %v1933
  %v2036 = vadd.f32 %v2034, %v2035
  %v2037 = vld [vmem:[#allocation2 + $0x28] sm:$0xff]
  %2039 = vrot.lane.b32.xlu0 %v2036, 96
  %v2040 = vpop.permute.xlu0 %2039
  %v2041 = vsel %vm141, %v2040, 0
  %2043 = vmatprep.subr.mxu0 0.0
  %2044 = vmatpush1.msra.mxu0 0.0
  %2045 = vmatprep.subr.mxu0 0.0
  %2046 = vmatpush1.msra.mxu0 0.0
  %2047 = vmatprep.subr.mxu0 0.0
  %2048 = vmatpush1.msra.mxu0 0.0
  %2049 = vmatprep.subr.mxu0 0.0
  %2050 = vmatpush1.msra.mxu0 0.0
  %2051 = vmatprep.subr.mxu0 0.0
  %2052 = vmatpush1.msra.mxu0 0.0
  %2053 = vmatprep.subr.mxu0 0.0
  %2054 = vmatpush1.msra.mxu0 0.0
  %2055 = vmatprep.subr.mxu0 0.0
  %2056 = vmatpush1.msra.mxu0 0.0
  %2057 = vmatprep.subr.mxu0 0.0
  %2058 = vmatpush1.msra.mxu0 0.0
  %2059 = vmatprep.subr.mxu0 0.0
  %2060 = vmatpush1.msra.mxu0 0.0
  %2061 = vmatprep.subr.mxu0 0.0
  %2062 = vmatpush1.msra.mxu0 0.0
  %2063 = vmatprep.subr.mxu0 0.0
  %2064 = vmatpush1.msra.mxu0 0.0
  %2065 = vmatprep.subr.mxu0 0.0
  %2066 = vmatpush1.msra.mxu0 0.0
  %2067 = vmatprep.subr.mxu0 0.0
  %2068 = vmatpush1.msra.mxu0 %v1380
  %2069 = vmatprep.subr.mxu0 0.0
  %2070 = vmatpush1.msra.mxu0 %v1379
  %2071 = vmatprep.subr.mxu0 0.0
  %2072 = vmatpush1.msra.mxu0 %v1378
  %2073 = vmatprep.subr.mxu0 0.0
  %2074 = vmatpush1.msra.mxu0 %v1377
  %2075 = vmatprep.subr.mxu0 0.0
  %2076 = vmatpush2.msra.mxu0 0.0
  %2077 = vmatprep.subr.mxu0 0.0
  %2078 = vmatpush2.msra.mxu0 0.0
  %2079 = vmatprep.subr.mxu0 0.0
  %2080 = vmatpush2.msra.mxu0 0.0
  %2081 = vmatprep.subr.mxu0 0.0
  %2082 = vmatpush2.msra.mxu0 0.0
  %2083 = vmatprep.subr.mxu0 0.0
  %2084 = vmatpush2.msra.mxu0 0.0
  %2085 = vmatprep.subr.mxu0 0.0
  %2086 = vmatpush2.msra.mxu0 0.0
  %2087 = vmatprep.subr.mxu0 0.0
  %2088 = vmatpush2.msra.mxu0 0.0
  %2089 = vmatprep.subr.mxu0 0.0
  %2090 = vmatpush2.msra.mxu0 0.0
  %2091 = vmatprep.subr.mxu0 0.0
  %2092 = vmatpush2.msra.mxu0 0.0
  %2093 = vmatprep.subr.mxu0 0.0
  %2094 = vmatpush2.msra.mxu0 0.0
  %2095 = vmatprep.subr.mxu0 0.0
  %2096 = vmatpush2.msra.mxu0 0.0
  %2097 = vmatprep.subr.mxu0 0.0
  %2098 = vmatpush2.msra.mxu0 0.0
  %2099 = vmatprep.subr.mxu0 0.0
  %2100 = vmatpush2.msra.mxu0 0.0
  %2101 = vmatprep.subr.mxu0 0.0
  %2102 = vmatpush2.msra.mxu0 0.0
  %2103 = vmatprep.subr.mxu0 0.0
  %2104 = vmatpush2.msra.mxu0 0.0
  %2105 = vmatprep.subr.mxu0 0.0
  %2106 = vmatpush2.msra.mxu0 0.0
  %2107 = vmatprep.mubr.f32.mxu0 0.0
  %2108 = vmatmul.mubr.f32.gmra.mxu0 %v2041
  %v2109 = vpop.f32.mrf.mxu0
  %v2110 = vadd.f32 0.0, %v2109
  %v2111 = vpop.f32.mrf.mxu0
  %2112 = vdwg.mxu0
  %v2113 = vadd.f32 %v2037, %v2110
  %v2114 = vxor.u32 %v2113, 2147483648
  %v2115 = vmul.f32 %v2114, 1.442695
  %v2116 = vpow.pop %v2115
  %v2117 = vadd.f32 %v2116, 1.0
  %v2118 = vrcp.pop %v2117
  %v2119 = vmul.f32 1.0, %v2118
  %v2120 = vadd.f32 %v2110, %v1603
  %2122 = vrot.lane.b32.xlu0 %v2120, 64
  %v2123 = vpop.permute.xlu0 %2122
  %v2125 = vmul.f32 %v2119, %v2123
  %2127 = vrot.lane.b32.xlu0 %v2125, 64
  %v2128 = vpop.permute.xlu0 %2127
  %v2130 = vadd.f32 %v2037, %v2128
  %v2131 = vtanh.pop %v2130
  %v2132 = vsub.f32 1.0, %v2119
  %2134 = vrot.lane.b32.xlu0 %v2131, 96
  %v2135 = vpop.permute.xlu0 %2134
  %v2137 = vmul.f32 %v2132, %v2135
  %v2138 = vmul.f32 %v2119, %v2036
  %v2139 = vadd.f32 %v2137, %v2138
  %v2140 = vld [vmem:[#allocation2 + $0x30] sm:$0xff]
  %2142 = vrot.lane.b32.xlu0 %v2139, 96
  %v2143 = vpop.permute.xlu0 %2142
  %v2144 = vsel %vm141, %v2143, 0
  %2146 = vmatprep.subr.mxu0 0.0
  %2147 = vmatpush1.msra.mxu0 0.0
  %2148 = vmatprep.subr.mxu0 0.0
  %2149 = vmatpush1.msra.mxu0 0.0
  %2150 = vmatprep.subr.mxu0 0.0
  %2151 = vmatpush1.msra.mxu0 0.0
  %2152 = vmatprep.subr.mxu0 0.0
  %2153 = vmatpush1.msra.mxu0 0.0
  %2154 = vmatprep.subr.mxu0 0.0
  %2155 = vmatpush1.msra.mxu0 0.0
  %2156 = vmatprep.subr.mxu0 0.0
  %2157 = vmatpush1.msra.mxu0 0.0
  %2158 = vmatprep.subr.mxu0 0.0
  %2159 = vmatpush1.msra.mxu0 0.0
  %2160 = vmatprep.subr.mxu0 0.0
  %2161 = vmatpush1.msra.mxu0 0.0
  %2162 = vmatprep.subr.mxu0 0.0
  %2163 = vmatpush1.msra.mxu0 0.0
  %2164 = vmatprep.subr.mxu0 0.0
  %2165 = vmatpush1.msra.mxu0 0.0
  %2166 = vmatprep.subr.mxu0 0.0
  %2167 = vmatpush1.msra.mxu0 0.0
  %2168 = vmatprep.subr.mxu0 0.0
  %2169 = vmatpush1.msra.mxu0 0.0
  %2170 = vmatprep.subr.mxu0 0.0
  %2171 = vmatpush1.msra.mxu0 %v1380
  %2172 = vmatprep.subr.mxu0 0.0
  %2173 = vmatpush1.msra.mxu0 %v1379
  %2174 = vmatprep.subr.mxu0 0.0
  %2175 = vmatpush1.msra.mxu0 %v1378
  %2176 = vmatprep.subr.mxu0 0.0
  %2177 = vmatpush1.msra.mxu0 %v1377
  %2178 = vmatprep.subr.mxu0 0.0
  %2179 = vmatpush2.msra.mxu0 0.0
  %2180 = vmatprep.subr.mxu0 0.0
  %2181 = vmatpush2.msra.mxu0 0.0
  %2182 = vmatprep.subr.mxu0 0.0
  %2183 = vmatpush2.msra.mxu0 0.0
  %2184 = vmatprep.subr.mxu0 0.0
  %2185 = vmatpush2.msra.mxu0 0.0
  %2186 = vmatprep.subr.mxu0 0.0
  %2187 = vmatpush2.msra.mxu0 0.0
  %2188 = vmatprep.subr.mxu0 0.0
  %2189 = vmatpush2.msra.mxu0 0.0
  %2190 = vmatprep.subr.mxu0 0.0
  %2191 = vmatpush2.msra.mxu0 0.0
  %2192 = vmatprep.subr.mxu0 0.0
  %2193 = vmatpush2.msra.mxu0 0.0
  %2194 = vmatprep.subr.mxu0 0.0
  %2195 = vmatpush2.msra.mxu0 0.0
  %2196 = vmatprep.subr.mxu0 0.0
  %2197 = vmatpush2.msra.mxu0 0.0
  %2198 = vmatprep.subr.mxu0 0.0
  %2199 = vmatpush2.msra.mxu0 0.0
  %2200 = vmatprep.subr.mxu0 0.0
  %2201 = vmatpush2.msra.mxu0 0.0
  %2202 = vmatprep.subr.mxu0 0.0
  %2203 = vmatpush2.msra.mxu0 0.0
  %2204 = vmatprep.subr.mxu0 0.0
  %2205 = vmatpush2.msra.mxu0 0.0
  %2206 = vmatprep.subr.mxu0 0.0
  %2207 = vmatpush2.msra.mxu0 0.0
  %2208 = vmatprep.subr.mxu0 0.0
  %2209 = vmatpush2.msra.mxu0 0.0
  %2210 = vmatprep.mubr.f32.mxu0 0.0
  %2211 = vmatmul.mubr.f32.gmra.mxu0 %v2144
  %v2212 = vpop.f32.mrf.mxu0
  %v2213 = vadd.f32 0.0, %v2212
  %v2214 = vpop.f32.mrf.mxu0
  %2215 = vdwg.mxu0
  %v2216 = vadd.f32 %v2140, %v2213
  %v2217 = vxor.u32 %v2216, 2147483648
  %v2218 = vmul.f32 %v2217, 1.442695
  %v2219 = vpow.pop %v2218
  %v2220 = vadd.f32 %v2219, 1.0
  %v2221 = vrcp.pop %v2220
  %v2222 = vmul.f32 1.0, %v2221
  %v2223 = vadd.f32 %v2213, %v1603
  %2225 = vrot.lane.b32.xlu0 %v2223, 64
  %v2226 = vpop.permute.xlu0 %2225
  %v2228 = vmul.f32 %v2222, %v2226
  %2230 = vrot.lane.b32.xlu0 %v2228, 64
  %v2231 = vpop.permute.xlu0 %2230
  %v2233 = vadd.f32 %v2140, %v2231
  %v2234 = vtanh.pop %v2233
  %v2235 = vsub.f32 1.0, %v2222
  %2237 = vrot.lane.b32.xlu0 %v2234, 96
  %v2238 = vpop.permute.xlu0 %2237
  %v2240 = vmul.f32 %v2235, %v2238
  %v2241 = vmul.f32 %v2222, %v2139
  %v2242 = vadd.f32 %v2240, %v2241
  %v2243 = vld [vmem:[#allocation2 + $0x38] sm:$0xff]
  %2245 = vrot.lane.b32.xlu0 %v2242, 96
  %v2246 = vpop.permute.xlu0 %2245
  %v2247 = vsel %vm141, %v2246, 0
  %2249 = vmatprep.subr.mxu0 0.0
  %2250 = vmatpush1.msra.mxu0 0.0
  %2251 = vmatprep.subr.mxu0 0.0
  %2252 = vmatpush1.msra.mxu0 0.0
  %2253 = vmatprep.subr.mxu0 0.0
  %2254 = vmatpush1.msra.mxu0 0.0
  %2255 = vmatprep.subr.mxu0 0.0
  %2256 = vmatpush1.msra.mxu0 0.0
  %2257 = vmatprep.subr.mxu0 0.0
  %2258 = vmatpush1.msra.mxu0 0.0
  %2259 = vmatprep.subr.mxu0 0.0
  %2260 = vmatpush1.msra.mxu0 0.0
  %2261 = vmatprep.subr.mxu0 0.0
  %2262 = vmatpush1.msra.mxu0 0.0
  %2263 = vmatprep.subr.mxu0 0.0
  %2264 = vmatpush1.msra.mxu0 0.0
  %2265 = vmatprep.subr.mxu0 0.0
  %2266 = vmatpush1.msra.mxu0 0.0
  %2267 = vmatprep.subr.mxu0 0.0
  %2268 = vmatpush1.msra.mxu0 0.0
  %2269 = vmatprep.subr.mxu0 0.0
  %2270 = vmatpush1.msra.mxu0 0.0
  %2271 = vmatprep.subr.mxu0 0.0
  %2272 = vmatpush1.msra.mxu0 0.0
  %2273 = vmatprep.subr.mxu0 0.0
  %2274 = vmatpush1.msra.mxu0 %v1380
  %2275 = vmatprep.subr.mxu0 0.0
  %2276 = vmatpush1.msra.mxu0 %v1379
  %2277 = vmatprep.subr.mxu0 0.0
  %2278 = vmatpush1.msra.mxu0 %v1378
  %2279 = vmatprep.subr.mxu0 0.0
  %2280 = vmatpush1.msra.mxu0 %v1377
  %2281 = vmatprep.subr.mxu0 0.0
  %2282 = vmatpush2.msra.mxu0 0.0
  %2283 = vmatprep.subr.mxu0 0.0
  %2284 = vmatpush2.msra.mxu0 0.0
  %2285 = vmatprep.subr.mxu0 0.0
  %2286 = vmatpush2.msra.mxu0 0.0
  %2287 = vmatprep.subr.mxu0 0.0
  %2288 = vmatpush2.msra.mxu0 0.0
  %2289 = vmatprep.subr.mxu0 0.0
  %2290 = vmatpush2.msra.mxu0 0.0
  %2291 = vmatprep.subr.mxu0 0.0
  %2292 = vmatpush2.msra.mxu0 0.0
  %2293 = vmatprep.subr.mxu0 0.0
  %2294 = vmatpush2.msra.mxu0 0.0
  %2295 = vmatprep.subr.mxu0 0.0
  %2296 = vmatpush2.msra.mxu0 0.0
  %2297 = vmatprep.subr.mxu0 0.0
  %2298 = vmatpush2.msra.mxu0 0.0
  %2299 = vmatprep.subr.mxu0 0.0
  %2300 = vmatpush2.msra.mxu0 0.0
  %2301 = vmatprep.subr.mxu0 0.0
  %2302 = vmatpush2.msra.mxu0 0.0
  %2303 = vmatprep.subr.mxu0 0.0
  %2304 = vmatpush2.msra.mxu0 0.0
  %2305 = vmatprep.subr.mxu0 0.0
  %2306 = vmatpush2.msra.mxu0 0.0
  %2307 = vmatprep.subr.mxu0 0.0
  %2308 = vmatpush2.msra.mxu0 0.0
  %2309 = vmatprep.subr.mxu0 0.0
  %2310 = vmatpush2.msra.mxu0 0.0
  %2311 = vmatprep.subr.mxu0 0.0
  %2312 = vmatpush2.msra.mxu0 0.0
  %2313 = vmatprep.mubr.f32.mxu0 0.0
  %2314 = vmatmul.mubr.f32.gmra.mxu0 %v2247
  %v2315 = vpop.f32.mrf.mxu0
  %v2316 = vadd.f32 0.0, %v2315
  %v2317 = vpop.f32.mrf.mxu0
  %2318 = vdwg.mxu0
  %v2319 = vadd.f32 %v2243, %v2316
  %v2320 = vxor.u32 %v2319, 2147483648
  %v2321 = vmul.f32 %v2320, 1.442695
  %v2322 = vpow.pop %v2321
  %v2323 = vadd.f32 %v2322, 1.0
  %v2324 = vrcp.pop %v2323
  %v2325 = vmul.f32 1.0, %v2324
  %v2326 = vadd.f32 %v2316, %v1603
  %2328 = vrot.lane.b32.xlu0 %v2326, 64
  %v2329 = vpop.permute.xlu0 %2328
  %v2331 = vmul.f32 %v2325, %v2329
  %2333 = vrot.lane.b32.xlu0 %v2331, 64
  %v2334 = vpop.permute.xlu0 %2333
  %v2336 = vadd.f32 %v2243, %v2334
  %v2337 = vtanh.pop %v2336
  %v2338 = vsub.f32 1.0, %v2325
  %2340 = vrot.lane.b32.xlu0 %v2337, 96
  %v2341 = vpop.permute.xlu0 %2340
  %v2343 = vmul.f32 %v2338, %v2341
  %v2344 = vmul.f32 %v2325, %v2242
  %v2345 = vadd.f32 %v2343, %v2344
  %v2346 = vld [vmem:[%s8 + $0x40] sm:$0xff]
  %v2347 = vld [vmem:[%s8 + $0x48] sm:$0xff]
  %v2348 = vld [vmem:[%s8 + $0x50] sm:$0xff]
  %v2349 = vld [vmem:[%s8 + $0x58] sm:$0xff]
  %v2350 = vld [vmem:[%s9 + $0x2] sm:$0x1]
  %v2351 = vsel %vm141, %v1362, 0
  %2353 = vmatprep.subr.mxu0 0.0
  %2354 = vmatpush1.msra.mxu0 0.0
  %2355 = vmatprep.subr.mxu0 0.0
  %2356 = vmatpush1.msra.mxu0 0.0
  %2357 = vmatprep.subr.mxu0 0.0
  %2358 = vmatpush1.msra.mxu0 0.0
  %2359 = vmatprep.subr.mxu0 0.0
  %2360 = vmatpush1.msra.mxu0 0.0
  %2361 = vmatprep.subr.mxu0 0.0
  %2362 = vmatpush1.msra.mxu0 0.0
  %2363 = vmatprep.subr.mxu0 0.0
  %2364 = vmatpush1.msra.mxu0 0.0
  %2365 = vmatprep.subr.mxu0 0.0
  %2366 = vmatpush1.msra.mxu0 0.0
  %2367 = vmatprep.subr.mxu0 0.0
  %2368 = vmatpush1.msra.mxu0 0.0
  %2369 = vmatprep.subr.mxu0 0.0
  %2370 = vmatpush1.msra.mxu0 0.0
  %2371 = vmatprep.subr.mxu0 0.0
  %2372 = vmatpush1.msra.mxu0 0.0
  %2373 = vmatprep.subr.mxu0 0.0
  %2374 = vmatpush1.msra.mxu0 0.0
  %2375 = vmatprep.subr.mxu0 0.0
  %2376 = vmatpush1.msra.mxu0 0.0
  %2377 = vmatprep.subr.mxu0 0.0
  %2378 = vmatpush1.msra.mxu0 %v2349
  %2379 = vmatprep.subr.mxu0 0.0
  %2380 = vmatpush1.msra.mxu0 %v2348
  %2381 = vmatprep.subr.mxu0 0.0
  %2382 = vmatpush1.msra.mxu0 %v2347
  %2383 = vmatprep.subr.mxu0 0.0
  %2384 = vmatpush1.msra.mxu0 %v2346
  %2385 = vmatprep.subr.mxu0 0.0
  %2386 = vmatpush2.msra.mxu0 0.0
  %2387 = vmatprep.subr.mxu0 0.0
  %2388 = vmatpush2.msra.mxu0 0.0
  %2389 = vmatprep.subr.mxu0 0.0
  %2390 = vmatpush2.msra.mxu0 0.0
  %2391 = vmatprep.subr.mxu0 0.0
  %2392 = vmatpush2.msra.mxu0 0.0
  %2393 = vmatprep.subr.mxu0 0.0
  %2394 = vmatpush2.msra.mxu0 0.0
  %2395 = vmatprep.subr.mxu0 0.0
  %2396 = vmatpush2.msra.mxu0 0.0
  %2397 = vmatprep.subr.mxu0 0.0
  %2398 = vmatpush2.msra.mxu0 0.0
  %2399 = vmatprep.subr.mxu0 0.0
  %2400 = vmatpush2.msra.mxu0 0.0
  %2401 = vmatprep.subr.mxu0 0.0
  %2402 = vmatpush2.msra.mxu0 0.0
  %2403 = vmatprep.subr.mxu0 0.0
  %2404 = vmatpush2.msra.mxu0 0.0
  %2405 = vmatprep.subr.mxu0 0.0
  %2406 = vmatpush2.msra.mxu0 0.0
  %2407 = vmatprep.subr.mxu0 0.0
  %2408 = vmatpush2.msra.mxu0 0.0
  %2409 = vmatprep.subr.mxu0 0.0
  %2410 = vmatpush2.msra.mxu0 0.0
  %2411 = vmatprep.subr.mxu0 0.0
  %2412 = vmatpush2.msra.mxu0 0.0
  %2413 = vmatprep.subr.mxu0 0.0
  %2414 = vmatpush2.msra.mxu0 0.0
  %2415 = vmatprep.subr.mxu0 0.0
  %2416 = vmatpush2.msra.mxu0 0.0
  %2417 = vmatprep.mubr.f32.mxu0 0.0
  %2418 = vmatmul.mubr.f32.gmra.mxu0 %v2351
  %v2419 = vpop.f32.mrf.mxu0
  %v2420 = vadd.f32 0.0, %v2419
  %v2421 = vpop.f32.mrf.mxu0
  %2422 = vdwg.mxu0
  %v2423 = vadd.f32 %v367, %v2420
  %v2424 = vxor.u32 %v2423, 2147483648
  %v2425 = vmul.f32 %v2424, 1.442695
  %v2426 = vpow.pop %v2425
  %v2427 = vadd.f32 %v2426, 1.0
  %v2428 = vrcp.pop %v2427
  %v2429 = vmul.f32 1.0, %v2428
  %v2430 = vlaneseq
  %v2431 = vshrl.u32 %v2430, 7
  %v2432 = vsub.s32 0, %v2431
  %v2433 = vrot.slane %v2350, %v2432
  %2435 = vrot.lane.b32.xlu0 %v2433, 96
  %v2436 = vpop.permute.xlu0 %2435
  %v2438 = vadd.f32 %v2420, %v2436
  %2440 = vrot.lane.b32.xlu0 %v2438, 64
  %v2441 = vpop.permute.xlu0 %2440
  %v2443 = vmul.f32 %v2429, %v2441
  %2445 = vrot.lane.b32.xlu0 %v2443, 64
  %v2446 = vpop.permute.xlu0 %2445
  %v2448 = vadd.f32 %v367, %v2446
  %v2449 = vtanh.pop %v2448
  %v2450 = vsub.f32 1.0, %v2429
  %2452 = vrot.lane.b32.xlu0 %v2449, 96
  %v2453 = vpop.permute.xlu0 %2452
  %v2455 = vmul.f32 %v2450, %v2453
  %v2456 = vmul.f32 %v2429, %v1359
  %v2457 = vadd.f32 %v2455, %v2456
  %v2458 = vld [vmem:[%s7 + $0x80] sm:$0xff]
  %v2459 = vld [vmem:[%s7 + $0x88] sm:$0xff]
  %v2460 = vld [vmem:[%s7 + $0x90] sm:$0xff]
  %v2461 = vld [vmem:[%s7 + $0x98] sm:$0xff]
  %v2462 = vld [vmem:[%s8 + $0x60] sm:$0xff]
  %v2463 = vld [vmem:[%s8 + $0x68] sm:$0xff]
  %v2464 = vld [vmem:[%s8 + $0x70] sm:$0xff]
  %v2465 = vld [vmem:[%s8 + $0x78] sm:$0xff]
  %v2466 = vld [vmem:[%s9 + $0x3] sm:$0x1]
  %v2467 = vlaneseq
  %v2468 = vshrl.u32 %v2467, 7
  %v2469 = vsub.s32 0, %v2468
  %v2470 = vrot.slane %v2466, %v2469
  %2472 = vrot.lane.b32.xlu0 %v2457, 96
  %v2473 = vpop.permute.xlu0 %2472
  %v2474 = vsel %vm141, %v2473, 0
  %2476 = vmatprep.subr.mxu0 0.0
  %2477 = vmatpush1.msra.mxu0 0.0
  %2478 = vmatprep.subr.mxu0 0.0
  %2479 = vmatpush1.msra.mxu0 0.0
  %2480 = vmatprep.subr.mxu0 0.0
  %2481 = vmatpush1.msra.mxu0 0.0
  %2482 = vmatprep.subr.mxu0 0.0
  %2483 = vmatpush1.msra.mxu0 0.0
  %2484 = vmatprep.subr.mxu0 0.0
  %2485 = vmatpush1.msra.mxu0 0.0
  %2486 = vmatprep.subr.mxu0 0.0
  %2487 = vmatpush1.msra.mxu0 0.0
  %2488 = vmatprep.subr.mxu0 0.0
  %2489 = vmatpush1.msra.mxu0 0.0
  %2490 = vmatprep.subr.mxu0 0.0
  %2491 = vmatpush1.msra.mxu0 0.0
  %2492 = vmatprep.subr.mxu0 0.0
  %2493 = vmatpush1.msra.mxu0 0.0
  %2494 = vmatprep.subr.mxu0 0.0
  %2495 = vmatpush1.msra.mxu0 0.0
  %2496 = vmatprep.subr.mxu0 0.0
  %2497 = vmatpush1.msra.mxu0 0.0
  %2498 = vmatprep.subr.mxu0 0.0
  %2499 = vmatpush1.msra.mxu0 0.0
  %2500 = vmatprep.subr.mxu0 0.0
  %2501 = vmatpush1.msra.mxu0 %v2461
  %2502 = vmatprep.subr.mxu0 0.0
  %2503 = vmatpush1.msra.mxu0 %v2460
  %2504 = vmatprep.subr.mxu0 0.0
  %2505 = vmatpush1.msra.mxu0 %v2459
  %2506 = vmatprep.subr.mxu0 0.0
  %2507 = vmatpush1.msra.mxu0 %v2458
  %2508 = vmatprep.subr.mxu0 0.0
  %2509 = vmatpush2.msra.mxu0 0.0
  %2510 = vmatprep.subr.mxu0 0.0
  %2511 = vmatpush2.msra.mxu0 0.0
  %2512 = vmatprep.subr.mxu0 0.0
  %2513 = vmatpush2.msra.mxu0 0.0
  %2514 = vmatprep.subr.mxu0 0.0
  %2515 = vmatpush2.msra.mxu0 0.0
  %2516 = vmatprep.subr.mxu0 0.0
  %2517 = vmatpush2.msra.mxu0 0.0
  %2518 = vmatprep.subr.mxu0 0.0
  %2519 = vmatpush2.msra.mxu0 0.0
  %2520 = vmatprep.subr.mxu0 0.0
  %2521 = vmatpush2.msra.mxu0 0.0
  %2522 = vmatprep.subr.mxu0 0.0
  %2523 = vmatpush2.msra.mxu0 0.0
  %2524 = vmatprep.subr.mxu0 0.0
  %2525 = vmatpush2.msra.mxu0 0.0
  %2526 = vmatprep.subr.mxu0 0.0
  %2527 = vmatpush2.msra.mxu0 0.0
  %2528 = vmatprep.subr.mxu0 0.0
  %2529 = vmatpush2.msra.mxu0 0.0
  %2530 = vmatprep.subr.mxu0 0.0
  %2531 = vmatpush2.msra.mxu0 0.0
  %2532 = vmatprep.subr.mxu0 0.0
  %2533 = vmatpush2.msra.mxu0 0.0
  %2534 = vmatprep.subr.mxu0 0.0
  %2535 = vmatpush2.msra.mxu0 0.0
  %2536 = vmatprep.subr.mxu0 0.0
  %2537 = vmatpush2.msra.mxu0 0.0
  %2538 = vmatprep.subr.mxu0 0.0
  %2539 = vmatpush2.msra.mxu0 0.0
  %2540 = vmatprep.mubr.f32.mxu0 0.0
  %2541 = vmatmul.mubr.f32.gmra.mxu0 %v2474
  %v2542 = vpop.f32.mrf.mxu0
  %v2543 = vadd.f32 %v2470, %v2542
  %v2544 = vpop.f32.mrf.mxu0
  %2545 = vdwg.mxu0
  %2547 = vrot.lane.b32.xlu0 %v2345, 96
  %v2548 = vpop.permute.xlu0 %2547
  %v2549 = vsel %vm141, %v2548, 0
  %2551 = vmatprep.subr.mxu0 0.0
  %2552 = vmatpush1.msra.mxu0 0.0
  %2553 = vmatprep.subr.mxu0 0.0
  %2554 = vmatpush1.msra.mxu0 0.0
  %2555 = vmatprep.subr.mxu0 0.0
  %2556 = vmatpush1.msra.mxu0 0.0
  %2557 = vmatprep.subr.mxu0 0.0
  %2558 = vmatpush1.msra.mxu0 0.0
  %2559 = vmatprep.subr.mxu0 0.0
  %2560 = vmatpush1.msra.mxu0 0.0
  %2561 = vmatprep.subr.mxu0 0.0
  %2562 = vmatpush1.msra.mxu0 0.0
  %2563 = vmatprep.subr.mxu0 0.0
  %2564 = vmatpush1.msra.mxu0 0.0
  %2565 = vmatprep.subr.mxu0 0.0
  %2566 = vmatpush1.msra.mxu0 0.0
  %2567 = vmatprep.subr.mxu0 0.0
  %2568 = vmatpush1.msra.mxu0 0.0
  %2569 = vmatprep.subr.mxu0 0.0
  %2570 = vmatpush1.msra.mxu0 0.0
  %2571 = vmatprep.subr.mxu0 0.0
  %2572 = vmatpush1.msra.mxu0 0.0
  %2573 = vmatprep.subr.mxu0 0.0
  %2574 = vmatpush1.msra.mxu0 0.0
  %2575 = vmatprep.subr.mxu0 0.0
  %2576 = vmatpush1.msra.mxu0 %v2465
  %2577 = vmatprep.subr.mxu0 0.0
  %2578 = vmatpush1.msra.mxu0 %v2464
  %2579 = vmatprep.subr.mxu0 0.0
  %2580 = vmatpush1.msra.mxu0 %v2463
  %2581 = vmatprep.subr.mxu0 0.0
  %2582 = vmatpush1.msra.mxu0 %v2462
  %2583 = vmatprep.subr.mxu0 0.0
  %2584 = vmatpush2.msra.mxu0 0.0
  %2585 = vmatprep.subr.mxu0 0.0
  %2586 = vmatpush2.msra.mxu0 0.0
  %2587 = vmatprep.subr.mxu0 0.0
  %2588 = vmatpush2.msra.mxu0 0.0
  %2589 = vmatprep.subr.mxu0 0.0
  %2590 = vmatpush2.msra.mxu0 0.0
  %2591 = vmatprep.subr.mxu0 0.0
  %2592 = vmatpush2.msra.mxu0 0.0
  %2593 = vmatprep.subr.mxu0 0.0
  %2594 = vmatpush2.msra.mxu0 0.0
  %2595 = vmatprep.subr.mxu0 0.0
  %2596 = vmatpush2.msra.mxu0 0.0
  %2597 = vmatprep.subr.mxu0 0.0
  %2598 = vmatpush2.msra.mxu0 0.0
  %2599 = vmatprep.subr.mxu0 0.0
  %2600 = vmatpush2.msra.mxu0 0.0
  %2601 = vmatprep.subr.mxu0 0.0
  %2602 = vmatpush2.msra.mxu0 0.0
  %2603 = vmatprep.subr.mxu0 0.0
  %2604 = vmatpush2.msra.mxu0 0.0
  %2605 = vmatprep.subr.mxu0 0.0
  %2606 = vmatpush2.msra.mxu0 0.0
  %2607 = vmatprep.subr.mxu0 0.0
  %2608 = vmatpush2.msra.mxu0 0.0
  %2609 = vmatprep.subr.mxu0 0.0
  %2610 = vmatpush2.msra.mxu0 0.0
  %2611 = vmatprep.subr.mxu0 0.0
  %2612 = vmatpush2.msra.mxu0 0.0
  %2613 = vmatprep.subr.mxu0 0.0
  %2614 = vmatpush2.msra.mxu0 0.0
  %2615 = vmatprep.mubr.f32.mxu0 0.0
  %2616 = vmatmul.mubr.f32.gmra.mxu0 %v2549
  %v2617 = vpop.f32.mrf.mxu0
  %v2618 = vadd.f32 0.0, %v2617
  %v2619 = vpop.f32.mrf.mxu0
  %2620 = vdwg.mxu0
  %v2621 = vadd.f32 %v2543, %v2618
  %v2622 = vxor.u32 %v2621, 2147483648
  %v2623 = vmul.f32 %v2622, 1.442695
  %v2624 = vpow.pop %v2623
  %v2625 = vadd.f32 %v2624, 1.0
  %v2626 = vrcp.pop %v2625
  %v2627 = vmul.f32 1.0, %v2626
  %2629 = vrot.lane.b32.xlu0 %v2470, 96
  %v2630 = vpop.permute.xlu0 %2629
  %v2632 = vadd.f32 %v2618, %v2630
  %2634 = vrot.lane.b32.xlu0 %v2632, 64
  %v2635 = vpop.permute.xlu0 %2634
  %v2637 = vmul.f32 %v2627, %v2635
  %2639 = vrot.lane.b32.xlu0 %v2637, 64
  %v2640 = vpop.permute.xlu0 %2639
  %v2642 = vadd.f32 %v2543, %v2640
  %v2643 = vtanh.pop %v2642
  %v2644 = vsub.f32 1.0, %v2627
  %2646 = vrot.lane.b32.xlu0 %v2643, 96
  %v2647 = vpop.permute.xlu0 %2646
  %v2649 = vmul.f32 %v2644, %v2647
  %v2650 = vmul.f32 %v2627, %v2345
  %v2651 = vadd.f32 %v2649, %v2650
  %v2652 = vld [vmem:[%s10] sm:$0x1]
  %v2654 = vlaneseq
  %v2655 = vshrl.u32 %v2654, 7
  %v2656 = vsub.s32 0, %v2655
  %v2657 = vrot.slane %v2652, %v2656
  %2658 = vrot.lane.b32.xlu0 %v2657, 32
  %v2659 = vpop.permute.xlu0 %2658
  %v2661 = vmul.f32 %v2651, %v2659
  %2663 = vrot.lane.b32.xlu0 %v2661, 96
  %v2664 = vpop.permute.xlu0 %2663
  %v2666 = vsel %vm141, %v2664, 0.0
  %2667 = vadd.xlane.f32.xlu0 %v2666
  %v2668 = vpop.xlane.xlu0 %2667
  %v2669 = vld [vmem:[#allocation4] sm:$0x1]
  %v2671 = vlaneseq
  %v2672 = vshrl.u32 %v2671, 7
  %v2673 = vsub.s32 0, %v2672
  %v2674 = vrot.slane %v2669, %v2673
  %v2676 = vadd.f32 %v2668, %v2674
  %vm2677 = vcmask 7168
  %2678 = vst.msk [vmem:[%s12] sm:$0xff] %vm2677, %v2676
  // Predicated region
  $region50: #{seq2seq_flow_predictor.1} parent=0 // pred_check
    _
  $region51: #{seq2seq_flow_predictor.1} parent=0 // pred_check_branch
    %2680 = sbr.rel (0) target = $region53
  $region52: #{seq2seq_flow_predictor.1} parent=0 // pred_region
    _
  $region53: #{seq2seq_flow_predictor.1} parent=0 // pred_fallthru
    _
  // Predicated region
  $region54: #{seq2seq_flow_predictor.1} parent=0 // pred_check
    _
  $region55: #{seq2seq_flow_predictor.1} parent=0 // pred_check_branch
    %2682 = sbr.rel (0) target = $region57
  $region56: #{seq2seq_flow_predictor.1} parent=0 // pred_region
    _
  $region57: #{seq2seq_flow_predictor.1} parent=0 // pred_fallthru
    _

</llo_original>
